<compile_context>
chip_gen: v7x
topology: tpu7x:2x2x1
jax: 0.10.0
libtpu: 0.0.40
codegen_flags: <defaults>
</compile_context>

<pallas_src>
import functools
import math

import jax
import jax.numpy as jnp
from jax.experimental import pallas as pl
from jax.experimental.pallas import tpu as pltpu

_F32 = jnp.float32
_BF16 = jnp.bfloat16


def _layernorm(x, gamma, beta, eps):
    # x: (T, C) f32, gamma/beta: (1, C)
    mu = jnp.mean(x, axis=-1, keepdims=True)
    var = jnp.mean((x - mu) ** 2, axis=-1, keepdims=True)
    return (x - mu) * jax.lax.rsqrt(var + eps) * gamma + beta


def _gelu_new(x):
    # HF "gelu_new" (tanh approximation) used by GPT-2. Kept in f32.
    return 0.5 * x * (1.0 + jnp.tanh(
        jnp.sqrt(2.0 / jnp.pi) * (x + 0.044715 * x * x * x)))


def block_kernel(x_ref, mask_ref, ln1g_ref, ln1b_ref,
                 wqkv_ref, bqkv_ref, wproj_ref, bproj_ref,
                 ln2g_ref, ln2b_ref,
                 wfc_ref, bfc_ref, wfp_ref, bfp_ref,
                 out_ref, *, n_head, eps, kv_tile):
    f32, bf16 = _F32, _BF16
    H = n_head

    x = x_ref[0].astype(f32)                                  # (T, C)
    T, C = x.shape
    hd = C // H

    # ---- ln_1 (f32) ----
    h_ln1 = _layernorm(x, ln1g_ref[...].astype(f32), ln1b_ref[...].astype(f32), eps)
    h1_bf = h_ln1.astype(bf16)

    # ---- qkv projection, heads-major directly.  Weights are pre-reshaped in the
    # wrapper to (3H, C, hd); each head is a 2D (T,C)@(C,hd) MXU matmul and results
    # are stacked on a new major axis -> no lane-crossing relayout of activations.
    # 1/sqrt(hd) (if scale=True) is already folded into the q weight/bias.
    bqkv = bqkv_ref[...].astype(f32)                          # (3H, 1, hd)

    def head_proj(lo):
        outs = [jnp.dot(h1_bf, wqkv_ref[lo + h], preferred_element_type=f32)
                for h in range(H)]
        return jnp.stack(outs, axis=0) + bqkv[lo:lo + H]      # (H, T, hd) f32

    qh = head_proj(0)
    kh = head_proj(H)
    vh = head_proj(2 * H)

    # ---- causal attention: online softmax over KV tiles (static unrolled loop).
    # No (H, T, T) materialization; scratch is capped at (H, T, kv_tile).
    # mask is additive: 0 where visible, -1e4 otherwise (== reference replace-with
    # -1e4 after softmax since exp(-1e4) underflows to 0 in f32; only diverges if raw
    # scores reach O(1e4), which does not happen for sane inputs).
    mask = mask_ref[...]                                      # (T, T) f32
    q_bf = qh.astype(bf16)
    m = jnp.full((H, T, 1), -1e30, f32)                       # finite "-inf"
    l = jnp.zeros((H, T, 1), f32)
    acc = jnp.zeros((H, T, hd), f32)
    for start in range(0, T, kv_tile):                        # single iter at toy T
        size = min(kv_tile, T - start)
        k_t = kh[:, start:start + size, :].astype(bf16)
        v_t = vh[:, start:start + size, :].astype(bf16)
        s = jnp.einsum('hqd,hkd->hqk', q_bf, k_t,
                       preferred_element_type=f32)            # (H, T, size)
        s = s + mask[None, :, start:start + size]
        m_new = jnp.maximum(m, jnp.max(s, axis=-1, keepdims=True))
        alpha = jnp.exp(m - m_new)
        p = jnp.exp(s - m_new)
        l = alpha * l + jnp.sum(p, axis=-1, keepdims=True)
        acc = alpha * acc + jnp.einsum('hqk,hkd->hqd', p.astype(bf16), v_t,
                                       preferred_element_type=f32)
        m = m_new
    # approx EUP reciprocal for the softmax denominator (intentional ~1e-3 rel. err).
    ctx = acc * pl.reciprocal(l, approx=True)                 # (H, T, hd)

    # ---- attention output projection (heads-major weight (H, hd, C)) + residual ----
    # Sums over heads via per-head matmuls -> no merge-heads concatenate.
    a = jnp.zeros((T, C), f32)
    for h in range(H):
        a = a + jnp.dot(ctx[h].astype(bf16), wproj_ref[h], preferred_element_type=f32)
    a = a + bproj_ref[...].astype(f32)
    r1 = x + a                                                # residual 1

    # ---- ln_2 + MLP + residual ----
    h_ln2 = _layernorm(r1, ln2g_ref[...].astype(f32), ln2b_ref[...].astype(f32), eps)
    ff = jnp.dot(h_ln2.astype(bf16), wfc_ref[...], preferred_element_type=f32)
    ff = _gelu_new(ff + bfc_ref[...].astype(f32))             # (T, inner)
    ff = jnp.dot(ff.astype(bf16), wfp_ref[...], preferred_element_type=f32)
    ff = ff + bfp_ref[...].astype(f32)                        # (T, C)
    out_ref[0] = (r1 + ff).astype(out_ref.dtype)


@functools.lru_cache(maxsize=None)
def _single_buffer_supported():
    """One-time probe: does this Pallas build accept pipeline_mode=pl.Buffered(1) on
    grid-invariant input blocks (2D and 3D)?  Grid-invariant weights don't need
    double-buffering; buffer_count=1 halves their VMEM footprint."""
    try:
        def k(x_ref, w2_ref, w3_ref, o_ref):
            o_ref[...] = x_ref[...] + w2_ref[...] + w3_ref[0]

        call = pl.pallas_call(
            k,
            out_shape=jax.ShapeDtypeStruct((16, 128), jnp.float32),
            grid=(2,),
            in_specs=[
                pl.BlockSpec((8, 128), lambda i: (i, 0)),
                pl.BlockSpec((8, 128), lambda i: (0, 0),
                             pipeline_mode=pl.Buffered(1)),
                pl.BlockSpec((2, 8, 128), lambda i: (0, 0, 0),
                             pipeline_mode=pl.Buffered(1)),
            ],
            out_specs=pl.BlockSpec((8, 128), lambda i: (i, 0)),
        )
        x = jnp.zeros((16, 128), jnp.float32)
        w2 = jnp.full((8, 128), 2.0, jnp.float32)
        w3 = jnp.full((2, 8, 128), 3.0, jnp.float32)
        out = jax.block_until_ready(jax.jit(call)(x, w2, w3))
        return bool(jnp.all(out == 5.0))
    except Exception:
        return False


@functools.lru_cache(maxsize=None)
def _build_block_fn(B, T, C, n_head, inner, eps, dtype_name, single_buffer):
    """Build (once per shape/config) the jitted pallas_call wrapper."""
    H = n_head
    hd = C // H
    out_dtype = jnp.dtype(dtype_name)
    kv_tile = T if T <= 256 else 256

    kernel = functools.partial(block_kernel, n_head=H, eps=eps, kv_tile=kv_tile)

    pipe = dict(pipeline_mode=pl.Buffered(1)) if single_buffer else {}

    def inv(shape):
        if len(shape) == 2:
            return pl.BlockSpec(shape, lambda b: (0, 0), **pipe)
        return pl.BlockSpec(shape, lambda b: (0, 0, 0), **pipe)

    in_specs = [
        pl.BlockSpec((1, T, C), lambda b: (b, 0, 0)),      # x (per-batch block)
        inv((T, T)),                                       # additive causal mask
        inv((1, C)), inv((1, C)),                          # ln_1 gamma / beta
        inv((3 * H, C, hd)), inv((3 * H, 1, hd)),          # heads-major c_attn W / b
        inv((H, hd, C)), inv((1, C)),                      # heads-major c_proj W / b
        inv((1, C)), inv((1, C)),                          # ln_2 gamma / beta
        inv((C, inner)), inv((1, inner)),                  # mlp c_fc W / b
        inv((inner, C)), inv((1, C)),                      # mlp c_proj W / b
    ]

    # Advisory cost estimate.
    flops = int(2 * B * T * (4 * C * C + 2 * C * inner) + 4 * B * T * T * C)
    transc = int(B * (H * T * T + T * inner + 3 * T))
    io_bpe = out_dtype.itemsize
    param_bytes = 2 * (4 * C * C + 2 * C * inner) + 4 * (10 * C + 2 * inner + T * T)
    bytes_acc = int(param_bytes + 2 * B * T * C * io_bpe)

    # Generation-aware scoped-VMEM limit: what we need (+ headroom), capped at ~85%
    # of physical VMEM (v7x: ~54 MiB; v5e/v6e: ~109 MiB).
    weight_bytes = param_bytes
    io_bytes = 2 * 2 * T * C * io_bpe                      # double-buffered x / out
    act_bytes = 4 * (8 * T * C                             # q/k/v f32 + bf16 copies
                     + 3 * H * T * kv_tile                 # per-KV-tile scores/probs
                     + 2 * T * C                           # attention acc / residual
                     + 2 * T * inner)                      # MLP intermediate
    wf = 1 if single_buffer else 2
    vmem_needed = wf * weight_bytes + io_bytes + act_bytes + (4 << 20)
    try:
        phys_vmem = pltpu.get_tpu_info().vmem_capacity_bytes
    except Exception:
        phys_vmem = 128 << 20
    vmem_limit = int(min(max(vmem_needed, 32 << 20), int(0.85 * phys_vmem)))

    call = pl.pallas_call(
        kernel,
        out_shape=jax.ShapeDtypeStruct((B, T, C), out_dtype),
        grid=(B,),
        in_specs=in_specs,
        out_specs=pl.BlockSpec((1, T, C), lambda b: (b, 0, 0)),
        compiler_params=pltpu.CompilerParams(
            dimension_semantics=("parallel",),             # v7x: shard B over 2 TCs
            vmem_limit_bytes=vmem_limit),
        cost_estimate=pl.CostEstimate(flops=flops, transcendentals=transc,
                                      bytes_accessed=bytes_acc),
    )

    def run(x, w_qkv, b_qkv, w_proj, b_proj, ln1_g, ln1_b, ln2_g, ln2_b,
            w_fc, b_fc, w_fp, b_fp):
        # Additive causal mask built once per jitted call (constant for XLA), passed
        # to the kernel as a grid-invariant block (no per-grid-step iota/where).
        row = jax.lax.broadcasted_iota(jnp.int32, (T, T), 0)
        col = jax.lax.broadcasted_iota(jnp.int32, (T, T), 1)
        mask = jnp.where(col <= row, jnp.float32(0.0), jnp.float32(-10000.0))
        return call(x, mask, ln1_g, ln1_b, w_qkv, b_qkv, w_proj, b_proj,
                    ln2_g, ln2_b, w_fc, b_fc, w_fp, b_fp)

    return jax.jit(run)


def prepare_block_params(params, *, n_head, scale=False):
    """One-time wrapper-side prep (do NOT call per step):
      * head split moved onto the weights: c_attn -> (3H, C, hd), c_proj -> (H, hd, C);
      * 1/sqrt(hd) attention scale folded into the q weight/bias (scale=True);
      * MXU-facing weights cast to bf16 once (f32 accumulation in-kernel);
        LN / bias params stay f32 (v5e has no bf16 VPU/EUP path)."""
    C = params["w_attn"].shape[0]
    H = n_head
    hd = C // H
    assert C % H == 0

    w_attn = params["w_attn"].astype(_F32).reshape(C, 3, H, hd).transpose(1, 2, 0, 3)
    b_attn = params["b_attn"].astype(_F32).reshape(1, 3, H, hd).transpose(1, 2, 0, 3)
    if scale:
        s = 1.0 / math.sqrt(hd)
        w_attn = w_attn.at[0].multiply(s)
        b_attn = b_attn.at[0].multiply(s)

    return {
        "w_qkv": w_attn.reshape(3 * H, C, hd).astype(_BF16),
        "b_qkv": b_attn.reshape(3 * H, 1, hd).astype(_F32),
        "w_proj": params["w_attn_proj"].astype(_F32).reshape(H, hd, C).astype(_BF16),
        "b_proj": params["b_attn_proj"].astype(_F32).reshape(1, C),
        "ln1_g": params["ln1_g"].astype(_F32).reshape(1, C),
        "ln1_b": params["ln1_b"].astype(_F32).reshape(1, C),
        "ln2_g": params["ln2_g"].astype(_F32).reshape(1, C),
        "ln2_b": params["ln2_b"].astype(_F32).reshape(1, C),
        "w_fc": params["w_fc"].astype(_BF16),
        "b_fc": params["b_fc"].astype(_F32),
        "w_fp": params["w_fc_proj"].astype(_BF16),
        "b_fp": params["b_fc_proj"].astype(_F32),
    }


def gpt2_block(x, kp, *, n_head, eps=1e-5):
    """Fused GPT-2 block forward. `kp` comes from prepare_block_params()."""
    B, T, C = x.shape
    inner = kp["w_fc"].shape[1]
    fn = _build_block_fn(B, T, C, n_head, inner, float(eps),
                         jnp.dtype(x.dtype).name, _single_buffer_supported())
    return fn(x, kp["w_qkv"], kp["b_qkv"], kp["w_proj"], kp["b_proj"],
              kp["ln1_g"], kp["ln1_b"], kp["ln2_g"], kp["ln2_b"],
              kp["w_fc"], kp["b_fc"], kp["w_fp"], kp["b_fp"])


def reference_block(x, p, *, n_head, scale=False, eps=1e-5):
    """Pure-JAX f32 reference mirroring the PyTorch forward (eval mode)."""
    B, T, C = x.shape
    hd = C // n_head

    def ln(v, g, b):
        mu = v.mean(-1, keepdims=True)
        var = ((v - mu) ** 2).mean(-1, keepdims=True)
        return (v - mu) / jnp.sqrt(var + eps) * g + b

    h = ln(x, p["ln1_g"], p["ln1_b"])
    qkv = h @ p["w_attn"] + p["b_attn"]
    q, k, v = jnp.split(qkv, 3, axis=-1)
    split = lambda t: t.reshape(B, T, n_head, hd).transpose(0, 2, 1, 3)
    q, k, v = split(q), split(k), split(v)
    w = jnp.einsum("bhqd,bhkd->bhqk", q, k)
    if scale:
        w = w / jnp.sqrt(jnp.float32(hd))
    mask = jnp.tril(jnp.ones((T, T), bool))
    w = jnp.where(mask, w, jnp.float32(-10000.0))
    w = jax.nn.softmax(w, axis=-1)
    a = jnp.einsum("bhqk,bhkd->bhqd", w, v).transpose(0, 2, 1, 3).reshape(B, T, C)
    a = a @ p["w_attn_proj"] + p["b_attn_proj"]
    h1 = x + a
    ff = ln(h1, p["ln2_g"], p["ln2_b"]) @ p["w_fc"] + p["b_fc"]
    ff = 0.5 * ff * (1.0 + jnp.tanh(jnp.sqrt(2.0 / jnp.pi) * (ff + 0.044715 * ff ** 3)))
    ff = ff @ p["w_fc_proj"] + p["b_fc_proj"]
    return h1 + ff


def make_params(key, n_embd, n_inner):
    ks = jax.random.split(key, 4)
    std = 0.02
    f32 = jnp.float32
    return {
        "ln1_g": jnp.ones((1, n_embd), f32),
        "ln1_b": jnp.zeros((1, n_embd), f32),
        "w_attn": std * jax.random.normal(ks[0], (n_embd, 3 * n_embd), f32),
        "b_attn": jnp.zeros((1, 3 * n_embd), f32),
        "w_attn_proj": std * jax.random.normal(ks[1], (n_embd, n_embd), f32),
        "b_attn_proj": jnp.zeros((1, n_embd), f32),
        "ln2_g": jnp.ones((1, n_embd), f32),
        "ln2_b": jnp.zeros((1, n_embd), f32),
        "w_fc": std * jax.random.normal(ks[2], (n_embd, n_inner), f32),
        "b_fc": jnp.zeros((1, n_inner), f32),
        "w_fc_proj": std * jax.random.normal(ks[3], (n_inner, n_embd), f32),
        "b_fc_proj": jnp.zeros((1, n_embd), f32),
    }


if __name__ == "__main__":
    # Small config consistent with the module: n_embd=32, n_head=4, seq=8, batch=2.
    # (Note: perf conclusions at C=32 lanes do not transfer to real shapes; real runs
    # should use C a multiple of 128.)
    B, T, C, H = 2, 8, 32, 4
    n_inner = 4 * C                     # config.n_inner is None -> 4 * hidden
    scale = False                       # Block default: scale=False

    key = jax.random.PRNGKey(0)
    k_x, k_p = jax.random.split(key)
    x = jax.random.normal(k_x, (B, T, C), jnp.float32)
    params = make_params(k_p, C, n_inner)

    kparams = prepare_block_params(params, n_head=H, scale=scale)
    out = gpt2_block(x, kparams, n_head=H, eps=1e-5)
    out = jax.block_until_ready(out)

    ref = reference_block(x, params, n_head=H, scale=scale, eps=1e-5)
    assert out.shape == (B, T, C)
    # bf16 MXU operands (f32 accumulation) + approx reciprocal vs a pure-f32
    # reference: tolerance at the bf16 rounding level; structural errors would be
    # O(0.1-1).
    assert jnp.allclose(out, ref, atol=1e-2, rtol=1e-2), "mismatch vs reference"
    print("KERNEL_OK")
</pallas_src>

<mosaic_0001>
module attributes {stable_mosaic.version = 11 : i64} {
  func.func @k(%arg0: i32, %arg1: memref<8x128xf32, #tpu.memory_space<vmem>>, %arg2: memref<8x128xf32, #tpu.memory_space<vmem>>, %arg3: memref<2x8x128xf32, #tpu.memory_space<vmem>>, %arg4: memref<8x128xf32, #tpu.memory_space<vmem>>) attributes {dimension_semantics = [#tpu.dimension_semantics<arbitrary>], iteration_bounds = array<i64: 2>, scalar_prefetch = 0 : i64, scratch_operands = 0 : i64, tpu.core_type = #tpu.core_type<tc>, window_params = [{transform_indices = @transform_0, window_bounds = array<i64: 8, 128>}, {pipeline_mode = #tpu.pipeline_mode<synchronous>, transform_indices = @transform_1, window_bounds = array<i64: 8, 128>}, {pipeline_mode = #tpu.pipeline_mode<synchronous>, transform_indices = @transform_2, window_bounds = array<i64: 2, 8, 128>}, {transform_indices = @transform_3, window_bounds = array<i64: 8, 128>}]} {
    %c0 = arith.constant 0 : index
    %c0_0 = arith.constant 0 : index
    %0 = vector.load %arg1[%c0, %c0_0] : memref<8x128xf32, #tpu.memory_space<vmem>>, vector<8x128xf32>
    %c0_1 = arith.constant 0 : index
    %c0_2 = arith.constant 0 : index
    %1 = vector.load %arg2[%c0_1, %c0_2] : memref<8x128xf32, #tpu.memory_space<vmem>>, vector<8x128xf32>
    %2 = arith.addf %0, %1 : vector<8x128xf32>
    %c0_3 = arith.constant 0 : index
    %c0_4 = arith.constant 0 : index
    %c0_5 = arith.constant 0 : index
    %3 = vector.load %arg3[%c0_3, %c0_4, %c0_5] : memref<2x8x128xf32, #tpu.memory_space<vmem>>, vector<1x8x128xf32>
    %4 = vector.shape_cast %3 : vector<1x8x128xf32> to vector<8x128xf32>
    %5 = arith.addf %2, %4 : vector<8x128xf32>
    %c0_6 = arith.constant 0 : index
    %c0_7 = arith.constant 0 : index
    %6 = vector.load %arg4[%c0_6, %c0_7] : memref<8x128xf32, #tpu.memory_space<vmem>>, vector<8x128xf32>
    tpu.vector_store %arg4[%c0_6, %c0_7], %5 {strides = array<i32>} : memref<8x128xf32, #tpu.memory_space<vmem>>, vector<8x128xf32>,
    return
  }
  func.func @transform_0(%arg0: i32) -> (i32, i32) {
    %c0_i32 = arith.constant 0 : i32
    %c0_i32_0 = arith.constant 0 : i32
    return %arg0, %c0_i32 : i32, i32
  }
  func.func @transform_1(%arg0: i32) -> (i32, i32) {
    %c0_i32 = arith.constant 0 : i32
    %c0_i32_0 = arith.constant 0 : i32
    %c0_i32_1 = arith.constant 0 : i32
    return %c0_i32, %c0_i32_0 : i32, i32
  }
  func.func @transform_2(%arg0: i32) -> (i32, i32, i32) {
    %c0_i32 = arith.constant 0 : i32
    %c0_i32_0 = arith.constant 0 : i32
    %c0_i32_1 = arith.constant 0 : i32
    %c0_i32_2 = arith.constant 0 : i32
    return %c0_i32, %c0_i32_0, %c0_i32_1 : i32, i32, i32
  }
  func.func @transform_3(%arg0: i32) -> (i32, i32) {
    %c0_i32 = arith.constant 0 : i32
    %c0_i32_0 = arith.constant 0 : i32
    return %arg0, %c0_i32 : i32, i32
  }
}

module attributes {stable_mosaic.version = 11 : i64} {
  func.func @block_kernel(%arg0: i32, %arg1: memref<1x8x32xf32, #tpu.memory_space<vmem>>, %arg2: memref<8x8xf32, #tpu.memory_space<vmem>>, %arg3: memref<1x32xf32, #tpu.memory_space<vmem>>, %arg4: memref<1x32xf32, #tpu.memory_space<vmem>>, %arg5: memref<12x32x8xbf16, #tpu.memory_space<vmem>>, %arg6: memref<12x1x8xf32, #tpu.memory_space<vmem>>, %arg7: memref<4x8x32xbf16, #tpu.memory_space<vmem>>, %arg8: memref<1x32xf32, #tpu.memory_space<vmem>>, %arg9: memref<1x32xf32, #tpu.memory_space<vmem>>, %arg10: memref<1x32xf32, #tpu.memory_space<vmem>>, %arg11: memref<32x128xbf16, #tpu.memory_space<vmem>>, %arg12: memref<1x128xf32, #tpu.memory_space<vmem>>, %arg13: memref<128x32xbf16, #tpu.memory_space<vmem>>, %arg14: memref<1x32xf32, #tpu.memory_space<vmem>>, %arg15: memref<1x8x32xf32, #tpu.memory_space<vmem>>) attributes {dimension_semantics = [#tpu.dimension_semantics<parallel>], iteration_bounds = array<i64: 2>, scalar_prefetch = 0 : i64, scratch_operands = 0 : i64, tpu.core_type = #tpu.core_type<tc>, window_params = [{transform_indices = @transform_0, window_bounds = array<i64: 1, 8, 32>}, {pipeline_mode = #tpu.pipeline_mode<synchronous>, transform_indices = @transform_1, window_bounds = array<i64: 8, 8>}, {pipeline_mode = #tpu.pipeline_mode<synchronous>, transform_indices = @transform_2, window_bounds = array<i64: 1, 32>}, {pipeline_mode = #tpu.pipeline_mode<synchronous>, transform_indices = @transform_3, window_bounds = array<i64: 1, 32>}, {pipeline_mode = #tpu.pipeline_mode<synchronous>, transform_indices = @transform_4, window_bounds = array<i64: 12, 32, 8>}, {pipeline_mode = #tpu.pipeline_mode<synchronous>, transform_indices = @transform_5, window_bounds = array<i64: 12, 1, 8>}, {pipeline_mode = #tpu.pipeline_mode<synchronous>, transform_indices = @transform_6, window_bounds = array<i64: 4, 8, 32>}, {pipeline_mode = #tpu.pipeline_mode<synchronous>, transform_indices = @transform_7, window_bounds = array<i64: 1, 32>}, {pipeline_mode = #tpu.pipeline_mode<synchronous>, transform_indices = @transform_8, window_bounds = array<i64: 1, 32>}, {pipeline_mode = #tpu.pipeline_mode<synchronous>, transform_indices = @transform_9, window_bounds = array<i64: 1, 32>}, {pipeline_mode = #tpu.pipeline_mode<synchronous>, transform_indices = @transform_10, window_bounds = array<i64: 32, 128>}, {pipeline_mode = #tpu.pipeline_mode<synchronous>, transform_indices = @transform_11, window_bounds = array<i64: 1, 128>}, {pipeline_mode = #tpu.pipeline_mode<synchronous>, transform_indices = @transform_12, window_bounds = array<i64: 128, 32>}, {pipeline_mode = #tpu.pipeline_mode<synchronous>, transform_indices = @transform_13, window_bounds = array<i64: 1, 32>}, {transform_indices = @transform_14, window_bounds = array<i64: 1, 8, 32>}]} {
    %c0 = arith.constant 0 : index
    %c0_0 = arith.constant 0 : index
    %c0_1 = arith.constant 0 : index
    %0 = vector.load %arg1[%c0, %c0_0, %c0_1] : memref<1x8x32xf32, #tpu.memory_space<vmem>>, vector<1x8x32xf32>
    %1 = vector.shape_cast %0 : vector<1x8x32xf32> to vector<8x32xf32>
    %c0_2 = arith.constant 0 : index
    %c0_3 = arith.constant 0 : index
    %2 = vector.load %arg3[%c0_2, %c0_3] : memref<1x32xf32, #tpu.memory_space<vmem>>, vector<1x32xf32>
    %c0_4 = arith.constant 0 : index
    %c0_5 = arith.constant 0 : index
    %3 = vector.load %arg4[%c0_4, %c0_5] : memref<1x32xf32, #tpu.memory_space<vmem>>, vector<1x32xf32>
    %cst = arith.constant dense<0.000000e+00> : vector<8xf32>
    %4 = vector.multi_reduction <add>, %1, %cst [1] : vector<8x32xf32> to vector<8xf32>
    %5 = vector.shape_cast %4 : vector<8xf32> to vector<8x1xf32>
    %cst_6 = arith.constant 3.200000e+01 : f32
    %6 = vector.broadcast %cst_6 : f32 to vector<8x1xf32>
    %7 = arith.divf %5, %6 : vector<8x1xf32>
    %8 = vector.broadcast %7 : vector<8x1xf32> to vector<8x32xf32>
    %9 = arith.subf %1, %8 : vector<8x32xf32>
    %10 = arith.mulf %9, %9 : vector<8x32xf32>
    %cst_7 = arith.constant dense<0.000000e+00> : vector<8xf32>
    %11 = vector.multi_reduction <add>, %10, %cst_7 [1] : vector<8x32xf32> to vector<8xf32>
    %12 = vector.shape_cast %11 : vector<8xf32> to vector<8x1xf32>
    %cst_8 = arith.constant 3.200000e+01 : f32
    %13 = vector.broadcast %cst_8 : f32 to vector<8x1xf32>
    %14 = arith.divf %12, %13 : vector<8x1xf32>
    %15 = vector.broadcast %7 : vector<8x1xf32> to vector<8x32xf32>
    %16 = arith.subf %1, %15 : vector<8x32xf32>
    %cst_9 = arith.constant 9.99999974E-6 : f32
    %17 = vector.broadcast %cst_9 : f32 to vector<8x1xf32>
    %18 = arith.addf %14, %17 : vector<8x1xf32>
    %19 = math.rsqrt %18 : vector<8x1xf32>
    %20 = vector.broadcast %19 : vector<8x1xf32> to vector<8x32xf32>
    %21 = arith.mulf %16, %20 : vector<8x32xf32>
    %22 = vector.broadcast %2 : vector<1x32xf32> to vector<8x32xf32>
    %23 = arith.mulf %21, %22 : vector<8x32xf32>
    %24 = vector.broadcast %3 : vector<1x32xf32> to vector<8x32xf32>
    %25 = arith.addf %23, %24 : vector<8x32xf32>
    %26 = arith.truncf %25 : vector<8x32xf32> to vector<8x32xbf16>
    %c0_10 = arith.constant 0 : index
    %c0_11 = arith.constant 0 : index
    %c0_12 = arith.constant 0 : index
    %27 = vector.load %arg6[%c0_10, %c0_11, %c0_12] : memref<12x1x8xf32, #tpu.memory_space<vmem>>, vector<12x1x8xf32>
    %c0_13 = arith.constant 0 : index
    %c0_14 = arith.constant 0 : index
    %c0_15 = arith.constant 0 : index
    %28 = vector.load %arg5[%c0_13, %c0_14, %c0_15] : memref<12x32x8xbf16, #tpu.memory_space<vmem>>, vector<1x32x8xbf16>
    %29 = vector.shape_cast %28 : vector<1x32x8xbf16> to vector<32x8xbf16>
    %cst_16 = arith.constant dense<0.000000e+00> : vector<8x8xf32>
    %30 = tpu.matmul %26, %29, %cst_16 {dimension_numbers = #tpu.dot_dimension_numbers<[1], [0], [0], [1], [0, 0, 1, 1], [], []>} : vector<8x32xbf16>, vector<32x8xbf16>, vector<8x8xf32> -> vector<8x8xf32>
    %c1 = arith.constant 1 : index
    %c0_17 = arith.constant 0 : index
    %c0_18 = arith.constant 0 : index
    %31 = vector.load %arg5[%c1, %c0_17, %c0_18] : memref<12x32x8xbf16, #tpu.memory_space<vmem>>, vector<1x32x8xbf16>
    %32 = vector.shape_cast %31 : vector<1x32x8xbf16> to vector<32x8xbf16>
    %cst_19 = arith.constant dense<0.000000e+00> : vector<8x8xf32>
    %33 = tpu.matmul %26, %32, %cst_19 {dimension_numbers = #tpu.dot_dimension_numbers<[1], [0], [0], [1], [0, 0, 1, 1], [], []>} : vector<8x32xbf16>, vector<32x8xbf16>, vector<8x8xf32> -> vector<8x8xf32>
    %c2 = arith.constant 2 : index
    %c0_20 = arith.constant 0 : index
    %c0_21 = arith.constant 0 : index
    %34 = vector.load %arg5[%c2, %c0_20, %c0_21] : memref<12x32x8xbf16, #tpu.memory_space<vmem>>, vector<1x32x8xbf16>
    %35 = vector.shape_cast %34 : vector<1x32x8xbf16> to vector<32x8xbf16>
    %cst_22 = arith.constant dense<0.000000e+00> : vector<8x8xf32>
    %36 = tpu.matmul %26, %35, %cst_22 {dimension_numbers = #tpu.dot_dimension_numbers<[1], [0], [0], [1], [0, 0, 1, 1], [], []>} : vector<8x32xbf16>, vector<32x8xbf16>, vector<8x8xf32> -> vector<8x8xf32>
    %c3 = arith.constant 3 : index
    %c0_23 = arith.constant 0 : index
    %c0_24 = arith.constant 0 : index
    %37 = vector.load %arg5[%c3, %c0_23, %c0_24] : memref<12x32x8xbf16, #tpu.memory_space<vmem>>, vector<1x32x8xbf16>
    %38 = vector.shape_cast %37 : vector<1x32x8xbf16> to vector<32x8xbf16>
    %cst_25 = arith.constant dense<0.000000e+00> : vector<8x8xf32>
    %39 = tpu.matmul %26, %38, %cst_25 {dimension_numbers = #tpu.dot_dimension_numbers<[1], [0], [0], [1], [0, 0, 1, 1], [], []>} : vector<8x32xbf16>, vector<32x8xbf16>, vector<8x8xf32> -> vector<8x8xf32>
    %40 = vector.shape_cast %30 : vector<8x8xf32> to vector<1x8x8xf32>
    %41 = vector.shape_cast %33 : vector<8x8xf32> to vector<1x8x8xf32>
    %42 = vector.shape_cast %36 : vector<8x8xf32> to vector<1x8x8xf32>
    %43 = vector.shape_cast %39 : vector<8x8xf32> to vector<1x8x8xf32>
    %44 = tpu.concatenate %40, %41, %42, %43 in 0 : vector<1x8x8xf32>, vector<1x8x8xf32>, vector<1x8x8xf32>, vector<1x8x8xf32> -> vector<4x8x8xf32>
    %45 = vector.extract_strided_slice %27 {offsets = [0, 0, 0], sizes = [4, 1, 8], strides = [1, 1, 1]} : vector<12x1x8xf32> to vector<4x1x8xf32>
    %46 = vector.broadcast %45 : vector<4x1x8xf32> to vector<4x8x8xf32>
    %47 = arith.addf %44, %46 : vector<4x8x8xf32>
    %c4 = arith.constant 4 : index
    %c0_26 = arith.constant 0 : index
    %c0_27 = arith.constant 0 : index
    %48 = vector.load %arg5[%c4, %c0_26, %c0_27] : memref<12x32x8xbf16, #tpu.memory_space<vmem>>, vector<1x32x8xbf16>
    %49 = vector.shape_cast %48 : vector<1x32x8xbf16> to vector<32x8xbf16>
    %cst_28 = arith.constant dense<0.000000e+00> : vector<8x8xf32>
    %50 = tpu.matmul %26, %49, %cst_28 {dimension_numbers = #tpu.dot_dimension_numbers<[1], [0], [0], [1], [0, 0, 1, 1], [], []>} : vector<8x32xbf16>, vector<32x8xbf16>, vector<8x8xf32> -> vector<8x8xf32>
    %c5 = arith.constant 5 : index
    %c0_29 = arith.constant 0 : index
    %c0_30 = arith.constant 0 : index
    %51 = vector.load %arg5[%c5, %c0_29, %c0_30] : memref<12x32x8xbf16, #tpu.memory_space<vmem>>, vector<1x32x8xbf16>
    %52 = vector.shape_cast %51 : vector<1x32x8xbf16> to vector<32x8xbf16>
    %cst_31 = arith.constant dense<0.000000e+00> : vector<8x8xf32>
    %53 = tpu.matmul %26, %52, %cst_31 {dimension_numbers = #tpu.dot_dimension_numbers<[1], [0], [0], [1], [0, 0, 1, 1], [], []>} : vector<8x32xbf16>, vector<32x8xbf16>, vector<8x8xf32> -> vector<8x8xf32>
    %c6 = arith.constant 6 : index
    %c0_32 = arith.constant 0 : index
    %c0_33 = arith.constant 0 : index
    %54 = vector.load %arg5[%c6, %c0_32, %c0_33] : memref<12x32x8xbf16, #tpu.memory_space<vmem>>, vector<1x32x8xbf16>
    %55 = vector.shape_cast %54 : vector<1x32x8xbf16> to vector<32x8xbf16>
    %cst_34 = arith.constant dense<0.000000e+00> : vector<8x8xf32>
    %56 = tpu.matmul %26, %55, %cst_34 {dimension_numbers = #tpu.dot_dimension_numbers<[1], [0], [0], [1], [0, 0, 1, 1], [], []>} : vector<8x32xbf16>, vector<32x8xbf16>, vector<8x8xf32> -> vector<8x8xf32>
    %c7 = arith.constant 7 : index
    %c0_35 = arith.constant 0 : index
    %c0_36 = arith.constant 0 : index
    %57 = vector.load %arg5[%c7, %c0_35, %c0_36] : memref<12x32x8xbf16, #tpu.memory_space<vmem>>, vector<1x32x8xbf16>
    %58 = vector.shape_cast %57 : vector<1x32x8xbf16> to vector<32x8xbf16>
    %cst_37 = arith.constant dense<0.000000e+00> : vector<8x8xf32>
    %59 = tpu.matmul %26, %58, %cst_37 {dimension_numbers = #tpu.dot_dimension_numbers<[1], [0], [0], [1], [0, 0, 1, 1], [], []>} : vector<8x32xbf16>, vector<32x8xbf16>, vector<8x8xf32> -> vector<8x8xf32>
    %60 = vector.shape_cast %50 : vector<8x8xf32> to vector<1x8x8xf32>
    %61 = vector.shape_cast %53 : vector<8x8xf32> to vector<1x8x8xf32>
    %62 = vector.shape_cast %56 : vector<8x8xf32> to vector<1x8x8xf32>
    %63 = vector.shape_cast %59 : vector<8x8xf32> to vector<1x8x8xf32>
    %64 = tpu.concatenate %60, %61, %62, %63 in 0 : vector<1x8x8xf32>, vector<1x8x8xf32>, vector<1x8x8xf32>, vector<1x8x8xf32> -> vector<4x8x8xf32>
    %65 = vector.extract_strided_slice %27 {offsets = [4, 0, 0], sizes = [4, 1, 8], strides = [1, 1, 1]} : vector<12x1x8xf32> to vector<4x1x8xf32>
    %66 = vector.broadcast %65 : vector<4x1x8xf32> to vector<4x8x8xf32>
    %67 = arith.addf %64, %66 : vector<4x8x8xf32>
    %c8 = arith.constant 8 : index
    %c0_38 = arith.constant 0 : index
    %c0_39 = arith.constant 0 : index
    %68 = vector.load %arg5[%c8, %c0_38, %c0_39] : memref<12x32x8xbf16, #tpu.memory_space<vmem>>, vector<1x32x8xbf16>
    %69 = vector.shape_cast %68 : vector<1x32x8xbf16> to vector<32x8xbf16>
    %cst_40 = arith.constant dense<0.000000e+00> : vector<8x8xf32>
    %70 = tpu.matmul %26, %69, %cst_40 {dimension_numbers = #tpu.dot_dimension_numbers<[1], [0], [0], [1], [0, 0, 1, 1], [], []>} : vector<8x32xbf16>, vector<32x8xbf16>, vector<8x8xf32> -> vector<8x8xf32>
    %c9 = arith.constant 9 : index
    %c0_41 = arith.constant 0 : index
    %c0_42 = arith.constant 0 : index
    %71 = vector.load %arg5[%c9, %c0_41, %c0_42] : memref<12x32x8xbf16, #tpu.memory_space<vmem>>, vector<1x32x8xbf16>
    %72 = vector.shape_cast %71 : vector<1x32x8xbf16> to vector<32x8xbf16>
    %cst_43 = arith.constant dense<0.000000e+00> : vector<8x8xf32>
    %73 = tpu.matmul %26, %72, %cst_43 {dimension_numbers = #tpu.dot_dimension_numbers<[1], [0], [0], [1], [0, 0, 1, 1], [], []>} : vector<8x32xbf16>, vector<32x8xbf16>, vector<8x8xf32> -> vector<8x8xf32>
    %c10 = arith.constant 10 : index
    %c0_44 = arith.constant 0 : index
    %c0_45 = arith.constant 0 : index
    %74 = vector.load %arg5[%c10, %c0_44, %c0_45] : memref<12x32x8xbf16, #tpu.memory_space<vmem>>, vector<1x32x8xbf16>
    %75 = vector.shape_cast %74 : vector<1x32x8xbf16> to vector<32x8xbf16>
    %cst_46 = arith.constant dense<0.000000e+00> : vector<8x8xf32>
    %76 = tpu.matmul %26, %75, %cst_46 {dimension_numbers = #tpu.dot_dimension_numbers<[1], [0], [0], [1], [0, 0, 1, 1], [], []>} : vector<8x32xbf16>, vector<32x8xbf16>, vector<8x8xf32> -> vector<8x8xf32>
    %c11 = arith.constant 11 : index
    %c0_47 = arith.constant 0 : index
    %c0_48 = arith.constant 0 : index
    %77 = vector.load %arg5[%c11, %c0_47, %c0_48] : memref<12x32x8xbf16, #tpu.memory_space<vmem>>, vector<1x32x8xbf16>
    %78 = vector.shape_cast %77 : vector<1x32x8xbf16> to vector<32x8xbf16>
    %cst_49 = arith.constant dense<0.000000e+00> : vector<8x8xf32>
    %79 = tpu.matmul %26, %78, %cst_49 {dimension_numbers = #tpu.dot_dimension_numbers<[1], [0], [0], [1], [0, 0, 1, 1], [], []>} : vector<8x32xbf16>, vector<32x8xbf16>, vector<8x8xf32> -> vector<8x8xf32>
    %80 = vector.shape_cast %70 : vector<8x8xf32> to vector<1x8x8xf32>
    %81 = vector.shape_cast %73 : vector<8x8xf32> to vector<1x8x8xf32>
    %82 = vector.shape_cast %76 : vector<8x8xf32> to vector<1x8x8xf32>
    %83 = vector.shape_cast %79 : vector<8x8xf32> to vector<1x8x8xf32>
    %84 = tpu.concatenate %80, %81, %82, %83 in 0 : vector<1x8x8xf32>, vector<1x8x8xf32>, vector<1x8x8xf32>, vector<1x8x8xf32> -> vector<4x8x8xf32>
    %85 = vector.extract_strided_slice %27 {offsets = [8, 0, 0], sizes = [4, 1, 8], strides = [1, 1, 1]} : vector<12x1x8xf32> to vector<4x1x8xf32>
    %86 = vector.broadcast %85 : vector<4x1x8xf32> to vector<4x8x8xf32>
    %87 = arith.addf %84, %86 : vector<4x8x8xf32>
    %c0_50 = arith.constant 0 : index
    %c0_51 = arith.constant 0 : index
    %88 = vector.load %arg2[%c0_50, %c0_51] : memref<8x8xf32, #tpu.memory_space<vmem>>, vector<8x8xf32>
    %89 = arith.truncf %47 : vector<4x8x8xf32> to vector<4x8x8xbf16>
    %cst_52 = arith.constant -1.000000e+30 : f32
    %90 = vector.broadcast %cst_52 : f32 to vector<4x8x1xf32>
    %cst_53 = arith.constant 0.000000e+00 : f32
    %91 = vector.broadcast %cst_53 : f32 to vector<4x8x1xf32>
    %cst_54 = arith.constant 0.000000e+00 : f32
    %92 = vector.broadcast %cst_54 : f32 to vector<4x8x8xf32>
    %93 = arith.truncf %67 : vector<4x8x8xf32> to vector<4x8x8xbf16>
    %94 = arith.truncf %87 : vector<4x8x8xf32> to vector<4x8x8xbf16>
    "tpu.trace_start"() <{level = 10 : i32, message = "hqd,hkd->hqk"}> : () -> ()
    %cst_55 = arith.constant dense<0.000000e+00> : vector<4x8x8xf32>
    %95 = tpu.matmul %89, %93, %cst_55 {dimension_numbers = #tpu.dot_dimension_numbers<[2], [2], [1], [1], [0, 0, 0, 1, 1, 1], [0], [0]>} : vector<4x8x8xbf16>, vector<4x8x8xbf16>, vector<4x8x8xf32> -> vector<4x8x8xf32>
    "tpu.trace_stop"() : () -> ()
    %96 = vector.shape_cast %88 : vector<8x8xf32> to vector<1x8x8xf32>
    %97 = vector.broadcast %96 : vector<1x8x8xf32> to vector<4x8x8xf32>
    %98 = arith.addf %95, %97 : vector<4x8x8xf32>
    %cst_56 = arith.constant dense<0xFF800000> : vector<4x8xf32>
    %99 = vector.multi_reduction <maximumf>, %98, %cst_56 [2] : vector<4x8x8xf32> to vector<4x8xf32>
    %100 = vector.shape_cast %99 : vector<4x8xf32> to vector<4x8x1xf32>
    %101 = arith.maximumf %90, %100 : vector<4x8x1xf32>
    %102 = arith.subf %90, %101 : vector<4x8x1xf32>
    %103 = math.exp %102 : vector<4x8x1xf32>
    %104 = vector.broadcast %101 : vector<4x8x1xf32> to vector<4x8x8xf32>
    %105 = arith.subf %98, %104 : vector<4x8x8xf32>
    %106 = math.exp %105 : vector<4x8x8xf32>
    %107 = arith.mulf %103, %91 : vector<4x8x1xf32>
    %cst_57 = arith.constant dense<0.000000e+00> : vector<4x8xf32>
    %108 = vector.multi_reduction <add>, %106, %cst_57 [2] : vector<4x8x8xf32> to vector<4x8xf32>
    %109 = vector.shape_cast %108 : vector<4x8xf32> to vector<4x8x1xf32>
    %110 = arith.addf %107, %109 : vector<4x8x1xf32>
    %111 = vector.broadcast %103 : vector<4x8x1xf32> to vector<4x8x8xf32>
    %112 = arith.mulf %111, %92 : vector<4x8x8xf32>
    %113 = arith.truncf %106 : vector<4x8x8xf32> to vector<4x8x8xbf16>
    "tpu.trace_start"() <{level = 10 : i32, message = "hqk,hkd->hqd"}> : () -> ()
    %cst_58 = arith.constant dense<0.000000e+00> : vector<4x8x8xf32>
    %114 = tpu.matmul %113, %94, %cst_58 {dimension_numbers = #tpu.dot_dimension_numbers<[2], [1], [1], [2], [0, 0, 0, 1, 1, 2], [0], [0]>} : vector<4x8x8xbf16>, vector<4x8x8xbf16>, vector<4x8x8xf32> -> vector<4x8x8xf32>
    "tpu.trace_stop"() : () -> ()
    %115 = arith.addf %112, %114 : vector<4x8x8xf32>
    %116 = tpu.reciprocal %110 {approx = true} : vector<4x8x1xf32> -> vector<4x8x1xf32>
    %117 = vector.broadcast %116 : vector<4x8x1xf32> to vector<4x8x8xf32>
    %118 = arith.mulf %115, %117 : vector<4x8x8xf32>
    %cst_59 = arith.constant 0.000000e+00 : f32
    %119 = vector.broadcast %cst_59 : f32 to vector<8x32xf32>
    %120 = vector.extract_strided_slice %118 {offsets = [0, 0, 0], sizes = [1, 8, 8], strides = [1, 1, 1]} : vector<4x8x8xf32> to vector<1x8x8xf32>
    %121 = vector.shape_cast %120 : vector<1x8x8xf32> to vector<8x8xf32>
    %122 = arith.truncf %121 : vector<8x8xf32> to vector<8x8xbf16>
    %c0_60 = arith.constant 0 : index
    %c0_61 = arith.constant 0 : index
    %c0_62 = arith.constant 0 : index
    %123 = vector.load %arg7[%c0_60, %c0_61, %c0_62] : memref<4x8x32xbf16, #tpu.memory_space<vmem>>, vector<1x8x32xbf16>
    %124 = vector.shape_cast %123 : vector<1x8x32xbf16> to vector<8x32xbf16>
    %cst_63 = arith.constant dense<0.000000e+00> : vector<8x32xf32>
    %125 = tpu.matmul %122, %124, %cst_63 {dimension_numbers = #tpu.dot_dimension_numbers<[1], [0], [0], [1], [0, 0, 1, 1], [], []>} : vector<8x8xbf16>, vector<8x32xbf16>, vector<8x32xf32> -> vector<8x32xf32>
    %126 = arith.addf %119, %125 : vector<8x32xf32>
    %127 = vector.extract_strided_slice %118 {offsets = [1, 0, 0], sizes = [1, 8, 8], strides = [1, 1, 1]} : vector<4x8x8xf32> to vector<1x8x8xf32>
    %128 = vector.shape_cast %127 : vector<1x8x8xf32> to vector<8x8xf32>
    %129 = arith.truncf %128 : vector<8x8xf32> to vector<8x8xbf16>
    %c1_64 = arith.constant 1 : index
    %c0_65 = arith.constant 0 : index
    %c0_66 = arith.constant 0 : index
    %130 = vector.load %arg7[%c1_64, %c0_65, %c0_66] : memref<4x8x32xbf16, #tpu.memory_space<vmem>>, vector<1x8x32xbf16>
    %131 = vector.shape_cast %130 : vector<1x8x32xbf16> to vector<8x32xbf16>
    %cst_67 = arith.constant dense<0.000000e+00> : vector<8x32xf32>
    %132 = tpu.matmul %129, %131, %cst_67 {dimension_numbers = #tpu.dot_dimension_numbers<[1], [0], [0], [1], [0, 0, 1, 1], [], []>} : vector<8x8xbf16>, vector<8x32xbf16>, vector<8x32xf32> -> vector<8x32xf32>
    %133 = arith.addf %126, %132 : vector<8x32xf32>
    %134 = vector.extract_strided_slice %118 {offsets = [2, 0, 0], sizes = [1, 8, 8], strides = [1, 1, 1]} : vector<4x8x8xf32> to vector<1x8x8xf32>
    %135 = vector.shape_cast %134 : vector<1x8x8xf32> to vector<8x8xf32>
    %136 = arith.truncf %135 : vector<8x8xf32> to vector<8x8xbf16>
    %c2_68 = arith.constant 2 : index
    %c0_69 = arith.constant 0 : index
    %c0_70 = arith.constant 0 : index
    %137 = vector.load %arg7[%c2_68, %c0_69, %c0_70] : memref<4x8x32xbf16, #tpu.memory_space<vmem>>, vector<1x8x32xbf16>
    %138 = vector.shape_cast %137 : vector<1x8x32xbf16> to vector<8x32xbf16>
    %cst_71 = arith.constant dense<0.000000e+00> : vector<8x32xf32>
    %139 = tpu.matmul %136, %138, %cst_71 {dimension_numbers = #tpu.dot_dimension_numbers<[1], [0], [0], [1], [0, 0, 1, 1], [], []>} : vector<8x8xbf16>, vector<8x32xbf16>, vector<8x32xf32> -> vector<8x32xf32>
    %140 = arith.addf %133, %139 : vector<8x32xf32>
    %141 = vector.extract_strided_slice %118 {offsets = [3, 0, 0], sizes = [1, 8, 8], strides = [1, 1, 1]} : vector<4x8x8xf32> to vector<1x8x8xf32>
    %142 = vector.shape_cast %141 : vector<1x8x8xf32> to vector<8x8xf32>
    %143 = arith.truncf %142 : vector<8x8xf32> to vector<8x8xbf16>
    %c3_72 = arith.constant 3 : index
    %c0_73 = arith.constant 0 : index
    %c0_74 = arith.constant 0 : index
    %144 = vector.load %arg7[%c3_72, %c0_73, %c0_74] : memref<4x8x32xbf16, #tpu.memory_space<vmem>>, vector<1x8x32xbf16>
    %145 = vector.shape_cast %144 : vector<1x8x32xbf16> to vector<8x32xbf16>
    %cst_75 = arith.constant dense<0.000000e+00> : vector<8x32xf32>
    %146 = tpu.matmul %143, %145, %cst_75 {dimension_numbers = #tpu.dot_dimension_numbers<[1], [0], [0], [1], [0, 0, 1, 1], [], []>} : vector<8x8xbf16>, vector<8x32xbf16>, vector<8x32xf32> -> vector<8x32xf32>
    %147 = arith.addf %140, %146 : vector<8x32xf32>
    %c0_76 = arith.constant 0 : index
    %c0_77 = arith.constant 0 : index
    %148 = vector.load %arg8[%c0_76, %c0_77] : memref<1x32xf32, #tpu.memory_space<vmem>>, vector<1x32xf32>
    %149 = vector.broadcast %148 : vector<1x32xf32> to vector<8x32xf32>
    %150 = arith.addf %147, %149 : vector<8x32xf32>
    %151 = arith.addf %1, %150 : vector<8x32xf32>
    %c0_78 = arith.constant 0 : index
    %c0_79 = arith.constant 0 : index
    %152 = vector.load %arg9[%c0_78, %c0_79] : memref<1x32xf32, #tpu.memory_space<vmem>>, vector<1x32xf32>
    %c0_80 = arith.constant 0 : index
    %c0_81 = arith.constant 0 : index
    %153 = vector.load %arg10[%c0_80, %c0_81] : memref<1x32xf32, #tpu.memory_space<vmem>>, vector<1x32xf32>
    %cst_82 = arith.constant dense<0.000000e+00> : vector<8xf32>
    %154 = vector.multi_reduction <add>, %151, %cst_82 [1] : vector<8x32xf32> to vector<8xf32>
    %155 = vector.shape_cast %154 : vector<8xf32> to vector<8x1xf32>
    %cst_83 = arith.constant 3.200000e+01 : f32
    %156 = vector.broadcast %cst_83 : f32 to vector<8x1xf32>
    %157 = arith.divf %155, %156 : vector<8x1xf32>
    %158 = vector.broadcast %157 : vector<8x1xf32> to vector<8x32xf32>
    %159 = arith.subf %151, %158 : vector<8x32xf32>
    %160 = arith.mulf %159, %159 : vector<8x32xf32>
    %cst_84 = arith.constant dense<0.000000e+00> : vector<8xf32>
    %161 = vector.multi_reduction <add>, %160, %cst_84 [1] : vector<8x32xf32> to vector<8xf32>
    %162 = vector.shape_cast %161 : vector<8xf32> to vector<8x1xf32>
    %cst_85 = arith.constant 3.200000e+01 : f32
    %163 = vector.broadcast %cst_85 : f32 to vector<8x1xf32>
    %164 = arith.divf %162, %163 : vector<8x1xf32>
    %165 = vector.broadcast %157 : vector<8x1xf32> to vector<8x32xf32>
    %166 = arith.subf %151, %165 : vector<8x32xf32>
    %cst_86 = arith.constant 9.99999974E-6 : f32
    %167 = vector.broadcast %cst_86 : f32 to vector<8x1xf32>
    %168 = arith.addf %164, %167 : vector<8x1xf32>
    %169 = math.rsqrt %168 : vector<8x1xf32>
    %170 = vector.broadcast %169 : vector<8x1xf32> to vector<8x32xf32>
    %171 = arith.mulf %166, %170 : vector<8x32xf32>
    %172 = vector.broadcast %152 : vector<1x32xf32> to vector<8x32xf32>
    %173 = arith.mulf %171, %172 : vector<8x32xf32>
    %174 = vector.broadcast %153 : vector<1x32xf32> to vector<8x32xf32>
    %175 = arith.addf %173, %174 : vector<8x32xf32>
    %176 = arith.truncf %175 : vector<8x32xf32> to vector<8x32xbf16>
    %c0_87 = arith.constant 0 : index
    %c0_88 = arith.constant 0 : index
    %177 = vector.load %arg11[%c0_87, %c0_88] : memref<32x128xbf16, #tpu.memory_space<vmem>>, vector<32x128xbf16>
    %cst_89 = arith.constant dense<0.000000e+00> : vector<8x128xf32>
    %178 = tpu.matmul %176, %177, %cst_89 {dimension_numbers = #tpu.dot_dimension_numbers<[1], [0], [0], [1], [0, 0, 1, 1], [], []>} : vector<8x32xbf16>, vector<32x128xbf16>, vector<8x128xf32> -> vector<8x128xf32>
    %c0_90 = arith.constant 0 : index
    %c0_91 = arith.constant 0 : index
    %179 = vector.load %arg12[%c0_90, %c0_91] : memref<1x128xf32, #tpu.memory_space<vmem>>, vector<1x128xf32>
    %180 = vector.broadcast %179 : vector<1x128xf32> to vector<8x128xf32>
    %181 = arith.addf %178, %180 : vector<8x128xf32>
    %cst_92 = arith.constant 5.000000e-01 : f32
    %182 = vector.broadcast %cst_92 : f32 to vector<8x128xf32>
    %183 = arith.mulf %182, %181 : vector<8x128xf32>
    %cst_93 = arith.constant 0.636619746 : f32
    %184 = math.sqrt %cst_93 : f32
    %cst_94 = arith.constant 4.471500e-02 : f32
    %185 = vector.broadcast %cst_94 : f32 to vector<8x128xf32>
    %186 = arith.mulf %185, %181 : vector<8x128xf32>
    %187 = arith.mulf %186, %181 : vector<8x128xf32>
    %188 = arith.mulf %187, %181 : vector<8x128xf32>
    %189 = arith.addf %181, %188 : vector<8x128xf32>
    %190 = vector.broadcast %184 : f32 to vector<8x128xf32>
    %191 = arith.mulf %190, %189 : vector<8x128xf32>
    %192 = math.tanh %191 : vector<8x128xf32>
    %cst_95 = arith.constant 1.000000e+00 : f32
    %193 = vector.broadcast %cst_95 : f32 to vector<8x128xf32>
    %194 = arith.addf %193, %192 : vector<8x128xf32>
    %195 = arith.mulf %183, %194 : vector<8x128xf32>
    %196 = arith.truncf %195 : vector<8x128xf32> to vector<8x128xbf16>
    %c0_96 = arith.constant 0 : index
    %c0_97 = arith.constant 0 : index
    %197 = vector.load %arg13[%c0_96, %c0_97] : memref<128x32xbf16, #tpu.memory_space<vmem>>, vector<128x32xbf16>
    %cst_98 = arith.constant dense<0.000000e+00> : vector<8x32xf32>
    %198 = tpu.matmul %196, %197, %cst_98 {dimension_numbers = #tpu.dot_dimension_numbers<[1], [0], [0], [1], [0, 0, 1, 1], [], []>} : vector<8x128xbf16>, vector<128x32xbf16>, vector<8x32xf32> -> vector<8x32xf32>
    %c0_99 = arith.constant 0 : index
    %c0_100 = arith.constant 0 : index
    %199 = vector.load %arg14[%c0_99, %c0_100] : memref<1x32xf32, #tpu.memory_space<vmem>>, vector<1x32xf32>
    %200 = vector.broadcast %199 : vector<1x32xf32> to vector<8x32xf32>
    %201 = arith.addf %198, %200 : vector<8x32xf32>
    %202 = arith.addf %151, %201 : vector<8x32xf32>
    %c0_101 = arith.constant 0 : index
    %c0_102 = arith.constant 0 : index
    %c0_103 = arith.constant 0 : index
    %203 = vector.load %arg15[%c0_101, %c0_102, %c0_103] : memref<1x8x32xf32, #tpu.memory_space<vmem>>, vector<1x8x32xf32>
    %204 = vector.shape_cast %203 : vector<1x8x32xf32> to vector<8x32xf32>
    %205 = vector.shape_cast %202 : vector<8x32xf32> to vector<1x8x32xf32>
    tpu.vector_store %arg15[%c0_101, %c0_102, %c0_103], %205 {strides = array<i32>} : memref<1x8x32xf32, #tpu.memory_space<vmem>>, vector<1x8x32xf32>,
    return
  }
  func.func @transform_0(%arg0: i32) -> (i32, i32, i32) {
    %c0_i32 = arith.constant 0 : i32
    %c0_i32_0 = arith.constant 0 : i32
    %c0_i32_1 = arith.constant 0 : i32
    return %arg0, %c0_i32, %c0_i32_0 : i32, i32, i32
  }
  func.func @transform_1(%arg0: i32) -> (i32, i32) {
    %c0_i32 = arith.constant 0 : i32
    %c0_i32_0 = arith.constant 0 : i32
    %c0_i32_1 = arith.constant 0 : i32
    return %c0_i32, %c0_i32_0 : i32, i32
  }
  func.func @transform_2(%arg0: i32) -> (i32, i32) {
    %c0_i32 = arith.constant 0 : i32
    %c0_i32_0 = arith.constant 0 : i32
    %c0_i32_1 = arith.constant 0 : i32
    return %c0_i32, %c0_i32_0 : i32, i32
  }
  func.func @transform_3(%arg0: i32) -> (i32, i32) {
    %c0_i32 = arith.constant 0 : i32
    %c0_i32_0 = arith.constant 0 : i32
    %c0_i32_1 = arith.constant 0 : i32
    return %c0_i32, %c0_i32_0 : i32, i32
  }
  func.func @transform_4(%arg0: i32) -> (i32, i32, i32) {
    %c0_i32 = arith.constant 0 : i32
    %c0_i32_0 = arith.constant 0 : i32
    %c0_i32_1 = arith.constant 0 : i32
    %c0_i32_2 = arith.constant 0 : i32
    return %c0_i32, %c0_i32_0, %c0_i32_1 : i32, i32, i32
  }
  func.func @transform_5(%arg0: i32) -> (i32, i32, i32) {
    %c0_i32 = arith.constant 0 : i32
    %c0_i32_0 = arith.constant 0 : i32
    %c0_i32_1 = arith.constant 0 : i32
    %c0_i32_2 = arith.constant 0 : i32
    return %c0_i32, %c0_i32_0, %c0_i32_1 : i32, i32, i32
  }
  func.func @transform_6(%arg0: i32) -> (i32, i32, i32) {
    %c0_i32 = arith.constant 0 : i32
    %c0_i32_0 = arith.constant 0 : i32
    %c0_i32_1 = arith.constant 0 : i32
    %c0_i32_2 = arith.constant 0 : i32
    return %c0_i32, %c0_i32_0, %c0_i32_1 : i32, i32, i32
  }
  func.func @transform_7(%arg0: i32) -> (i32, i32) {
    %c0_i32 = arith.constant 0 : i32
    %c0_i32_0 = arith.constant 0 : i32
    %c0_i32_1 = arith.constant 0 : i32
    return %c0_i32, %c0_i32_0 : i32, i32
  }
  func.func @transform_8(%arg0: i32) -> (i32, i32) {
    %c0_i32 = arith.constant 0 : i32
    %c0_i32_0 = arith.constant 0 : i32
    %c0_i32_1 = arith.constant 0 : i32
    return %c0_i32, %c0_i32_0 : i32, i32
  }
  func.func @transform_9(%arg0: i32) -> (i32, i32) {
    %c0_i32 = arith.constant 0 : i32
    %c0_i32_0 = arith.constant 0 : i32
    %c0_i32_1 = arith.constant 0 : i32
    return %c0_i32, %c0_i32_0 : i32, i32
  }
  func.func @transform_10(%arg0: i32) -> (i32, i32) {
    %c0_i32 = arith.constant 0 : i32
    %c0_i32_0 = arith.constant 0 : i32
    %c0_i32_1 = arith.constant 0 : i32
    return %c0_i32, %c0_i32_0 : i32, i32
  }
  func.func @transform_11(%arg0: i32) -> (i32, i32) {
    %c0_i32 = arith.constant 0 : i32
    %c0_i32_0 = arith.constant 0 : i32
    %c0_i32_1 = arith.constant 0 : i32
    return %c0_i32, %c0_i32_0 : i32, i32
  }
  func.func @transform_12(%arg0: i32) -> (i32, i32) {
    %c0_i32 = arith.constant 0 : i32
    %c0_i32_0 = arith.constant 0 : i32
    %c0_i32_1 = arith.constant 0 : i32
    return %c0_i32, %c0_i32_0 : i32, i32
  }
  func.func @transform_13(%arg0: i32) -> (i32, i32) {
    %c0_i32 = arith.constant 0 : i32
    %c0_i32_0 = arith.constant 0 : i32
    %c0_i32_1 = arith.constant 0 : i32
    return %c0_i32, %c0_i32_0 : i32, i32
  }
  func.func @transform_14(%arg0: i32) -> (i32, i32, i32) {
    %c0_i32 = arith.constant 0 : i32
    %c0_i32_0 = arith.constant 0 : i32
    %c0_i32_1 = arith.constant 0 : i32
    return %arg0, %c0_i32, %c0_i32_0 : i32, i32, i32
  }
}

</mosaic_0001>

<llo_original>
// kernel: tpu_custom_call.1
$region0: #{tpu_custom_call.1}
  #allocation0 [shape = 'u32[]', space=smem, size = 0x4, offset = 0x4, fixed_abs, tag = 'smem constant byte address 0x4 - core index']
  #allocation1 [shape = 'u32[144,128]{1,0:T(1,128)}', space=vmem, size = 0x12000, scoped, tag = 'internal scratch']
  %s0 = inlined_call_operand.hbm [shape: f32[16,128], index: 0, kind: input, shape index: {}]
  %s1 = inlined_call_operand.hbm [shape: f32[8,128], index: 1, kind: input, shape index: {}]
  %s2 = inlined_call_operand.hbm [shape: f32[2,8,128], index: 2, kind: input, shape index: {}]
  %s3 = inlined_call_operand.hbm [shape: f32[16,128], index: 3, kind: output, shape index: {}]
  %s4 = sld [smem:[#allocation0]]
  $region57: #{tpu_custom_call.1} parent=0
    _
  %s6 = ssub.s32 1, %s4
  %s7 = scalar_select 0, %s6, %s4
  $region1: #{tpu_custom_call.1} parent=0
    #allocation2 [shape = 'u8[8192]{0}', space=vmem, size = 0x2000, scoped, tag = 'input window, operand 0']
    #allocation3 [shape = 's32[2]{0}', space=sflag, size = 0x8, scoped, tag = 'scoped memory for tpu_custom_call.1']
    #allocation4 [shape = 's32[2]{0}', space=sflag, size = 0x8, scoped, tag = 'scoped memory for tpu_custom_call.1']
    #allocation5 [shape = 'u8[4096]{0}', space=vmem, size = 0x1000, scoped, tag = 'input window, operand 1, single buffered']
    #allocation6 [shape = 's32[1]{0}', space=sflag, size = 0x4, scoped, tag = 'scoped memory for tpu_custom_call.1']
    #allocation7 [shape = 'u8[8192]{0}', space=vmem, size = 0x2000, scoped, tag = 'input window, operand 2, single buffered']
    #allocation8 [shape = 'u8[8192]{0}', space=vmem, size = 0x2000, scoped, tag = 'output window, operand 0']
    %8 = vsyncpa [#allocation3], 0
    %s9 = scalar_lea.sflag [#allocation3], 1
    %10 = vsyncpa %s9, 0
    %11 = vsyncpa [#allocation6], 0
    %12 = vsyncpa [#allocation4], 0
    %s13 = scalar_lea.sflag [#allocation4], 1
    %14 = vsyncpa %s13, 0
    loop: start=0, step=1, limit=4
    $region2: #{tpu_custom_call.1} parent=1 // loop_pre_header
      _
    $region3: #{tpu_custom_call.1} parent=1 // loop_header
      %s16 = sphi 0, %s20
      %p17 = scmp.ge.s32.totalorder %s16, 4
      %s26 = sphi 0, %s28
      %s29 = sphi 0, %s26
      %s30 = sphi 0, %s29
      %s46 = sphi 0, %s30
      %s50 = sphi 0, %s50
      %s52 = sphi 0, %s50
      %s53 = sphi 0, %s52
      %s67 = sphi 0, %s53
      %s71 = sphi 0, %s71
      %s73 = sphi 0, %s71
      %s74 = sphi 0, %s73
      %s88 = sphi 0, %s74
      %s94 = sphi 0, %s96
      %s97 = sphi 0, %s94
      %s98 = sphi 0, %s97
      %s114 = sphi 0, %s98
    $region4: #{tpu_custom_call.1} parent=1 // loop_header_branch
      %19 = sbr.rel (%p17) target = $region8
    $region5: #{tpu_custom_call.1} parent=1 // loop_body
      %s21 = ssub.s32 %s16, 1
      %s22 = ssub.s32 %s16, 2
      %s23 = sadd.s32 %s16, 1
      %s24 = ssub.s32 %s16, %s23
      %p25 = scmp.eq.s32.totalorder %s24, 0
      %s27 = sadd.s32 %s26, 1
      %s28 = scalar_select %p25, %s26, %s27
      %p31 = pneg %p25
      %p32 = scmp.eq.s32.totalorder %s16, 1
      %p33 = por %p31, %p32
      %p34 = scmp.ne.s32.totalorder %s26, %s29
      %p35 = scmp.eq.s32.totalorder %s16, 0
      %p36 = por %p34, %p35
      %p37 = scmp.ne.s32.totalorder %s26, %s29
      %p38 = scmp.eq.s32.totalorder %s21, 1
      %p39 = por %p37, %p38
      %p40 = scmp.ne.s32.totalorder %s29, %s30
      %p41 = scmp.eq.s32.totalorder %s21, 0
      %p42 = por %p40, %p41
      %p43 = scmp.ne.s32.totalorder %s29, %s30
      %p44 = scmp.eq.s32.totalorder %s22, 1
      %p45 = por %p43, %p44
      %p47 = scmp.ne.s32.totalorder %s30, %s46
      %p48 = scmp.eq.s32.totalorder %s22, 0
      %p49 = por %p47, %p48
      %s51 = sadd.s32 %s50, 1
      %p54 = scmp.eq.s32.totalorder %s16, 1
      %p55 = scmp.ne.s32.totalorder %s50, %s52
      %p56 = scmp.eq.s32.totalorder %s16, 0
      %p57 = por %p55, %p56
      %p58 = scmp.ne.s32.totalorder %s50, %s52
      %p59 = scmp.eq.s32.totalorder %s21, 1
      %p60 = por %p58, %p59
      %p61 = scmp.ne.s32.totalorder %s52, %s53
      %p62 = scmp.eq.s32.totalorder %s21, 0
      %p63 = por %p61, %p62
      %p64 = scmp.ne.s32.totalorder %s52, %s53
      %p65 = scmp.eq.s32.totalorder %s22, 1
      %p66 = por %p64, %p65
      %p68 = scmp.ne.s32.totalorder %s53, %s67
      %p69 = scmp.eq.s32.totalorder %s22, 0
      %p70 = por %p68, %p69
      %s72 = sadd.s32 %s71, 1
      %p75 = scmp.eq.s32.totalorder %s16, 1
      %p76 = scmp.ne.s32.totalorder %s71, %s73
      %p77 = scmp.eq.s32.totalorder %s16, 0
      %p78 = por %p76, %p77
      %p79 = scmp.ne.s32.totalorder %s71, %s73
      %p80 = scmp.eq.s32.totalorder %s21, 1
      %p81 = por %p79, %p80
      %p82 = scmp.ne.s32.totalorder %s73, %s74
      %p83 = scmp.eq.s32.totalorder %s21, 0
      %p84 = por %p82, %p83
      %p85 = scmp.ne.s32.totalorder %s73, %s74
      %p86 = scmp.eq.s32.totalorder %s22, 1
      %p87 = por %p85, %p86
      %p89 = scmp.ne.s32.totalorder %s74, %s88
      %p90 = scmp.eq.s32.totalorder %s22, 0
      %p91 = por %p89, %p90
      %s92 = ssub.s32 %s16, %s23
      %p93 = scmp.eq.s32.totalorder %s92, 0
      %s95 = sadd.s32 %s94, 1
      %s96 = scalar_select %p93, %s94, %s95
      %p99 = pneg %p93
      %p100 = scmp.eq.s32.totalorder %s16, 1
      %p101 = por %p99, %p100
      %p102 = scmp.ne.s32.totalorder %s94, %s97
      %p103 = scmp.eq.s32.totalorder %s16, 0
      %p104 = por %p102, %p103
      %p105 = scmp.ne.s32.totalorder %s94, %s97
      %p106 = scmp.eq.s32.totalorder %s21, 1
      %p107 = por %p105, %p106
      %p108 = scmp.ne.s32.totalorder %s97, %s98
      %p109 = scmp.eq.s32.totalorder %s21, 0
      %p110 = por %p108, %p109
      %p111 = scmp.ne.s32.totalorder %s97, %s98
      %p112 = scmp.eq.s32.totalorder %s22, 1
      %p113 = por %p111, %p112
      %p115 = scmp.ne.s32.totalorder %s98, %s114
      %p116 = scmp.eq.s32.totalorder %s22, 0
      %p117 = por %p115, %p116
      %p118 = scmp.le.s32.totalorder 1, %s16
      %p119 = scmp.lt.s32.totalorder %s16, 3
      %p120 = pnand %p118, %p119
      %p121 = pneg %p120
      // Predicated region
      $region9: #{tpu_custom_call.1} parent=5 // pred_check
        _
      $region10: #{tpu_custom_call.1} parent=5 // pred_check_branch
        %123 = sbr.rel (%p120) target = $region12
      $region11: #{tpu_custom_call.1} parent=5 // pred_region
        %s124 = ssub.s32 %s16, 1
        // Predicated region
        $region13: #{tpu_custom_call.1} parent=11 // pred_check
          %p125 = pneg %p63
        $region14: #{tpu_custom_call.1} parent=11 // pred_check_branch
          %127 = sbr.rel (%p125) target = $region16
        $region15: #{tpu_custom_call.1} parent=11 // pred_region
          %s129 = ssub.s32 128, 128
          %130 = vsyncadd [#allocation6], %s129
          %s132 = sshll.u32 [#allocation5], 4
          %s133 = int_to_ptr.vmem [resolvable:$true] %s132
          %135 = dma.hbm_to_vmem [thread:$0]  %s1, 128, %s133, [#allocation6]
        $region16: #{tpu_custom_call.1} parent=11 // pred_fallthru
          _
        // Predicated region
        $region17: #{tpu_custom_call.1} parent=11 // pred_check
          %p136 = pneg %p84
        $region18: #{tpu_custom_call.1} parent=11 // pred_check_branch
          %138 = sbr.rel (%p136) target = $region20
        $region19: #{tpu_custom_call.1} parent=11 // pred_region
          %s140 = ssub.s32 256, 256
          %141 = vsyncadd [#allocation6], %s140
          %s142 = sshll.u32 [#allocation7], 4
          %s143 = int_to_ptr.vmem [resolvable:$true] %s142
          %148 = dma.hbm_to_vmem [thread:$0]  %s2, 256, %s143, [#allocation6], 128, 128, 8
        $region20: #{tpu_custom_call.1} parent=11 // pred_fallthru
          _
      $region12: #{tpu_custom_call.1} parent=5 // pred_fallthru
        _
      %p149 = scmp.lt.s32.totalorder %s16, 2
      // Predicated region
      $region21: #{tpu_custom_call.1} parent=5 // pred_check
        %p150 = pneg %p149
      $region22: #{tpu_custom_call.1} parent=5 // pred_check_branch
        %152 = sbr.rel (%p150) target = $region24
      $region23: #{tpu_custom_call.1} parent=5 // pred_region
        // Predicated region
        $region25: #{tpu_custom_call.1} parent=23 // pred_check
          %p153 = pneg %p36
        $region26: #{tpu_custom_call.1} parent=23 // pred_check_branch
          %155 = sbr.rel (%p153) target = $region28
        $region27: #{tpu_custom_call.1} parent=23 // pred_region
          %s156 = sand.u32 %s26, 1
          %s157 = scalar_lea.sflag [#allocation3], %s156
          %s158 = sand.u32 %s26, 1
          %s159 = smul.addr %s158, 8
          %s160 = scalar_lea.vmem [#allocation2], %s159
          %s162 = ssub.s32 128, 128
          %163 = vsyncadd %s157, %s162
          %s164 = smul.addr %s16, 128
          %s165 = scalar_lea.hbm %s0, %s164
          %s167 = sshll.u32 %s160, 4
          %s168 = int_to_ptr.vmem [resolvable:$true] %s167
          %170 = dma.hbm_to_vmem [thread:$0]  %s165, 128, %s168, %s157
        $region28: #{tpu_custom_call.1} parent=23 // pred_fallthru
          _
      $region24: #{tpu_custom_call.1} parent=5 // pred_fallthru
        _
      %p171 = scmp.le.s32.totalorder 1, %s16
      %p172 = scmp.lt.s32.totalorder %s16, 3
      %p173 = pnand %p171, %p172
      %p174 = pneg %p173
      // Predicated region
      $region29: #{tpu_custom_call.1} parent=5 // pred_check
        _
      $region30: #{tpu_custom_call.1} parent=5 // pred_check_branch
        %176 = sbr.rel (%p173) target = $region32
      $region31: #{tpu_custom_call.1} parent=5 // pred_region
        %s177 = ssub.s32 %s16, 1
        %s178 = sand.u32 %s29, 1
        %s179 = scalar_lea.sflag [#allocation3], %s178
        %s180 = sand.u32 %s29, 1
        %s181 = smul.addr %s180, 8
        %s182 = scalar_lea.vmem [#allocation2], %s181
        // Predicated region
        $region33: #{tpu_custom_call.1} parent=31 // pred_check
          %p183 = pneg %p42
        $region34: #{tpu_custom_call.1} parent=31 // pred_check_branch
          %185 = sbr.rel (%p183) target = $region36
        $region35: #{tpu_custom_call.1} parent=31 // pred_region
          %186 = dma.done %s179, 128
        $region36: #{tpu_custom_call.1} parent=31 // pred_fallthru
          _
        // Predicated region
        $region37: #{tpu_custom_call.1} parent=31 // pred_check
          %p187 = pneg %p63
        $region38: #{tpu_custom_call.1} parent=31 // pred_check_branch
          %189 = sbr.rel (%p187) target = $region40
        $region39: #{tpu_custom_call.1} parent=31 // pred_region
          %190 = dma.done [#allocation6], 128
        $region40: #{tpu_custom_call.1} parent=31 // pred_fallthru
          _
        // Predicated region
        $region41: #{tpu_custom_call.1} parent=31 // pred_check
          %p191 = pneg %p84
        $region42: #{tpu_custom_call.1} parent=31 // pred_check_branch
          %193 = sbr.rel (%p191) target = $region44
        $region43: #{tpu_custom_call.1} parent=31 // pred_region
          %194 = dma.done [#allocation6], 256
        $region44: #{tpu_custom_call.1} parent=31 // pred_fallthru
          _
        %s195 = sand.u32 %s29, 1
        %s196 = scalar_lea.sflag [#allocation3], %s195
        %s197 = sand.u32 %s29, 1
        %s198 = smul.addr %s197, 8
        %s199 = scalar_lea.vmem [#allocation2], %s198
        %p200 = pneg %p42
        %p201 = pneg %p39
        %p202 = pneg %p63
        %p203 = pneg %p60
        %p204 = pneg %p84
        %p205 = pneg %p81
        %p206 = pneg %p110
        %p207 = pneg %p107
        %s208 = sand.u32 %s97, 1
        %s209 = scalar_lea.sflag [#allocation4], %s208
        %s210 = sand.u32 %s97, 1
        %s211 = smul.addr %s210, 8
        %s212 = scalar_lea.vmem [#allocation8], %s211
        %v213 = vld [vmem:[%s182] sm:$0xff]
        %v214 = vld [vmem:[#allocation5] sm:$0xff]
        %v215 = vadd.f32 %v213, %v214
        %v216 = vld [vmem:[#allocation7] sm:$0xff]
        %v217 = vadd.f32 %v215, %v216
        %218 = vst [vmem:[%s212] sm:$0xff] %v217
        %s219 = sand.u32 %s97, 1
        %s220 = scalar_lea.sflag [#allocation4], %s219
        %s221 = sand.u32 %s97, 1
        %s222 = smul.addr %s221, 8
        %s223 = scalar_lea.vmem [#allocation8], %s222
        // Predicated region
        $region45: #{tpu_custom_call.1} parent=31 // pred_check
          %p224 = pneg %p107
        $region46: #{tpu_custom_call.1} parent=31 // pred_check_branch
          %226 = sbr.rel (%p224) target = $region48
        $region47: #{tpu_custom_call.1} parent=31 // pred_region
          %s228 = ssub.s32 128, 128
          %229 = vsyncadd %s220, %s228
          %s230 = smul.addr %s21, 128
          %s231 = scalar_lea.hbm %s3, %s230
          %s233 = sshll.u32 %s223, 4
          %s234 = int_to_ptr.vmem [resolvable:$true] %s233
          %236 = dma.vmem_to_hbm [thread:$0]  %s234, 128, %s231, %s220
        $region48: #{tpu_custom_call.1} parent=31 // pred_fallthru
          _
      $region32: #{tpu_custom_call.1} parent=5 // pred_fallthru
        _
      %p237 = scmp.le.s32.totalorder 2, %s16
      // Predicated region
      $region49: #{tpu_custom_call.1} parent=5 // pred_check
        %p238 = pneg %p237
      $region50: #{tpu_custom_call.1} parent=5 // pred_check_branch
        %240 = sbr.rel (%p238) target = $region52
      $region51: #{tpu_custom_call.1} parent=5 // pred_region
        %s241 = ssub.s32 %s16, 2
        // Predicated region
        $region53: #{tpu_custom_call.1} parent=51 // pred_check
          %p242 = pneg %p113
        $region54: #{tpu_custom_call.1} parent=51 // pred_check_branch
          %244 = sbr.rel (%p242) target = $region56
        $region55: #{tpu_custom_call.1} parent=51 // pred_region
          %s245 = sand.u32 %s98, 1
          %s246 = scalar_lea.sflag [#allocation4], %s245
          %s247 = sand.u32 %s98, 1
          %s248 = smul.addr %s247, 8
          %s249 = scalar_lea.vmem [#allocation8], %s248
          %250 = dma.done %s246, 128
        $region56: #{tpu_custom_call.1} parent=51 // pred_fallthru
          _
      $region52: #{tpu_custom_call.1} parent=5 // pred_fallthru
        _
    $region6: #{tpu_custom_call.1} parent=1 // loop_footer
      %s20 = sadd.s32 1, %s16
    $region7: #{tpu_custom_call.1} parent=1 // loop_footer_branch
      %15 = sbr.rel target = $region3
    $region8: #{tpu_custom_call.1} parent=1 // loop_exit
      _
    %251 = vsyncpa [#allocation3], 1
    %s252 = scalar_lea.sflag [#allocation3], 1
    %253 = vsyncpa %s252, 1
    %254 = vsyncpa [#allocation6], 1
    %255 = vsyncpa [#allocation4], 1
    %s256 = scalar_lea.sflag [#allocation4], 1
    %257 = vsyncpa %s256, 1

// kernel: run.1
$region0: #{run.1}
  #allocation0 [shape = 'u32[]', space=smem, size = 0x4, offset = 0x4, fixed_abs, tag = 'smem constant byte address 0x4 - core index']
  #allocation1 [shape = 'u32[144,128]{1,0:T(1,128)}', space=vmem, size = 0x12000, scoped, tag = 'internal scratch']
  %s0 = inlined_call_operand.vmem [shape: f32[2,8,32], index: 0, kind: input, shape index: {}]
  %s1 = inlined_call_operand.vmem [shape: f32[8,8], index: 1, kind: input, shape index: {}]
  %s2 = inlined_call_operand.vmem [shape: f32[1,32], index: 2, kind: input, shape index: {}]
  %s3 = inlined_call_operand.vmem [shape: f32[1,32], index: 3, kind: input, shape index: {}]
  %s4 = inlined_call_operand.vmem [shape: bf16[12,32,8], index: 4, kind: input, shape index: {}]
  %s5 = inlined_call_operand.vmem [shape: f32[12,1,8], index: 5, kind: input, shape index: {}]
  %s6 = inlined_call_operand.vmem [shape: bf16[4,8,32], index: 6, kind: input, shape index: {}]
  %s7 = inlined_call_operand.vmem [shape: f32[1,32], index: 7, kind: input, shape index: {}]
  %s8 = inlined_call_operand.vmem [shape: f32[1,32], index: 8, kind: input, shape index: {}]
  %s9 = inlined_call_operand.vmem [shape: f32[1,32], index: 9, kind: input, shape index: {}]
  %s10 = inlined_call_operand.vmem [shape: bf16[32,128], index: 10, kind: input, shape index: {}]
  %s11 = inlined_call_operand.vmem [shape: f32[1,128], index: 11, kind: input, shape index: {}]
  %s12 = inlined_call_operand.vmem [shape: bf16[128,32], index: 12, kind: input, shape index: {}]
  %s13 = inlined_call_operand.vmem [shape: f32[1,32], index: 13, kind: input, shape index: {}]
  %s14 = inlined_call_operand.hbm [shape: f32[2,8,32], index: 14, kind: output, shape index: {}]
  %s15 = sld [smem:[#allocation0]]
  $region89: #{run.1} parent=0
    _
  %s17 = ssub.s32 1, %s15
  %s18 = scalar_select 0, %s17, %s15
  $region1: #{run.1} parent=0
    #allocation2 [shape = 'u8[8192]{0}', space=vmem, size = 0x2000, scoped, tag = 'output window, operand 0']
    #allocation3 [shape = 's32[2]{0}', space=sflag, size = 0x8, scoped, tag = 'scoped memory for run.1']
    %19 = vsyncpa [#allocation3], 0
    %s20 = scalar_lea.sflag [#allocation3], 1
    %21 = vsyncpa %s20, 0
    loop: start=0, step=1, limit=4
    $region2: #{run.1} parent=1 // loop_pre_header
      _
    $region3: #{run.1} parent=1 // loop_header
      %s23 = sphi 0, %s27
      %p24 = scmp.ge.s32.totalorder %s23, 4
      %s33 = sphi 0, %s35
      %s36 = sphi 0, %s33
      %s37 = sphi 0, %s36
      %s53 = sphi 0, %s37
      %s57 = sphi 0, %s57
      %s59 = sphi 0, %s57
      %s60 = sphi 0, %s59
      %s74 = sphi 0, %s60
      %s78 = sphi 0, %s78
      %s80 = sphi 0, %s78
      %s81 = sphi 0, %s80
      %s95 = sphi 0, %s81
      %s99 = sphi 0, %s99
      %s101 = sphi 0, %s99
      %s102 = sphi 0, %s101
      %s116 = sphi 0, %s102
      %s120 = sphi 0, %s120
      %s122 = sphi 0, %s120
      %s123 = sphi 0, %s122
      %s137 = sphi 0, %s123
      %s141 = sphi 0, %s141
      %s143 = sphi 0, %s141
      %s144 = sphi 0, %s143
      %s158 = sphi 0, %s144
      %s162 = sphi 0, %s162
      %s164 = sphi 0, %s162
      %s165 = sphi 0, %s164
      %s179 = sphi 0, %s165
      %s183 = sphi 0, %s183
      %s185 = sphi 0, %s183
      %s186 = sphi 0, %s185
      %s200 = sphi 0, %s186
      %s204 = sphi 0, %s204
      %s206 = sphi 0, %s204
      %s207 = sphi 0, %s206
      %s221 = sphi 0, %s207
      %s225 = sphi 0, %s225
      %s227 = sphi 0, %s225
      %s228 = sphi 0, %s227
      %s242 = sphi 0, %s228
      %s246 = sphi 0, %s246
      %s248 = sphi 0, %s246
      %s249 = sphi 0, %s248
      %s263 = sphi 0, %s249
      %s267 = sphi 0, %s267
      %s269 = sphi 0, %s267
      %s270 = sphi 0, %s269
      %s284 = sphi 0, %s270
      %s288 = sphi 0, %s288
      %s290 = sphi 0, %s288
      %s291 = sphi 0, %s290
      %s305 = sphi 0, %s291
      %s309 = sphi 0, %s309
      %s311 = sphi 0, %s309
      %s312 = sphi 0, %s311
      %s326 = sphi 0, %s312
      %s332 = sphi 0, %s334
      %s335 = sphi 0, %s332
      %s336 = sphi 0, %s335
      %s352 = sphi 0, %s336
    $region4: #{run.1} parent=1 // loop_header_branch
      %26 = sbr.rel (%p24) target = $region8
    $region5: #{run.1} parent=1 // loop_body
      %s28 = ssub.s32 %s23, 1
      %s29 = ssub.s32 %s23, 2
      %s30 = sadd.s32 %s23, 1
      %s31 = ssub.s32 %s23, %s30
      %p32 = scmp.eq.s32.totalorder %s31, 0
      %s34 = sadd.s32 %s33, 1
      %s35 = scalar_select %p32, %s33, %s34
      %p38 = pneg %p32
      %p39 = scmp.eq.s32.totalorder %s23, 1
      %p40 = por %p38, %p39
      %p41 = scmp.ne.s32.totalorder %s33, %s36
      %p42 = scmp.eq.s32.totalorder %s23, 0
      %p43 = por %p41, %p42
      %p44 = scmp.ne.s32.totalorder %s33, %s36
      %p45 = scmp.eq.s32.totalorder %s28, 1
      %p46 = por %p44, %p45
      %p47 = scmp.ne.s32.totalorder %s36, %s37
      %p48 = scmp.eq.s32.totalorder %s28, 0
      %p49 = por %p47, %p48
      %p50 = scmp.ne.s32.totalorder %s36, %s37
      %p51 = scmp.eq.s32.totalorder %s29, 1
      %p52 = por %p50, %p51
      %p54 = scmp.ne.s32.totalorder %s37, %s53
      %p55 = scmp.eq.s32.totalorder %s29, 0
      %p56 = por %p54, %p55
      %s58 = sadd.s32 %s57, 1
      %p61 = scmp.eq.s32.totalorder %s23, 1
      %p62 = scmp.ne.s32.totalorder %s57, %s59
      %p63 = scmp.eq.s32.totalorder %s23, 0
      %p64 = por %p62, %p63
      %p65 = scmp.ne.s32.totalorder %s57, %s59
      %p66 = scmp.eq.s32.totalorder %s28, 1
      %p67 = por %p65, %p66
      %p68 = scmp.ne.s32.totalorder %s59, %s60
      %p69 = scmp.eq.s32.totalorder %s28, 0
      %p70 = por %p68, %p69
      %p71 = scmp.ne.s32.totalorder %s59, %s60
      %p72 = scmp.eq.s32.totalorder %s29, 1
      %p73 = por %p71, %p72
      %p75 = scmp.ne.s32.totalorder %s60, %s74
      %p76 = scmp.eq.s32.totalorder %s29, 0
      %p77 = por %p75, %p76
      %s79 = sadd.s32 %s78, 1
      %p82 = scmp.eq.s32.totalorder %s23, 1
      %p83 = scmp.ne.s32.totalorder %s78, %s80
      %p84 = scmp.eq.s32.totalorder %s23, 0
      %p85 = por %p83, %p84
      %p86 = scmp.ne.s32.totalorder %s78, %s80
      %p87 = scmp.eq.s32.totalorder %s28, 1
      %p88 = por %p86, %p87
      %p89 = scmp.ne.s32.totalorder %s80, %s81
      %p90 = scmp.eq.s32.totalorder %s28, 0
      %p91 = por %p89, %p90
      %p92 = scmp.ne.s32.totalorder %s80, %s81
      %p93 = scmp.eq.s32.totalorder %s29, 1
      %p94 = por %p92, %p93
      %p96 = scmp.ne.s32.totalorder %s81, %s95
      %p97 = scmp.eq.s32.totalorder %s29, 0
      %p98 = por %p96, %p97
      %s100 = sadd.s32 %s99, 1
      %p103 = scmp.eq.s32.totalorder %s23, 1
      %p104 = scmp.ne.s32.totalorder %s99, %s101
      %p105 = scmp.eq.s32.totalorder %s23, 0
      %p106 = por %p104, %p105
      %p107 = scmp.ne.s32.totalorder %s99, %s101
      %p108 = scmp.eq.s32.totalorder %s28, 1
      %p109 = por %p107, %p108
      %p110 = scmp.ne.s32.totalorder %s101, %s102
      %p111 = scmp.eq.s32.totalorder %s28, 0
      %p112 = por %p110, %p111
      %p113 = scmp.ne.s32.totalorder %s101, %s102
      %p114 = scmp.eq.s32.totalorder %s29, 1
      %p115 = por %p113, %p114
      %p117 = scmp.ne.s32.totalorder %s102, %s116
      %p118 = scmp.eq.s32.totalorder %s29, 0
      %p119 = por %p117, %p118
      %s121 = sadd.s32 %s120, 1
      %p124 = scmp.eq.s32.totalorder %s23, 1
      %p125 = scmp.ne.s32.totalorder %s120, %s122
      %p126 = scmp.eq.s32.totalorder %s23, 0
      %p127 = por %p125, %p126
      %p128 = scmp.ne.s32.totalorder %s120, %s122
      %p129 = scmp.eq.s32.totalorder %s28, 1
      %p130 = por %p128, %p129
      %p131 = scmp.ne.s32.totalorder %s122, %s123
      %p132 = scmp.eq.s32.totalorder %s28, 0
      %p133 = por %p131, %p132
      %p134 = scmp.ne.s32.totalorder %s122, %s123
      %p135 = scmp.eq.s32.totalorder %s29, 1
      %p136 = por %p134, %p135
      %p138 = scmp.ne.s32.totalorder %s123, %s137
      %p139 = scmp.eq.s32.totalorder %s29, 0
      %p140 = por %p138, %p139
      %s142 = sadd.s32 %s141, 1
      %p145 = scmp.eq.s32.totalorder %s23, 1
      %p146 = scmp.ne.s32.totalorder %s141, %s143
      %p147 = scmp.eq.s32.totalorder %s23, 0
      %p148 = por %p146, %p147
      %p149 = scmp.ne.s32.totalorder %s141, %s143
      %p150 = scmp.eq.s32.totalorder %s28, 1
      %p151 = por %p149, %p150
      %p152 = scmp.ne.s32.totalorder %s143, %s144
      %p153 = scmp.eq.s32.totalorder %s28, 0
      %p154 = por %p152, %p153
      %p155 = scmp.ne.s32.totalorder %s143, %s144
      %p156 = scmp.eq.s32.totalorder %s29, 1
      %p157 = por %p155, %p156
      %p159 = scmp.ne.s32.totalorder %s144, %s158
      %p160 = scmp.eq.s32.totalorder %s29, 0
      %p161 = por %p159, %p160
      %s163 = sadd.s32 %s162, 1
      %p166 = scmp.eq.s32.totalorder %s23, 1
      %p167 = scmp.ne.s32.totalorder %s162, %s164
      %p168 = scmp.eq.s32.totalorder %s23, 0
      %p169 = por %p167, %p168
      %p170 = scmp.ne.s32.totalorder %s162, %s164
      %p171 = scmp.eq.s32.totalorder %s28, 1
      %p172 = por %p170, %p171
      %p173 = scmp.ne.s32.totalorder %s164, %s165
      %p174 = scmp.eq.s32.totalorder %s28, 0
      %p175 = por %p173, %p174
      %p176 = scmp.ne.s32.totalorder %s164, %s165
      %p177 = scmp.eq.s32.totalorder %s29, 1
      %p178 = por %p176, %p177
      %p180 = scmp.ne.s32.totalorder %s165, %s179
      %p181 = scmp.eq.s32.totalorder %s29, 0
      %p182 = por %p180, %p181
      %s184 = sadd.s32 %s183, 1
      %p187 = scmp.eq.s32.totalorder %s23, 1
      %p188 = scmp.ne.s32.totalorder %s183, %s185
      %p189 = scmp.eq.s32.totalorder %s23, 0
      %p190 = por %p188, %p189
      %p191 = scmp.ne.s32.totalorder %s183, %s185
      %p192 = scmp.eq.s32.totalorder %s28, 1
      %p193 = por %p191, %p192
      %p194 = scmp.ne.s32.totalorder %s185, %s186
      %p195 = scmp.eq.s32.totalorder %s28, 0
      %p196 = por %p194, %p195
      %p197 = scmp.ne.s32.totalorder %s185, %s186
      %p198 = scmp.eq.s32.totalorder %s29, 1
      %p199 = por %p197, %p198
      %p201 = scmp.ne.s32.totalorder %s186, %s200
      %p202 = scmp.eq.s32.totalorder %s29, 0
      %p203 = por %p201, %p202
      %s205 = sadd.s32 %s204, 1
      %p208 = scmp.eq.s32.totalorder %s23, 1
      %p209 = scmp.ne.s32.totalorder %s204, %s206
      %p210 = scmp.eq.s32.totalorder %s23, 0
      %p211 = por %p209, %p210
      %p212 = scmp.ne.s32.totalorder %s204, %s206
      %p213 = scmp.eq.s32.totalorder %s28, 1
      %p214 = por %p212, %p213
      %p215 = scmp.ne.s32.totalorder %s206, %s207
      %p216 = scmp.eq.s32.totalorder %s28, 0
      %p217 = por %p215, %p216
      %p218 = scmp.ne.s32.totalorder %s206, %s207
      %p219 = scmp.eq.s32.totalorder %s29, 1
      %p220 = por %p218, %p219
      %p222 = scmp.ne.s32.totalorder %s207, %s221
      %p223 = scmp.eq.s32.totalorder %s29, 0
      %p224 = por %p222, %p223
      %s226 = sadd.s32 %s225, 1
      %p229 = scmp.eq.s32.totalorder %s23, 1
      %p230 = scmp.ne.s32.totalorder %s225, %s227
      %p231 = scmp.eq.s32.totalorder %s23, 0
      %p232 = por %p230, %p231
      %p233 = scmp.ne.s32.totalorder %s225, %s227
      %p234 = scmp.eq.s32.totalorder %s28, 1
      %p235 = por %p233, %p234
      %p236 = scmp.ne.s32.totalorder %s227, %s228
      %p237 = scmp.eq.s32.totalorder %s28, 0
      %p238 = por %p236, %p237
      %p239 = scmp.ne.s32.totalorder %s227, %s228
      %p240 = scmp.eq.s32.totalorder %s29, 1
      %p241 = por %p239, %p240
      %p243 = scmp.ne.s32.totalorder %s228, %s242
      %p244 = scmp.eq.s32.totalorder %s29, 0
      %p245 = por %p243, %p244
      %s247 = sadd.s32 %s246, 1
      %p250 = scmp.eq.s32.totalorder %s23, 1
      %p251 = scmp.ne.s32.totalorder %s246, %s248
      %p252 = scmp.eq.s32.totalorder %s23, 0
      %p253 = por %p251, %p252
      %p254 = scmp.ne.s32.totalorder %s246, %s248
      %p255 = scmp.eq.s32.totalorder %s28, 1
      %p256 = por %p254, %p255
      %p257 = scmp.ne.s32.totalorder %s248, %s249
      %p258 = scmp.eq.s32.totalorder %s28, 0
      %p259 = por %p257, %p258
      %p260 = scmp.ne.s32.totalorder %s248, %s249
      %p261 = scmp.eq.s32.totalorder %s29, 1
      %p262 = por %p260, %p261
      %p264 = scmp.ne.s32.totalorder %s249, %s263
      %p265 = scmp.eq.s32.totalorder %s29, 0
      %p266 = por %p264, %p265
      %s268 = sadd.s32 %s267, 1
      %p271 = scmp.eq.s32.totalorder %s23, 1
      %p272 = scmp.ne.s32.totalorder %s267, %s269
      %p273 = scmp.eq.s32.totalorder %s23, 0
      %p274 = por %p272, %p273
      %p275 = scmp.ne.s32.totalorder %s267, %s269
      %p276 = scmp.eq.s32.totalorder %s28, 1
      %p277 = por %p275, %p276
      %p278 = scmp.ne.s32.totalorder %s269, %s270
      %p279 = scmp.eq.s32.totalorder %s28, 0
      %p280 = por %p278, %p279
      %p281 = scmp.ne.s32.totalorder %s269, %s270
      %p282 = scmp.eq.s32.totalorder %s29, 1
      %p283 = por %p281, %p282
      %p285 = scmp.ne.s32.totalorder %s270, %s284
      %p286 = scmp.eq.s32.totalorder %s29, 0
      %p287 = por %p285, %p286
      %s289 = sadd.s32 %s288, 1
      %p292 = scmp.eq.s32.totalorder %s23, 1
      %p293 = scmp.ne.s32.totalorder %s288, %s290
      %p294 = scmp.eq.s32.totalorder %s23, 0
      %p295 = por %p293, %p294
      %p296 = scmp.ne.s32.totalorder %s288, %s290
      %p297 = scmp.eq.s32.totalorder %s28, 1
      %p298 = por %p296, %p297
      %p299 = scmp.ne.s32.totalorder %s290, %s291
      %p300 = scmp.eq.s32.totalorder %s28, 0
      %p301 = por %p299, %p300
      %p302 = scmp.ne.s32.totalorder %s290, %s291
      %p303 = scmp.eq.s32.totalorder %s29, 1
      %p304 = por %p302, %p303
      %p306 = scmp.ne.s32.totalorder %s291, %s305
      %p307 = scmp.eq.s32.totalorder %s29, 0
      %p308 = por %p306, %p307
      %s310 = sadd.s32 %s309, 1
      %p313 = scmp.eq.s32.totalorder %s23, 1
      %p314 = scmp.ne.s32.totalorder %s309, %s311
      %p315 = scmp.eq.s32.totalorder %s23, 0
      %p316 = por %p314, %p315
      %p317 = scmp.ne.s32.totalorder %s309, %s311
      %p318 = scmp.eq.s32.totalorder %s28, 1
      %p319 = por %p317, %p318
      %p320 = scmp.ne.s32.totalorder %s311, %s312
      %p321 = scmp.eq.s32.totalorder %s28, 0
      %p322 = por %p320, %p321
      %p323 = scmp.ne.s32.totalorder %s311, %s312
      %p324 = scmp.eq.s32.totalorder %s29, 1
      %p325 = por %p323, %p324
      %p327 = scmp.ne.s32.totalorder %s312, %s326
      %p328 = scmp.eq.s32.totalorder %s29, 0
      %p329 = por %p327, %p328
      %s330 = ssub.s32 %s23, %s30
      %p331 = scmp.eq.s32.totalorder %s330, 0
      %s333 = sadd.s32 %s332, 1
      %s334 = scalar_select %p331, %s332, %s333
      %p337 = pneg %p331
      %p338 = scmp.eq.s32.totalorder %s23, 1
      %p339 = por %p337, %p338
      %p340 = scmp.ne.s32.totalorder %s332, %s335
      %p341 = scmp.eq.s32.totalorder %s23, 0
      %p342 = por %p340, %p341
      %p343 = scmp.ne.s32.totalorder %s332, %s335
      %p344 = scmp.eq.s32.totalorder %s28, 1
      %p345 = por %p343, %p344
      %p346 = scmp.ne.s32.totalorder %s335, %s336
      %p347 = scmp.eq.s32.totalorder %s28, 0
      %p348 = por %p346, %p347
      %p349 = scmp.ne.s32.totalorder %s335, %s336
      %p350 = scmp.eq.s32.totalorder %s29, 1
      %p351 = por %p349, %p350
      %p353 = scmp.ne.s32.totalorder %s336, %s352
      %p354 = scmp.eq.s32.totalorder %s29, 0
      %p355 = por %p353, %p354
      %p356 = scmp.le.s32.totalorder 1, %s23
      %p357 = scmp.lt.s32.totalorder %s23, 3
      %p358 = pnand %p356, %p357
      %p359 = pneg %p358
      // Predicated region
      $region9: #{run.1} parent=5 // pred_check
        _
      $region10: #{run.1} parent=5 // pred_check_branch
        %361 = sbr.rel (%p358) target = $region12
      $region11: #{run.1} parent=5 // pred_region
        %s362 = ssub.s32 %s23, 1
        // Predicated region
        $region13: #{run.1} parent=11 // pred_check
          %p363 = pneg %p70
        $region14: #{run.1} parent=11 // pred_check_branch
          %365 = sbr.rel (%p363) target = $region16
        $region15: #{run.1} parent=11 // pred_region
          _
        $region16: #{run.1} parent=11 // pred_fallthru
          _
        // Predicated region
        $region17: #{run.1} parent=11 // pred_check
          %p366 = pneg %p91
        $region18: #{run.1} parent=11 // pred_check_branch
          %368 = sbr.rel (%p366) target = $region20
        $region19: #{run.1} parent=11 // pred_region
          _
        $region20: #{run.1} parent=11 // pred_fallthru
          _
        // Predicated region
        $region21: #{run.1} parent=11 // pred_check
          %p369 = pneg %p112
        $region22: #{run.1} parent=11 // pred_check_branch
          %371 = sbr.rel (%p369) target = $region24
        $region23: #{run.1} parent=11 // pred_region
          _
        $region24: #{run.1} parent=11 // pred_fallthru
          _
        // Predicated region
        $region25: #{run.1} parent=11 // pred_check
          %p372 = pneg %p133
        $region26: #{run.1} parent=11 // pred_check_branch
          %374 = sbr.rel (%p372) target = $region28
        $region27: #{run.1} parent=11 // pred_region
          _
        $region28: #{run.1} parent=11 // pred_fallthru
          _
        // Predicated region
        $region29: #{run.1} parent=11 // pred_check
          %p375 = pneg %p154
        $region30: #{run.1} parent=11 // pred_check_branch
          %377 = sbr.rel (%p375) target = $region32
        $region31: #{run.1} parent=11 // pred_region
          _
        $region32: #{run.1} parent=11 // pred_fallthru
          _
        // Predicated region
        $region33: #{run.1} parent=11 // pred_check
          %p378 = pneg %p175
        $region34: #{run.1} parent=11 // pred_check_branch
          %380 = sbr.rel (%p378) target = $region36
        $region35: #{run.1} parent=11 // pred_region
          _
        $region36: #{run.1} parent=11 // pred_fallthru
          _
        // Predicated region
        $region37: #{run.1} parent=11 // pred_check
          %p381 = pneg %p196
        $region38: #{run.1} parent=11 // pred_check_branch
          %383 = sbr.rel (%p381) target = $region40
        $region39: #{run.1} parent=11 // pred_region
          _
        $region40: #{run.1} parent=11 // pred_fallthru
          _
        // Predicated region
        $region41: #{run.1} parent=11 // pred_check
          %p384 = pneg %p217
        $region42: #{run.1} parent=11 // pred_check_branch
          %386 = sbr.rel (%p384) target = $region44
        $region43: #{run.1} parent=11 // pred_region
          _
        $region44: #{run.1} parent=11 // pred_fallthru
          _
        // Predicated region
        $region45: #{run.1} parent=11 // pred_check
          %p387 = pneg %p238
        $region46: #{run.1} parent=11 // pred_check_branch
          %389 = sbr.rel (%p387) target = $region48
        $region47: #{run.1} parent=11 // pred_region
          _
        $region48: #{run.1} parent=11 // pred_fallthru
          _
        // Predicated region
        $region49: #{run.1} parent=11 // pred_check
          %p390 = pneg %p259
        $region50: #{run.1} parent=11 // pred_check_branch
          %392 = sbr.rel (%p390) target = $region52
        $region51: #{run.1} parent=11 // pred_region
          _
        $region52: #{run.1} parent=11 // pred_fallthru
          _
        // Predicated region
        $region53: #{run.1} parent=11 // pred_check
          %p393 = pneg %p280
        $region54: #{run.1} parent=11 // pred_check_branch
          %395 = sbr.rel (%p393) target = $region56
        $region55: #{run.1} parent=11 // pred_region
          _
        $region56: #{run.1} parent=11 // pred_fallthru
          _
        // Predicated region
        $region57: #{run.1} parent=11 // pred_check
          %p396 = pneg %p301
        $region58: #{run.1} parent=11 // pred_check_branch
          %398 = sbr.rel (%p396) target = $region60
        $region59: #{run.1} parent=11 // pred_region
          _
        $region60: #{run.1} parent=11 // pred_fallthru
          _
        // Predicated region
        $region61: #{run.1} parent=11 // pred_check
          %p399 = pneg %p322
        $region62: #{run.1} parent=11 // pred_check_branch
          %401 = sbr.rel (%p399) target = $region64
        $region63: #{run.1} parent=11 // pred_region
          _
        $region64: #{run.1} parent=11 // pred_fallthru
          _
      $region12: #{run.1} parent=5 // pred_fallthru
        _
      %p402 = scmp.lt.s32.totalorder %s23, 2
      // Predicated region
      $region65: #{run.1} parent=5 // pred_check
        %p403 = pneg %p402
      $region66: #{run.1} parent=5 // pred_check_branch
        %405 = sbr.rel (%p403) target = $region68
      $region67: #{run.1} parent=5 // pred_region
        // Predicated region
        $region69: #{run.1} parent=67 // pred_check
          %p406 = pneg %p43
        $region70: #{run.1} parent=67 // pred_check_branch
          %408 = sbr.rel (%p406) target = $region72
        $region71: #{run.1} parent=67 // pred_region
          %p409 = scmp.lt.s32.totalorder %s23, 1
          %s410 = scalar_select %p409, %s23, 1
          %s411 = smul.addr %s410, 8
          %s412 = scalar_lea.vmem %s0, %s411
        $region72: #{run.1} parent=67 // pred_fallthru
          _
      $region68: #{run.1} parent=5 // pred_fallthru
        _
      %p413 = scmp.le.s32.totalorder 1, %s23
      %p414 = scmp.lt.s32.totalorder %s23, 3
      %p415 = pnand %p413, %p414
      %p416 = pneg %p415
      // Predicated region
      $region73: #{run.1} parent=5 // pred_check
        _
      $region74: #{run.1} parent=5 // pred_check_branch
        %418 = sbr.rel (%p415) target = $region76
      $region75: #{run.1} parent=5 // pred_region
        %s419 = ssub.s32 %s23, 1
        %p420 = scmp.lt.s32.totalorder %s28, 1
        %s421 = scalar_select %p420, %s28, 1
        %s422 = smul.addr %s421, 8
        %s423 = scalar_lea.vmem %s0, %s422
        %p424 = pneg %p49
        %p425 = pneg %p46
        %p426 = pneg %p70
        %p427 = pneg %p67
        %p428 = pneg %p91
        %p429 = pneg %p88
        %p430 = pneg %p112
        %p431 = pneg %p109
        %p432 = pneg %p133
        %p433 = pneg %p130
        %p434 = pneg %p154
        %p435 = pneg %p151
        %p436 = pneg %p175
        %p437 = pneg %p172
        %p438 = pneg %p196
        %p439 = pneg %p193
        %p440 = pneg %p217
        %p441 = pneg %p214
        %p442 = pneg %p238
        %p443 = pneg %p235
        %p444 = pneg %p259
        %p445 = pneg %p256
        %p446 = pneg %p280
        %p447 = pneg %p277
        %p448 = pneg %p301
        %p449 = pneg %p298
        %p450 = pneg %p322
        %p451 = pneg %p319
        %p452 = pneg %p348
        %p453 = pneg %p345
        %s454 = sand.u32 %s335, 1
        %s455 = scalar_lea.sflag [#allocation3], %s454
        %s456 = sand.u32 %s335, 1
        %s457 = smul.addr %s456, 8
        %s458 = scalar_lea.vmem [#allocation2], %s457
        %p459 = scmp.lt.s32.totalorder %s28, 1
        %s460 = scalar_select %p459, %s28, 1
        %s461 = smul.addr %s460, 8
        %s462 = scalar_lea.vmem %s0, %s461
        %v464 = vld [vmem:[%s462] sm:$0xff]
        %v465 = vld [vmem:[%s2] sm:$0x1]
        %v466 = vld [vmem:[%s3] sm:$0x1]
        %vm467 = vcmask 261120
        %v468 = vsel %vm467, %v464, 0.0
        %469 = vadd.xlane.f32.xlu0 %v468
        %v470 = vpop.xlane.xlu0 %469
        %v471 = vrcp.pop 32.0
        %v472 = vmul.f32 %v470, %v471
        %v473 = vsub.f32 %v464, %v472
        %v474 = vmul.f32 %v473, %v473
        %v475 = vsel %vm467, %v474, 0.0
        %476 = vadd.xlane.f32.xlu0 %v475
        %v477 = vpop.xlane.xlu0 %476
        %v478 = vmul.f32 %v477, %v471
        %v479 = vadd.f32 %v478, 1e-05
        %v480 = vrsqrt.pop %v479
        %v481 = vmul.f32 %v473, %v480
        %v483 = vlaneseq
        %v484 = vshrl.u32 %v483, 7
        %v485 = vsub.s32 0, %v484
        %v486 = vrot.slane %v465, %v485
        %v488 = vmul.f32 %v481, %v486
        %v490 = vlaneseq
        %v491 = vshrl.u32 %v490, 7
        %v492 = vsub.s32 0, %v491
        %v493 = vrot.slane %v466, %v492
        %v495 = vadd.f32 %v488, %v493
        %v496 = vpack.c.bf16 %v495, %v495
        %v497 = vld [vmem:[%s5] sm:$0x1]
        %v498 = vld [vmem:[%s5 + $0x1] sm:$0x1]
        %v499 = vld [vmem:[%s5 + $0x2] sm:$0x1]
        %v500 = vld [vmem:[%s5 + $0x3] sm:$0x1]
        %v501 = vld [vmem:[%s5 + $0x4] sm:$0x1]
        %v502 = vld [vmem:[%s5 + $0x5] sm:$0x1]
        %v503 = vld [vmem:[%s5 + $0x6] sm:$0x1]
        %v504 = vld [vmem:[%s5 + $0x7] sm:$0x1]
        %v505 = vld [vmem:[%s5 + $0x8] sm:$0x1]
        %v506 = vld [vmem:[%s5 + $0x9] sm:$0x1]
        %v507 = vld [vmem:[%s5 + $0xa] sm:$0x1]
        %v508 = vld [vmem:[%s5 + $0xb] sm:$0x1]
        %v509 = vld [vmem:[%s4] sm:$0xf]
        %v510 = vld [vmem:[%s4 + $0x4] sm:$0xf]
        %v511 = vld [vmem:[%s4 + $0x8] sm:$0xf]
        %v512 = vld [vmem:[%s4 + $0xc] sm:$0xf]
        %v517 = vunpack.c.l.b16 %v509
        %v518 = vunpack.c.l.b16 %v510
        %v519 = vunpack.c.l.b16 %v511
        %v520 = vunpack.c.l.b16 %v512
        %v521 = vpack.c.b16 %v518, %v517
        %v522 = vpack.c.b16 %v520, %v519
        %v526 = vsel %vm467, %v496, 0
        %528 = vmatprep.subr.bf16.mxu0 0
        %529 = vmatpush1.bf16.msra.mxu0 %v521
        %530 = vmatprep.subr.bf16.mxu0 0
        %531 = vmatpush1.bf16.msra.mxu0 %v522
        %532 = vmatprep.subr.bf16.mxu0 0
        %533 = vmatpush1.bf16.msra.mxu0 0
        %534 = vmatprep.subr.bf16.mxu0 0
        %535 = vmatpush1.bf16.msra.mxu0 0
        %536 = vmatprep.subr.bf16.mxu0 0
        %537 = vmatpush1.bf16.msra.mxu0 0
        %538 = vmatprep.subr.bf16.mxu0 0
        %539 = vmatpush1.bf16.msra.mxu0 0
        %540 = vmatprep.subr.bf16.mxu0 0
        %541 = vmatpush1.bf16.msra.mxu0 0
        %542 = vmatprep.subr.bf16.mxu0 0
        %543 = vmatpush1.bf16.msra.mxu0 0
        %544 = vmatprep.subr.bf16.mxu0 0
        %545 = vmatpush1.bf16.msra.mxu0 0
        %546 = vmatprep.subr.bf16.mxu0 0
        %547 = vmatpush1.bf16.msra.mxu0 0
        %548 = vmatprep.subr.bf16.mxu0 0
        %549 = vmatpush1.bf16.msra.mxu0 0
        %550 = vmatprep.subr.bf16.mxu0 0
        %551 = vmatpush1.bf16.msra.mxu0 0
        %552 = vmatprep.subr.bf16.mxu0 0
        %553 = vmatpush1.bf16.msra.mxu0 0
        %554 = vmatprep.subr.bf16.mxu0 0
        %555 = vmatpush1.bf16.msra.mxu0 0
        %556 = vmatprep.subr.bf16.mxu0 0
        %557 = vmatpush1.bf16.msra.mxu0 0
        %558 = vmatprep.subr.bf16.mxu0 0
        %559 = vmatpush1.bf16.msra.mxu0 0
        %560 = vmatprep.mubr.bf16.mxu0 0
        %561 = vmatmul.mubr.bf16.gmra.mrb[0].mxu0 %v526
        %v562 = vpop.f32.mrb[0].mxu0
        %v563 = vadd.f32 0.0, %v562
        %v564 = vpop.f32.mrb[0].mxu0
        %v565 = vpop.f32.mrb[0].mxu0
        %v566 = vpop.f32.mrb[0].mxu0
        %567 = vdwg.mxu0
        %s568 = scalar_lea.vmem %s4, 16
        %v569 = vld [vmem:[%s568] sm:$0xf]
        %v570 = vld [vmem:[%s568 + $0x4] sm:$0xf]
        %v571 = vld [vmem:[%s568 + $0x8] sm:$0xf]
        %v572 = vld [vmem:[%s568 + $0xc] sm:$0xf]
        %v577 = vunpack.c.l.b16 %v569
        %v578 = vunpack.c.l.b16 %v570
        %v579 = vunpack.c.l.b16 %v571
        %v580 = vunpack.c.l.b16 %v572
        %v581 = vpack.c.b16 %v578, %v577
        %v582 = vpack.c.b16 %v580, %v579
        %585 = vmatprep.subr.bf16.mxu0 0
        %586 = vmatpush1.bf16.msra.mxu0 %v581
        %587 = vmatprep.subr.bf16.mxu0 0
        %588 = vmatpush1.bf16.msra.mxu0 %v582
        %589 = vmatprep.subr.bf16.mxu0 0
        %590 = vmatpush1.bf16.msra.mxu0 0
        %591 = vmatprep.subr.bf16.mxu0 0
        %592 = vmatpush1.bf16.msra.mxu0 0
        %593 = vmatprep.subr.bf16.mxu0 0
        %594 = vmatpush1.bf16.msra.mxu0 0
        %595 = vmatprep.subr.bf16.mxu0 0
        %596 = vmatpush1.bf16.msra.mxu0 0
        %597 = vmatprep.subr.bf16.mxu0 0
        %598 = vmatpush1.bf16.msra.mxu0 0
        %599 = vmatprep.subr.bf16.mxu0 0
        %600 = vmatpush1.bf16.msra.mxu0 0
        %601 = vmatprep.subr.bf16.mxu0 0
        %602 = vmatpush1.bf16.msra.mxu0 0
        %603 = vmatprep.subr.bf16.mxu0 0
        %604 = vmatpush1.bf16.msra.mxu0 0
        %605 = vmatprep.subr.bf16.mxu0 0
        %606 = vmatpush1.bf16.msra.mxu0 0
        %607 = vmatprep.subr.bf16.mxu0 0
        %608 = vmatpush1.bf16.msra.mxu0 0
        %609 = vmatprep.subr.bf16.mxu0 0
        %610 = vmatpush1.bf16.msra.mxu0 0
        %611 = vmatprep.subr.bf16.mxu0 0
        %612 = vmatpush1.bf16.msra.mxu0 0
        %613 = vmatprep.subr.bf16.mxu0 0
        %614 = vmatpush1.bf16.msra.mxu0 0
        %615 = vmatprep.subr.bf16.mxu0 0
        %616 = vmatpush1.bf16.msra.mxu0 0
        %617 = vmatprep.mubr.bf16.mxu0 0
        %618 = vmatmul.mubr.bf16.gmra.mrb[0].mxu0 %v526
        %v619 = vpop.f32.mrb[0].mxu0
        %v620 = vadd.f32 0.0, %v619
        %v621 = vpop.f32.mrb[0].mxu0
        %v622 = vpop.f32.mrb[0].mxu0
        %v623 = vpop.f32.mrb[0].mxu0
        %624 = vdwg.mxu0
        %s625 = scalar_lea.vmem %s4, 32
        %v626 = vld [vmem:[%s625] sm:$0xf]
        %v627 = vld [vmem:[%s625 + $0x4] sm:$0xf]
        %v628 = vld [vmem:[%s625 + $0x8] sm:$0xf]
        %v629 = vld [vmem:[%s625 + $0xc] sm:$0xf]
        %v634 = vunpack.c.l.b16 %v626
        %v635 = vunpack.c.l.b16 %v627
        %v636 = vunpack.c.l.b16 %v628
        %v637 = vunpack.c.l.b16 %v629
        %v638 = vpack.c.b16 %v635, %v634
        %v639 = vpack.c.b16 %v637, %v636
        %642 = vmatprep.subr.bf16.mxu0 0
        %643 = vmatpush1.bf16.msra.mxu0 %v638
        %644 = vmatprep.subr.bf16.mxu0 0
        %645 = vmatpush1.bf16.msra.mxu0 %v639
        %646 = vmatprep.subr.bf16.mxu0 0
        %647 = vmatpush1.bf16.msra.mxu0 0
        %648 = vmatprep.subr.bf16.mxu0 0
        %649 = vmatpush1.bf16.msra.mxu0 0
        %650 = vmatprep.subr.bf16.mxu0 0
        %651 = vmatpush1.bf16.msra.mxu0 0
        %652 = vmatprep.subr.bf16.mxu0 0
        %653 = vmatpush1.bf16.msra.mxu0 0
        %654 = vmatprep.subr.bf16.mxu0 0
        %655 = vmatpush1.bf16.msra.mxu0 0
        %656 = vmatprep.subr.bf16.mxu0 0
        %657 = vmatpush1.bf16.msra.mxu0 0
        %658 = vmatprep.subr.bf16.mxu0 0
        %659 = vmatpush1.bf16.msra.mxu0 0
        %660 = vmatprep.subr.bf16.mxu0 0
        %661 = vmatpush1.bf16.msra.mxu0 0
        %662 = vmatprep.subr.bf16.mxu0 0
        %663 = vmatpush1.bf16.msra.mxu0 0
        %664 = vmatprep.subr.bf16.mxu0 0
        %665 = vmatpush1.bf16.msra.mxu0 0
        %666 = vmatprep.subr.bf16.mxu0 0
        %667 = vmatpush1.bf16.msra.mxu0 0
        %668 = vmatprep.subr.bf16.mxu0 0
        %669 = vmatpush1.bf16.msra.mxu0 0
        %670 = vmatprep.subr.bf16.mxu0 0
        %671 = vmatpush1.bf16.msra.mxu0 0
        %672 = vmatprep.subr.bf16.mxu0 0
        %673 = vmatpush1.bf16.msra.mxu0 0
        %674 = vmatprep.mubr.bf16.mxu0 0
        %675 = vmatmul.mubr.bf16.gmra.mrb[0].mxu0 %v526
        %v676 = vpop.f32.mrb[0].mxu0
        %v677 = vadd.f32 0.0, %v676
        %v678 = vpop.f32.mrb[0].mxu0
        %v679 = vpop.f32.mrb[0].mxu0
        %v680 = vpop.f32.mrb[0].mxu0
        %681 = vdwg.mxu0
        %s682 = scalar_lea.vmem %s4, 48
        %v683 = vld [vmem:[%s682] sm:$0xf]
        %v684 = vld [vmem:[%s682 + $0x4] sm:$0xf]
        %v685 = vld [vmem:[%s682 + $0x8] sm:$0xf]
        %v686 = vld [vmem:[%s682 + $0xc] sm:$0xf]
        %v691 = vunpack.c.l.b16 %v683
        %v692 = vunpack.c.l.b16 %v684
        %v693 = vunpack.c.l.b16 %v685
        %v694 = vunpack.c.l.b16 %v686
        %v695 = vpack.c.b16 %v692, %v691
        %v696 = vpack.c.b16 %v694, %v693
        %699 = vmatprep.subr.bf16.mxu0 0
        %700 = vmatpush1.bf16.msra.mxu0 %v695
        %701 = vmatprep.subr.bf16.mxu0 0
        %702 = vmatpush1.bf16.msra.mxu0 %v696
        %703 = vmatprep.subr.bf16.mxu0 0
        %704 = vmatpush1.bf16.msra.mxu0 0
        %705 = vmatprep.subr.bf16.mxu0 0
        %706 = vmatpush1.bf16.msra.mxu0 0
        %707 = vmatprep.subr.bf16.mxu0 0
        %708 = vmatpush1.bf16.msra.mxu0 0
        %709 = vmatprep.subr.bf16.mxu0 0
        %710 = vmatpush1.bf16.msra.mxu0 0
        %711 = vmatprep.subr.bf16.mxu0 0
        %712 = vmatpush1.bf16.msra.mxu0 0
        %713 = vmatprep.subr.bf16.mxu0 0
        %714 = vmatpush1.bf16.msra.mxu0 0
        %715 = vmatprep.subr.bf16.mxu0 0
        %716 = vmatpush1.bf16.msra.mxu0 0
        %717 = vmatprep.subr.bf16.mxu0 0
        %718 = vmatpush1.bf16.msra.mxu0 0
        %719 = vmatprep.subr.bf16.mxu0 0
        %720 = vmatpush1.bf16.msra.mxu0 0
        %721 = vmatprep.subr.bf16.mxu0 0
        %722 = vmatpush1.bf16.msra.mxu0 0
        %723 = vmatprep.subr.bf16.mxu0 0
        %724 = vmatpush1.bf16.msra.mxu0 0
        %725 = vmatprep.subr.bf16.mxu0 0
        %726 = vmatpush1.bf16.msra.mxu0 0
        %727 = vmatprep.subr.bf16.mxu0 0
        %728 = vmatpush1.bf16.msra.mxu0 0
        %729 = vmatprep.subr.bf16.mxu0 0
        %730 = vmatpush1.bf16.msra.mxu0 0
        %731 = vmatprep.mubr.bf16.mxu0 0
        %732 = vmatmul.mubr.bf16.gmra.mrb[0].mxu0 %v526
        %v733 = vpop.f32.mrb[0].mxu0
        %v734 = vadd.f32 0.0, %v733
        %v735 = vpop.f32.mrb[0].mxu0
        %v736 = vpop.f32.mrb[0].mxu0
        %v737 = vpop.f32.mrb[0].mxu0
        %738 = vdwg.mxu0
        %v743 = vlaneseq
        %v744 = vshrl.u32 %v743, 7
        %v745 = vsub.s32 0, %v744
        %v746 = vrot.slane %v497, %v745
        %v747 = vlaneseq
        %v748 = vshrl.u32 %v747, 7
        %v749 = vsub.s32 0, %v748
        %v750 = vrot.slane %v498, %v749
        %v751 = vlaneseq
        %v752 = vshrl.u32 %v751, 7
        %v753 = vsub.s32 0, %v752
        %v754 = vrot.slane %v499, %v753
        %v755 = vlaneseq
        %v756 = vshrl.u32 %v755, 7
        %v757 = vsub.s32 0, %v756
        %v758 = vrot.slane %v500, %v757
        %v763 = vadd.f32 %v563, %v746
        %v764 = vadd.f32 %v620, %v750
        %v765 = vadd.f32 %v677, %v754
        %v766 = vadd.f32 %v734, %v758
        %s767 = scalar_lea.vmem %s4, 64
        %v768 = vld [vmem:[%s767] sm:$0xf]
        %v769 = vld [vmem:[%s767 + $0x4] sm:$0xf]
        %v770 = vld [vmem:[%s767 + $0x8] sm:$0xf]
        %v771 = vld [vmem:[%s767 + $0xc] sm:$0xf]
        %v776 = vunpack.c.l.b16 %v768
        %v777 = vunpack.c.l.b16 %v769
        %v778 = vunpack.c.l.b16 %v770
        %v779 = vunpack.c.l.b16 %v771
        %v780 = vpack.c.b16 %v777, %v776
        %v781 = vpack.c.b16 %v779, %v778
        %784 = vmatprep.subr.bf16.mxu0 0
        %785 = vmatpush1.bf16.msra.mxu0 %v780
        %786 = vmatprep.subr.bf16.mxu0 0
        %787 = vmatpush1.bf16.msra.mxu0 %v781
        %788 = vmatprep.subr.bf16.mxu0 0
        %789 = vmatpush1.bf16.msra.mxu0 0
        %790 = vmatprep.subr.bf16.mxu0 0
        %791 = vmatpush1.bf16.msra.mxu0 0
        %792 = vmatprep.subr.bf16.mxu0 0
        %793 = vmatpush1.bf16.msra.mxu0 0
        %794 = vmatprep.subr.bf16.mxu0 0
        %795 = vmatpush1.bf16.msra.mxu0 0
        %796 = vmatprep.subr.bf16.mxu0 0
        %797 = vmatpush1.bf16.msra.mxu0 0
        %798 = vmatprep.subr.bf16.mxu0 0
        %799 = vmatpush1.bf16.msra.mxu0 0
        %800 = vmatprep.subr.bf16.mxu0 0
        %801 = vmatpush1.bf16.msra.mxu0 0
        %802 = vmatprep.subr.bf16.mxu0 0
        %803 = vmatpush1.bf16.msra.mxu0 0
        %804 = vmatprep.subr.bf16.mxu0 0
        %805 = vmatpush1.bf16.msra.mxu0 0
        %806 = vmatprep.subr.bf16.mxu0 0
        %807 = vmatpush1.bf16.msra.mxu0 0
        %808 = vmatprep.subr.bf16.mxu0 0
        %809 = vmatpush1.bf16.msra.mxu0 0
        %810 = vmatprep.subr.bf16.mxu0 0
        %811 = vmatpush1.bf16.msra.mxu0 0
        %812 = vmatprep.subr.bf16.mxu0 0
        %813 = vmatpush1.bf16.msra.mxu0 0
        %814 = vmatprep.subr.bf16.mxu0 0
        %815 = vmatpush1.bf16.msra.mxu0 0
        %816 = vmatprep.mubr.bf16.mxu0 0
        %817 = vmatmul.mubr.bf16.gmra.mrb[0].mxu0 %v526
        %v818 = vpop.f32.mrb[0].mxu0
        %v819 = vadd.f32 0.0, %v818
        %v820 = vpop.f32.mrb[0].mxu0
        %v821 = vpop.f32.mrb[0].mxu0
        %v822 = vpop.f32.mrb[0].mxu0
        %823 = vdwg.mxu0
        %s824 = scalar_lea.vmem %s4, 80
        %v825 = vld [vmem:[%s824] sm:$0xf]
        %v826 = vld [vmem:[%s824 + $0x4] sm:$0xf]
        %v827 = vld [vmem:[%s824 + $0x8] sm:$0xf]
        %v828 = vld [vmem:[%s824 + $0xc] sm:$0xf]
        %v833 = vunpack.c.l.b16 %v825
        %v834 = vunpack.c.l.b16 %v826
        %v835 = vunpack.c.l.b16 %v827
        %v836 = vunpack.c.l.b16 %v828
        %v837 = vpack.c.b16 %v834, %v833
        %v838 = vpack.c.b16 %v836, %v835
        %841 = vmatprep.subr.bf16.mxu0 0
        %842 = vmatpush1.bf16.msra.mxu0 %v837
        %843 = vmatprep.subr.bf16.mxu0 0
        %844 = vmatpush1.bf16.msra.mxu0 %v838
        %845 = vmatprep.subr.bf16.mxu0 0
        %846 = vmatpush1.bf16.msra.mxu0 0
        %847 = vmatprep.subr.bf16.mxu0 0
        %848 = vmatpush1.bf16.msra.mxu0 0
        %849 = vmatprep.subr.bf16.mxu0 0
        %850 = vmatpush1.bf16.msra.mxu0 0
        %851 = vmatprep.subr.bf16.mxu0 0
        %852 = vmatpush1.bf16.msra.mxu0 0
        %853 = vmatprep.subr.bf16.mxu0 0
        %854 = vmatpush1.bf16.msra.mxu0 0
        %855 = vmatprep.subr.bf16.mxu0 0
        %856 = vmatpush1.bf16.msra.mxu0 0
        %857 = vmatprep.subr.bf16.mxu0 0
        %858 = vmatpush1.bf16.msra.mxu0 0
        %859 = vmatprep.subr.bf16.mxu0 0
        %860 = vmatpush1.bf16.msra.mxu0 0
        %861 = vmatprep.subr.bf16.mxu0 0
        %862 = vmatpush1.bf16.msra.mxu0 0
        %863 = vmatprep.subr.bf16.mxu0 0
        %864 = vmatpush1.bf16.msra.mxu0 0
        %865 = vmatprep.subr.bf16.mxu0 0
        %866 = vmatpush1.bf16.msra.mxu0 0
        %867 = vmatprep.subr.bf16.mxu0 0
        %868 = vmatpush1.bf16.msra.mxu0 0
        %869 = vmatprep.subr.bf16.mxu0 0
        %870 = vmatpush1.bf16.msra.mxu0 0
        %871 = vmatprep.subr.bf16.mxu0 0
        %872 = vmatpush1.bf16.msra.mxu0 0
        %873 = vmatprep.mubr.bf16.mxu0 0
        %874 = vmatmul.mubr.bf16.gmra.mrb[0].mxu0 %v526
        %v875 = vpop.f32.mrb[0].mxu0
        %v876 = vadd.f32 0.0, %v875
        %v877 = vpop.f32.mrb[0].mxu0
        %v878 = vpop.f32.mrb[0].mxu0
        %v879 = vpop.f32.mrb[0].mxu0
        %880 = vdwg.mxu0
        %s881 = scalar_lea.vmem %s4, 96
        %v882 = vld [vmem:[%s881] sm:$0xf]
        %v883 = vld [vmem:[%s881 + $0x4] sm:$0xf]
        %v884 = vld [vmem:[%s881 + $0x8] sm:$0xf]
        %v885 = vld [vmem:[%s881 + $0xc] sm:$0xf]
        %v890 = vunpack.c.l.b16 %v882
        %v891 = vunpack.c.l.b16 %v883
        %v892 = vunpack.c.l.b16 %v884
        %v893 = vunpack.c.l.b16 %v885
        %v894 = vpack.c.b16 %v891, %v890
        %v895 = vpack.c.b16 %v893, %v892
        %898 = vmatprep.subr.bf16.mxu0 0
        %899 = vmatpush1.bf16.msra.mxu0 %v894
        %900 = vmatprep.subr.bf16.mxu0 0
        %901 = vmatpush1.bf16.msra.mxu0 %v895
        %902 = vmatprep.subr.bf16.mxu0 0
        %903 = vmatpush1.bf16.msra.mxu0 0
        %904 = vmatprep.subr.bf16.mxu0 0
        %905 = vmatpush1.bf16.msra.mxu0 0
        %906 = vmatprep.subr.bf16.mxu0 0
        %907 = vmatpush1.bf16.msra.mxu0 0
        %908 = vmatprep.subr.bf16.mxu0 0
        %909 = vmatpush1.bf16.msra.mxu0 0
        %910 = vmatprep.subr.bf16.mxu0 0
        %911 = vmatpush1.bf16.msra.mxu0 0
        %912 = vmatprep.subr.bf16.mxu0 0
        %913 = vmatpush1.bf16.msra.mxu0 0
        %914 = vmatprep.subr.bf16.mxu0 0
        %915 = vmatpush1.bf16.msra.mxu0 0
        %916 = vmatprep.subr.bf16.mxu0 0
        %917 = vmatpush1.bf16.msra.mxu0 0
        %918 = vmatprep.subr.bf16.mxu0 0
        %919 = vmatpush1.bf16.msra.mxu0 0
        %920 = vmatprep.subr.bf16.mxu0 0
        %921 = vmatpush1.bf16.msra.mxu0 0
        %922 = vmatprep.subr.bf16.mxu0 0
        %923 = vmatpush1.bf16.msra.mxu0 0
        %924 = vmatprep.subr.bf16.mxu0 0
        %925 = vmatpush1.bf16.msra.mxu0 0
        %926 = vmatprep.subr.bf16.mxu0 0
        %927 = vmatpush1.bf16.msra.mxu0 0
        %928 = vmatprep.subr.bf16.mxu0 0
        %929 = vmatpush1.bf16.msra.mxu0 0
        %930 = vmatprep.mubr.bf16.mxu0 0
        %931 = vmatmul.mubr.bf16.gmra.mrb[0].mxu0 %v526
        %v932 = vpop.f32.mrb[0].mxu0
        %v933 = vadd.f32 0.0, %v932
        %v934 = vpop.f32.mrb[0].mxu0
        %v935 = vpop.f32.mrb[0].mxu0
        %v936 = vpop.f32.mrb[0].mxu0
        %937 = vdwg.mxu0
        %s938 = scalar_lea.vmem %s4, 112
        %v939 = vld [vmem:[%s938] sm:$0xf]
        %v940 = vld [vmem:[%s938 + $0x4] sm:$0xf]
        %v941 = vld [vmem:[%s938 + $0x8] sm:$0xf]
        %v942 = vld [vmem:[%s938 + $0xc] sm:$0xf]
        %v947 = vunpack.c.l.b16 %v939
        %v948 = vunpack.c.l.b16 %v940
        %v949 = vunpack.c.l.b16 %v941
        %v950 = vunpack.c.l.b16 %v942
        %v951 = vpack.c.b16 %v948, %v947
        %v952 = vpack.c.b16 %v950, %v949
        %955 = vmatprep.subr.bf16.mxu0 0
        %956 = vmatpush1.bf16.msra.mxu0 %v951
        %957 = vmatprep.subr.bf16.mxu0 0
        %958 = vmatpush1.bf16.msra.mxu0 %v952
        %959 = vmatprep.subr.bf16.mxu0 0
        %960 = vmatpush1.bf16.msra.mxu0 0
        %961 = vmatprep.subr.bf16.mxu0 0
        %962 = vmatpush1.bf16.msra.mxu0 0
        %963 = vmatprep.subr.bf16.mxu0 0
        %964 = vmatpush1.bf16.msra.mxu0 0
        %965 = vmatprep.subr.bf16.mxu0 0
        %966 = vmatpush1.bf16.msra.mxu0 0
        %967 = vmatprep.subr.bf16.mxu0 0
        %968 = vmatpush1.bf16.msra.mxu0 0
        %969 = vmatprep.subr.bf16.mxu0 0
        %970 = vmatpush1.bf16.msra.mxu0 0
        %971 = vmatprep.subr.bf16.mxu0 0
        %972 = vmatpush1.bf16.msra.mxu0 0
        %973 = vmatprep.subr.bf16.mxu0 0
        %974 = vmatpush1.bf16.msra.mxu0 0
        %975 = vmatprep.subr.bf16.mxu0 0
        %976 = vmatpush1.bf16.msra.mxu0 0
        %977 = vmatprep.subr.bf16.mxu0 0
        %978 = vmatpush1.bf16.msra.mxu0 0
        %979 = vmatprep.subr.bf16.mxu0 0
        %980 = vmatpush1.bf16.msra.mxu0 0
        %981 = vmatprep.subr.bf16.mxu0 0
        %982 = vmatpush1.bf16.msra.mxu0 0
        %983 = vmatprep.subr.bf16.mxu0 0
        %984 = vmatpush1.bf16.msra.mxu0 0
        %985 = vmatprep.subr.bf16.mxu0 0
        %986 = vmatpush1.bf16.msra.mxu0 0
        %987 = vmatprep.mubr.bf16.mxu0 0
        %988 = vmatmul.mubr.bf16.gmra.mrb[0].mxu0 %v526
        %v989 = vpop.f32.mrb[0].mxu0
        %v990 = vadd.f32 0.0, %v989
        %v991 = vpop.f32.mrb[0].mxu0
        %v992 = vpop.f32.mrb[0].mxu0
        %v993 = vpop.f32.mrb[0].mxu0
        %994 = vdwg.mxu0
        %v999 = vlaneseq
        %v1000 = vshrl.u32 %v999, 7
        %v1001 = vsub.s32 0, %v1000
        %v1002 = vrot.slane %v501, %v1001
        %v1003 = vlaneseq
        %v1004 = vshrl.u32 %v1003, 7
        %v1005 = vsub.s32 0, %v1004
        %v1006 = vrot.slane %v502, %v1005
        %v1007 = vlaneseq
        %v1008 = vshrl.u32 %v1007, 7
        %v1009 = vsub.s32 0, %v1008
        %v1010 = vrot.slane %v503, %v1009
        %v1011 = vlaneseq
        %v1012 = vshrl.u32 %v1011, 7
        %v1013 = vsub.s32 0, %v1012
        %v1014 = vrot.slane %v504, %v1013
        %v1019 = vadd.f32 %v819, %v1002
        %v1020 = vadd.f32 %v876, %v1006
        %v1021 = vadd.f32 %v933, %v1010
        %v1022 = vadd.f32 %v990, %v1014
        %s1023 = scalar_lea.vmem %s4, 128
        %v1024 = vld [vmem:[%s1023] sm:$0xf]
        %v1025 = vld [vmem:[%s1023 + $0x4] sm:$0xf]
        %v1026 = vld [vmem:[%s1023 + $0x8] sm:$0xf]
        %v1027 = vld [vmem:[%s1023 + $0xc] sm:$0xf]
        %v1032 = vunpack.c.l.b16 %v1024
        %v1033 = vunpack.c.l.b16 %v1025
        %v1034 = vunpack.c.l.b16 %v1026
        %v1035 = vunpack.c.l.b16 %v1027
        %v1036 = vpack.c.b16 %v1033, %v1032
        %v1037 = vpack.c.b16 %v1035, %v1034
        %1040 = vmatprep.subr.bf16.mxu0 0
        %1041 = vmatpush1.bf16.msra.mxu0 %v1036
        %1042 = vmatprep.subr.bf16.mxu0 0
        %1043 = vmatpush1.bf16.msra.mxu0 %v1037
        %1044 = vmatprep.subr.bf16.mxu0 0
        %1045 = vmatpush1.bf16.msra.mxu0 0
        %1046 = vmatprep.subr.bf16.mxu0 0
        %1047 = vmatpush1.bf16.msra.mxu0 0
        %1048 = vmatprep.subr.bf16.mxu0 0
        %1049 = vmatpush1.bf16.msra.mxu0 0
        %1050 = vmatprep.subr.bf16.mxu0 0
        %1051 = vmatpush1.bf16.msra.mxu0 0
        %1052 = vmatprep.subr.bf16.mxu0 0
        %1053 = vmatpush1.bf16.msra.mxu0 0
        %1054 = vmatprep.subr.bf16.mxu0 0
        %1055 = vmatpush1.bf16.msra.mxu0 0
        %1056 = vmatprep.subr.bf16.mxu0 0
        %1057 = vmatpush1.bf16.msra.mxu0 0
        %1058 = vmatprep.subr.bf16.mxu0 0
        %1059 = vmatpush1.bf16.msra.mxu0 0
        %1060 = vmatprep.subr.bf16.mxu0 0
        %1061 = vmatpush1.bf16.msra.mxu0 0
        %1062 = vmatprep.subr.bf16.mxu0 0
        %1063 = vmatpush1.bf16.msra.mxu0 0
        %1064 = vmatprep.subr.bf16.mxu0 0
        %1065 = vmatpush1.bf16.msra.mxu0 0
        %1066 = vmatprep.subr.bf16.mxu0 0
        %1067 = vmatpush1.bf16.msra.mxu0 0
        %1068 = vmatprep.subr.bf16.mxu0 0
        %1069 = vmatpush1.bf16.msra.mxu0 0
        %1070 = vmatprep.subr.bf16.mxu0 0
        %1071 = vmatpush1.bf16.msra.mxu0 0
        %1072 = vmatprep.mubr.bf16.mxu0 0
        %1073 = vmatmul.mubr.bf16.gmra.mrb[0].mxu0 %v526
        %v1074 = vpop.f32.mrb[0].mxu0
        %v1075 = vadd.f32 0.0, %v1074
        %v1076 = vpop.f32.mrb[0].mxu0
        %v1077 = vpop.f32.mrb[0].mxu0
        %v1078 = vpop.f32.mrb[0].mxu0
        %1079 = vdwg.mxu0
        %s1080 = scalar_lea.vmem %s4, 144
        %v1081 = vld [vmem:[%s1080] sm:$0xf]
        %v1082 = vld [vmem:[%s1080 + $0x4] sm:$0xf]
        %v1083 = vld [vmem:[%s1080 + $0x8] sm:$0xf]
        %v1084 = vld [vmem:[%s1080 + $0xc] sm:$0xf]
        %v1089 = vunpack.c.l.b16 %v1081
        %v1090 = vunpack.c.l.b16 %v1082
        %v1091 = vunpack.c.l.b16 %v1083
        %v1092 = vunpack.c.l.b16 %v1084
        %v1093 = vpack.c.b16 %v1090, %v1089
        %v1094 = vpack.c.b16 %v1092, %v1091
        %1097 = vmatprep.subr.bf16.mxu0 0
        %1098 = vmatpush1.bf16.msra.mxu0 %v1093
        %1099 = vmatprep.subr.bf16.mxu0 0
        %1100 = vmatpush1.bf16.msra.mxu0 %v1094
        %1101 = vmatprep.subr.bf16.mxu0 0
        %1102 = vmatpush1.bf16.msra.mxu0 0
        %1103 = vmatprep.subr.bf16.mxu0 0
        %1104 = vmatpush1.bf16.msra.mxu0 0
        %1105 = vmatprep.subr.bf16.mxu0 0
        %1106 = vmatpush1.bf16.msra.mxu0 0
        %1107 = vmatprep.subr.bf16.mxu0 0
        %1108 = vmatpush1.bf16.msra.mxu0 0
        %1109 = vmatprep.subr.bf16.mxu0 0
        %1110 = vmatpush1.bf16.msra.mxu0 0
        %1111 = vmatprep.subr.bf16.mxu0 0
        %1112 = vmatpush1.bf16.msra.mxu0 0
        %1113 = vmatprep.subr.bf16.mxu0 0
        %1114 = vmatpush1.bf16.msra.mxu0 0
        %1115 = vmatprep.subr.bf16.mxu0 0
        %1116 = vmatpush1.bf16.msra.mxu0 0
        %1117 = vmatprep.subr.bf16.mxu0 0
        %1118 = vmatpush1.bf16.msra.mxu0 0
        %1119 = vmatprep.subr.bf16.mxu0 0
        %1120 = vmatpush1.bf16.msra.mxu0 0
        %1121 = vmatprep.subr.bf16.mxu0 0
        %1122 = vmatpush1.bf16.msra.mxu0 0
        %1123 = vmatprep.subr.bf16.mxu0 0
        %1124 = vmatpush1.bf16.msra.mxu0 0
        %1125 = vmatprep.subr.bf16.mxu0 0
        %1126 = vmatpush1.bf16.msra.mxu0 0
        %1127 = vmatprep.subr.bf16.mxu0 0
        %1128 = vmatpush1.bf16.msra.mxu0 0
        %1129 = vmatprep.mubr.bf16.mxu0 0
        %1130 = vmatmul.mubr.bf16.gmra.mrb[0].mxu0 %v526
        %v1131 = vpop.f32.mrb[0].mxu0
        %v1132 = vadd.f32 0.0, %v1131
        %v1133 = vpop.f32.mrb[0].mxu0
        %v1134 = vpop.f32.mrb[0].mxu0
        %v1135 = vpop.f32.mrb[0].mxu0
        %1136 = vdwg.mxu0
        %s1137 = scalar_lea.vmem %s4, 160
        %v1138 = vld [vmem:[%s1137] sm:$0xf]
        %v1139 = vld [vmem:[%s1137 + $0x4] sm:$0xf]
        %v1140 = vld [vmem:[%s1137 + $0x8] sm:$0xf]
        %v1141 = vld [vmem:[%s1137 + $0xc] sm:$0xf]
        %v1146 = vunpack.c.l.b16 %v1138
        %v1147 = vunpack.c.l.b16 %v1139
        %v1148 = vunpack.c.l.b16 %v1140
        %v1149 = vunpack.c.l.b16 %v1141
        %v1150 = vpack.c.b16 %v1147, %v1146
        %v1151 = vpack.c.b16 %v1149, %v1148
        %1154 = vmatprep.subr.bf16.mxu0 0
        %1155 = vmatpush1.bf16.msra.mxu0 %v1150
        %1156 = vmatprep.subr.bf16.mxu0 0
        %1157 = vmatpush1.bf16.msra.mxu0 %v1151
        %1158 = vmatprep.subr.bf16.mxu0 0
        %1159 = vmatpush1.bf16.msra.mxu0 0
        %1160 = vmatprep.subr.bf16.mxu0 0
        %1161 = vmatpush1.bf16.msra.mxu0 0
        %1162 = vmatprep.subr.bf16.mxu0 0
        %1163 = vmatpush1.bf16.msra.mxu0 0
        %1164 = vmatprep.subr.bf16.mxu0 0
        %1165 = vmatpush1.bf16.msra.mxu0 0
        %1166 = vmatprep.subr.bf16.mxu0 0
        %1167 = vmatpush1.bf16.msra.mxu0 0
        %1168 = vmatprep.subr.bf16.mxu0 0
        %1169 = vmatpush1.bf16.msra.mxu0 0
        %1170 = vmatprep.subr.bf16.mxu0 0
        %1171 = vmatpush1.bf16.msra.mxu0 0
        %1172 = vmatprep.subr.bf16.mxu0 0
        %1173 = vmatpush1.bf16.msra.mxu0 0
        %1174 = vmatprep.subr.bf16.mxu0 0
        %1175 = vmatpush1.bf16.msra.mxu0 0
        %1176 = vmatprep.subr.bf16.mxu0 0
        %1177 = vmatpush1.bf16.msra.mxu0 0
        %1178 = vmatprep.subr.bf16.mxu0 0
        %1179 = vmatpush1.bf16.msra.mxu0 0
        %1180 = vmatprep.subr.bf16.mxu0 0
        %1181 = vmatpush1.bf16.msra.mxu0 0
        %1182 = vmatprep.subr.bf16.mxu0 0
        %1183 = vmatpush1.bf16.msra.mxu0 0
        %1184 = vmatprep.subr.bf16.mxu0 0
        %1185 = vmatpush1.bf16.msra.mxu0 0
        %1186 = vmatprep.mubr.bf16.mxu0 0
        %1187 = vmatmul.mubr.bf16.gmra.mrb[0].mxu0 %v526
        %v1188 = vpop.f32.mrb[0].mxu0
        %v1189 = vadd.f32 0.0, %v1188
        %v1190 = vpop.f32.mrb[0].mxu0
        %v1191 = vpop.f32.mrb[0].mxu0
        %v1192 = vpop.f32.mrb[0].mxu0
        %1193 = vdwg.mxu0
        %s1194 = scalar_lea.vmem %s4, 176
        %v1195 = vld [vmem:[%s1194] sm:$0xf]
        %v1196 = vld [vmem:[%s1194 + $0x4] sm:$0xf]
        %v1197 = vld [vmem:[%s1194 + $0x8] sm:$0xf]
        %v1198 = vld [vmem:[%s1194 + $0xc] sm:$0xf]
        %v1203 = vunpack.c.l.b16 %v1195
        %v1204 = vunpack.c.l.b16 %v1196
        %v1205 = vunpack.c.l.b16 %v1197
        %v1206 = vunpack.c.l.b16 %v1198
        %v1207 = vpack.c.b16 %v1204, %v1203
        %v1208 = vpack.c.b16 %v1206, %v1205
        %1211 = vmatprep.subr.bf16.mxu0 0
        %1212 = vmatpush1.bf16.msra.mxu0 %v1207
        %1213 = vmatprep.subr.bf16.mxu0 0
        %1214 = vmatpush1.bf16.msra.mxu0 %v1208
        %1215 = vmatprep.subr.bf16.mxu0 0
        %1216 = vmatpush1.bf16.msra.mxu0 0
        %1217 = vmatprep.subr.bf16.mxu0 0
        %1218 = vmatpush1.bf16.msra.mxu0 0
        %1219 = vmatprep.subr.bf16.mxu0 0
        %1220 = vmatpush1.bf16.msra.mxu0 0
        %1221 = vmatprep.subr.bf16.mxu0 0
        %1222 = vmatpush1.bf16.msra.mxu0 0
        %1223 = vmatprep.subr.bf16.mxu0 0
        %1224 = vmatpush1.bf16.msra.mxu0 0
        %1225 = vmatprep.subr.bf16.mxu0 0
        %1226 = vmatpush1.bf16.msra.mxu0 0
        %1227 = vmatprep.subr.bf16.mxu0 0
        %1228 = vmatpush1.bf16.msra.mxu0 0
        %1229 = vmatprep.subr.bf16.mxu0 0
        %1230 = vmatpush1.bf16.msra.mxu0 0
        %1231 = vmatprep.subr.bf16.mxu0 0
        %1232 = vmatpush1.bf16.msra.mxu0 0
        %1233 = vmatprep.subr.bf16.mxu0 0
        %1234 = vmatpush1.bf16.msra.mxu0 0
        %1235 = vmatprep.subr.bf16.mxu0 0
        %1236 = vmatpush1.bf16.msra.mxu0 0
        %1237 = vmatprep.subr.bf16.mxu0 0
        %1238 = vmatpush1.bf16.msra.mxu0 0
        %1239 = vmatprep.subr.bf16.mxu0 0
        %1240 = vmatpush1.bf16.msra.mxu0 0
        %1241 = vmatprep.subr.bf16.mxu0 0
        %1242 = vmatpush1.bf16.msra.mxu0 0
        %1243 = vmatprep.mubr.bf16.mxu0 0
        %1244 = vmatmul.mubr.bf16.gmra.mrb[0].mxu0 %v526
        %v1245 = vpop.f32.mrb[0].mxu0
        %v1246 = vadd.f32 0.0, %v1245
        %v1247 = vpop.f32.mrb[0].mxu0
        %v1248 = vpop.f32.mrb[0].mxu0
        %v1249 = vpop.f32.mrb[0].mxu0
        %1250 = vdwg.mxu0
        %v1255 = vlaneseq
        %v1256 = vshrl.u32 %v1255, 7
        %v1257 = vsub.s32 0, %v1256
        %v1258 = vrot.slane %v505, %v1257
        %v1259 = vlaneseq
        %v1260 = vshrl.u32 %v1259, 7
        %v1261 = vsub.s32 0, %v1260
        %v1262 = vrot.slane %v506, %v1261
        %v1263 = vlaneseq
        %v1264 = vshrl.u32 %v1263, 7
        %v1265 = vsub.s32 0, %v1264
        %v1266 = vrot.slane %v507, %v1265
        %v1267 = vlaneseq
        %v1268 = vshrl.u32 %v1267, 7
        %v1269 = vsub.s32 0, %v1268
        %v1270 = vrot.slane %v508, %v1269
        %v1275 = vadd.f32 %v1075, %v1258
        %v1276 = vadd.f32 %v1132, %v1262
        %v1277 = vadd.f32 %v1189, %v1266
        %v1278 = vadd.f32 %v1246, %v1270
        %v1279 = vld [vmem:[%s1] sm:$0xff]
        %v1280 = vpack.c.bf16 %v763, %v763
        %v1281 = vpack.c.bf16 %v764, %v764
        %v1282 = vpack.c.bf16 %v765, %v765
        %v1283 = vpack.c.bf16 %v766, %v766
        %v1284 = vpack.c.bf16 %v1019, %v1019
        %v1285 = vpack.c.bf16 %v1020, %v1020
        %v1286 = vpack.c.bf16 %v1021, %v1021
        %v1287 = vpack.c.bf16 %v1022, %v1022
        %v1288 = vpack.c.bf16 %v1275, %v1275
        %v1289 = vpack.c.bf16 %v1276, %v1276
        %v1290 = vpack.c.bf16 %v1277, %v1277
        %v1291 = vpack.c.bf16 %v1278, %v1278
        %vm1292 = vcmask 64512
        %v1294 = vsel %vm1292, %v1280, 0
        %v1297 = vsel %vm1292, %v1284, 0
        %1299 = vmatprep.subr.bf16.mxu0 0
        %1300 = vmatpush1.bf16.xpose.msra.mxu0 %v1297
        %1301 = vmatprep.subr.bf16.mxu0 0
        %1302 = vmatpush1.bf16.xpose.msra.mxu0 0
        %1303 = vmatprep.subr.bf16.mxu0 0
        %1304 = vmatpush1.bf16.xpose.msra.mxu0 0
        %1305 = vmatprep.subr.bf16.mxu0 0
        %1306 = vmatpush1.bf16.xpose.msra.mxu0 0
        %1307 = vmatprep.subr.bf16.mxu0 0
        %1308 = vmatpush1.bf16.xpose.msra.mxu0 0
        %1309 = vmatprep.subr.bf16.mxu0 0
        %1310 = vmatpush1.bf16.xpose.msra.mxu0 0
        %1311 = vmatprep.subr.bf16.mxu0 0
        %1312 = vmatpush1.bf16.xpose.msra.mxu0 0
        %1313 = vmatprep.subr.bf16.mxu0 0
        %1314 = vmatpush1.bf16.xpose.msra.mxu0 0
        %1315 = vmatprep.subr.bf16.mxu0 0
        %1316 = vmatpush1.bf16.xpose.msra.mxu0 0
        %1317 = vmatprep.subr.bf16.mxu0 0
        %1318 = vmatpush1.bf16.xpose.msra.mxu0 0
        %1319 = vmatprep.subr.bf16.mxu0 0
        %1320 = vmatpush1.bf16.xpose.msra.mxu0 0
        %1321 = vmatprep.subr.bf16.mxu0 0
        %1322 = vmatpush1.bf16.xpose.msra.mxu0 0
        %1323 = vmatprep.subr.bf16.mxu0 0
        %1324 = vmatpush1.bf16.xpose.msra.mxu0 0
        %1325 = vmatprep.subr.bf16.mxu0 0
        %1326 = vmatpush1.bf16.xpose.msra.mxu0 0
        %1327 = vmatprep.subr.bf16.mxu0 0
        %1328 = vmatpush1.bf16.xpose.msra.mxu0 0
        %1329 = vmatprep.subr.bf16.mxu0 0
        %1330 = vmatpush1.bf16.xpose.msra.mxu0 0
        %1331 = vmatprep.mubr.bf16.mxu0 0
        %1332 = vmatmul.mubr.bf16.gmra.mrb[0].mxu0 %v1294
        %v1333 = vpop.f32.mrb[0].mxu0
        %v1334 = vadd.f32 %v1279, %v1333
        %v1335 = vpop.f32.mrb[0].mxu0
        %v1336 = vpop.f32.mrb[0].mxu0
        %v1337 = vpop.f32.mrb[0].mxu0
        %1338 = vdwg.mxu0
        %v1340 = vsel %vm1292, %v1281, 0
        %v1343 = vsel %vm1292, %v1285, 0
        %1345 = vmatprep.subr.bf16.mxu0 0
        %1346 = vmatpush1.bf16.xpose.msra.mxu0 %v1343
        %1347 = vmatprep.subr.bf16.mxu0 0
        %1348 = vmatpush1.bf16.xpose.msra.mxu0 0
        %1349 = vmatprep.subr.bf16.mxu0 0
        %1350 = vmatpush1.bf16.xpose.msra.mxu0 0
        %1351 = vmatprep.subr.bf16.mxu0 0
        %1352 = vmatpush1.bf16.xpose.msra.mxu0 0
        %1353 = vmatprep.subr.bf16.mxu0 0
        %1354 = vmatpush1.bf16.xpose.msra.mxu0 0
        %1355 = vmatprep.subr.bf16.mxu0 0
        %1356 = vmatpush1.bf16.xpose.msra.mxu0 0
        %1357 = vmatprep.subr.bf16.mxu0 0
        %1358 = vmatpush1.bf16.xpose.msra.mxu0 0
        %1359 = vmatprep.subr.bf16.mxu0 0
        %1360 = vmatpush1.bf16.xpose.msra.mxu0 0
        %1361 = vmatprep.subr.bf16.mxu0 0
        %1362 = vmatpush1.bf16.xpose.msra.mxu0 0
        %1363 = vmatprep.subr.bf16.mxu0 0
        %1364 = vmatpush1.bf16.xpose.msra.mxu0 0
        %1365 = vmatprep.subr.bf16.mxu0 0
        %1366 = vmatpush1.bf16.xpose.msra.mxu0 0
        %1367 = vmatprep.subr.bf16.mxu0 0
        %1368 = vmatpush1.bf16.xpose.msra.mxu0 0
        %1369 = vmatprep.subr.bf16.mxu0 0
        %1370 = vmatpush1.bf16.xpose.msra.mxu0 0
        %1371 = vmatprep.subr.bf16.mxu0 0
        %1372 = vmatpush1.bf16.xpose.msra.mxu0 0
        %1373 = vmatprep.subr.bf16.mxu0 0
        %1374 = vmatpush1.bf16.xpose.msra.mxu0 0
        %1375 = vmatprep.subr.bf16.mxu0 0
        %1376 = vmatpush1.bf16.xpose.msra.mxu0 0
        %1377 = vmatprep.mubr.bf16.mxu0 0
        %1378 = vmatmul.mubr.bf16.gmra.mrb[0].mxu0 %v1340
        %v1379 = vpop.f32.mrb[0].mxu0
        %v1380 = vadd.f32 %v1279, %v1379
        %v1381 = vpop.f32.mrb[0].mxu0
        %v1382 = vpop.f32.mrb[0].mxu0
        %v1383 = vpop.f32.mrb[0].mxu0
        %1384 = vdwg.mxu0
        %v1386 = vsel %vm1292, %v1282, 0
        %v1389 = vsel %vm1292, %v1286, 0
        %1391 = vmatprep.subr.bf16.mxu0 0
        %1392 = vmatpush1.bf16.xpose.msra.mxu0 %v1389
        %1393 = vmatprep.subr.bf16.mxu0 0
        %1394 = vmatpush1.bf16.xpose.msra.mxu0 0
        %1395 = vmatprep.subr.bf16.mxu0 0
        %1396 = vmatpush1.bf16.xpose.msra.mxu0 0
        %1397 = vmatprep.subr.bf16.mxu0 0
        %1398 = vmatpush1.bf16.xpose.msra.mxu0 0
        %1399 = vmatprep.subr.bf16.mxu0 0
        %1400 = vmatpush1.bf16.xpose.msra.mxu0 0
        %1401 = vmatprep.subr.bf16.mxu0 0
        %1402 = vmatpush1.bf16.xpose.msra.mxu0 0
        %1403 = vmatprep.subr.bf16.mxu0 0
        %1404 = vmatpush1.bf16.xpose.msra.mxu0 0
        %1405 = vmatprep.subr.bf16.mxu0 0
        %1406 = vmatpush1.bf16.xpose.msra.mxu0 0
        %1407 = vmatprep.subr.bf16.mxu0 0
        %1408 = vmatpush1.bf16.xpose.msra.mxu0 0
        %1409 = vmatprep.subr.bf16.mxu0 0
        %1410 = vmatpush1.bf16.xpose.msra.mxu0 0
        %1411 = vmatprep.subr.bf16.mxu0 0
        %1412 = vmatpush1.bf16.xpose.msra.mxu0 0
        %1413 = vmatprep.subr.bf16.mxu0 0
        %1414 = vmatpush1.bf16.xpose.msra.mxu0 0
        %1415 = vmatprep.subr.bf16.mxu0 0
        %1416 = vmatpush1.bf16.xpose.msra.mxu0 0
        %1417 = vmatprep.subr.bf16.mxu0 0
        %1418 = vmatpush1.bf16.xpose.msra.mxu0 0
        %1419 = vmatprep.subr.bf16.mxu0 0
        %1420 = vmatpush1.bf16.xpose.msra.mxu0 0
        %1421 = vmatprep.subr.bf16.mxu0 0
        %1422 = vmatpush1.bf16.xpose.msra.mxu0 0
        %1423 = vmatprep.mubr.bf16.mxu0 0
        %1424 = vmatmul.mubr.bf16.gmra.mrb[0].mxu0 %v1386
        %v1425 = vpop.f32.mrb[0].mxu0
        %v1426 = vadd.f32 %v1279, %v1425
        %v1427 = vpop.f32.mrb[0].mxu0
        %v1428 = vpop.f32.mrb[0].mxu0
        %v1429 = vpop.f32.mrb[0].mxu0
        %1430 = vdwg.mxu0
        %v1432 = vsel %vm1292, %v1283, 0
        %v1435 = vsel %vm1292, %v1287, 0
        %1437 = vmatprep.subr.bf16.mxu0 0
        %1438 = vmatpush1.bf16.xpose.msra.mxu0 %v1435
        %1439 = vmatprep.subr.bf16.mxu0 0
        %1440 = vmatpush1.bf16.xpose.msra.mxu0 0
        %1441 = vmatprep.subr.bf16.mxu0 0
        %1442 = vmatpush1.bf16.xpose.msra.mxu0 0
        %1443 = vmatprep.subr.bf16.mxu0 0
        %1444 = vmatpush1.bf16.xpose.msra.mxu0 0
        %1445 = vmatprep.subr.bf16.mxu0 0
        %1446 = vmatpush1.bf16.xpose.msra.mxu0 0
        %1447 = vmatprep.subr.bf16.mxu0 0
        %1448 = vmatpush1.bf16.xpose.msra.mxu0 0
        %1449 = vmatprep.subr.bf16.mxu0 0
        %1450 = vmatpush1.bf16.xpose.msra.mxu0 0
        %1451 = vmatprep.subr.bf16.mxu0 0
        %1452 = vmatpush1.bf16.xpose.msra.mxu0 0
        %1453 = vmatprep.subr.bf16.mxu0 0
        %1454 = vmatpush1.bf16.xpose.msra.mxu0 0
        %1455 = vmatprep.subr.bf16.mxu0 0
        %1456 = vmatpush1.bf16.xpose.msra.mxu0 0
        %1457 = vmatprep.subr.bf16.mxu0 0
        %1458 = vmatpush1.bf16.xpose.msra.mxu0 0
        %1459 = vmatprep.subr.bf16.mxu0 0
        %1460 = vmatpush1.bf16.xpose.msra.mxu0 0
        %1461 = vmatprep.subr.bf16.mxu0 0
        %1462 = vmatpush1.bf16.xpose.msra.mxu0 0
        %1463 = vmatprep.subr.bf16.mxu0 0
        %1464 = vmatpush1.bf16.xpose.msra.mxu0 0
        %1465 = vmatprep.subr.bf16.mxu0 0
        %1466 = vmatpush1.bf16.xpose.msra.mxu0 0
        %1467 = vmatprep.subr.bf16.mxu0 0
        %1468 = vmatpush1.bf16.xpose.msra.mxu0 0
        %1469 = vmatprep.mubr.bf16.mxu0 0
        %1470 = vmatmul.mubr.bf16.gmra.mrb[0].mxu0 %v1432
        %v1471 = vpop.f32.mrb[0].mxu0
        %v1472 = vadd.f32 %v1279, %v1471
        %v1473 = vpop.f32.mrb[0].mxu0
        %v1474 = vpop.f32.mrb[0].mxu0
        %v1475 = vpop.f32.mrb[0].mxu0
        %1476 = vdwg.mxu0
        %v1477 = vsel %vm1292, %v1334, -inf
        %1478 = vmax.xlane.f32.xlu0 %v1477
        %v1479 = vpop.xlane.xlu0 %1478
        %v1480 = vsel %vm1292, %v1380, -inf
        %1481 = vmax.xlane.f32.xlu0 %v1480
        %v1482 = vpop.xlane.xlu0 %1481
        %v1483 = vsel %vm1292, %v1426, -inf
        %1484 = vmax.xlane.f32.xlu0 %v1483
        %v1485 = vpop.xlane.xlu0 %1484
        %v1486 = vsel %vm1292, %v1472, -inf
        %1487 = vmax.xlane.f32.xlu0 %v1486
        %v1488 = vpop.xlane.xlu0 %1487
        %v1489 = vmax.f32 %v1479, -1e+30
        %v1490 = vmax.f32 %v1482, -1e+30
        %v1491 = vmax.f32 %v1485, -1e+30
        %v1492 = vmax.f32 %v1488, -1e+30
        %v1493 = vsub.f32 -1e+30, %v1489
        %v1494 = vsub.f32 -1e+30, %v1490
        %v1495 = vsub.f32 -1e+30, %v1491
        %v1496 = vsub.f32 -1e+30, %v1492
        %v1497 = vmul.f32 %v1493, 1.442695
        %v1498 = vpow.pop %v1497
        %v1499 = vmul.f32 %v1494, 1.442695
        %v1500 = vpow.pop %v1499
        %v1501 = vmul.f32 %v1495, 1.442695
        %v1502 = vpow.pop %v1501
        %v1503 = vmul.f32 %v1496, 1.442695
        %v1504 = vpow.pop %v1503
        %v1505 = vsub.f32 %v1334, %v1489
        %v1506 = vsub.f32 %v1380, %v1490
        %v1507 = vsub.f32 %v1426, %v1491
        %v1508 = vsub.f32 %v1472, %v1492
        %v1509 = vmul.f32 %v1505, 1.442695
        %v1510 = vpow.pop %v1509
        %v1511 = vmul.f32 %v1506, 1.442695
        %v1512 = vpow.pop %v1511
        %v1513 = vmul.f32 %v1507, 1.442695
        %v1514 = vpow.pop %v1513
        %v1515 = vmul.f32 %v1508, 1.442695
        %v1516 = vpow.pop %v1515
        %v1517 = vmul.f32 %v1498, 0.0
        %v1518 = vmul.f32 %v1500, 0.0
        %v1519 = vmul.f32 %v1502, 0.0
        %v1520 = vmul.f32 %v1504, 0.0
        %v1521 = vsel %vm1292, %v1510, 0.0
        %1522 = vadd.xlane.f32.xlu0 %v1521
        %v1523 = vpop.xlane.xlu0 %1522
        %v1524 = vsel %vm1292, %v1512, 0.0
        %1525 = vadd.xlane.f32.xlu0 %v1524
        %v1526 = vpop.xlane.xlu0 %1525
        %v1527 = vsel %vm1292, %v1514, 0.0
        %1528 = vadd.xlane.f32.xlu0 %v1527
        %v1529 = vpop.xlane.xlu0 %1528
        %v1530 = vsel %vm1292, %v1516, 0.0
        %1531 = vadd.xlane.f32.xlu0 %v1530
        %v1532 = vpop.xlane.xlu0 %1531
        %v1533 = vadd.f32 %v1517, %v1523
        %v1534 = vadd.f32 %v1518, %v1526
        %v1535 = vadd.f32 %v1519, %v1529
        %v1536 = vadd.f32 %v1520, %v1532
        %v1537 = vpack.c.bf16 %v1510, %v1510
        %v1538 = vpack.c.bf16 %v1512, %v1512
        %v1539 = vpack.c.bf16 %v1514, %v1514
        %v1540 = vpack.c.bf16 %v1516, %v1516
        %v1542 = vsel %vm1292, %v1537, 0
        %vm1544 = vcmask 1043456
        %v1546 = vsel %vm1544, %v1288, 0
        %1548 = vmatprep.subr.bf16.mxu0 0
        %1549 = vmatpush1.bf16.msra.mxu0 %v1546
        %1550 = vmatprep.subr.bf16.mxu0 0
        %1551 = vmatpush1.bf16.msra.mxu0 0
        %1552 = vmatprep.subr.bf16.mxu0 0
        %1553 = vmatpush1.bf16.msra.mxu0 0
        %1554 = vmatprep.subr.bf16.mxu0 0
        %1555 = vmatpush1.bf16.msra.mxu0 0
        %1556 = vmatprep.subr.bf16.mxu0 0
        %1557 = vmatpush1.bf16.msra.mxu0 0
        %1558 = vmatprep.subr.bf16.mxu0 0
        %1559 = vmatpush1.bf16.msra.mxu0 0
        %1560 = vmatprep.subr.bf16.mxu0 0
        %1561 = vmatpush1.bf16.msra.mxu0 0
        %1562 = vmatprep.subr.bf16.mxu0 0
        %1563 = vmatpush1.bf16.msra.mxu0 0
        %1564 = vmatprep.subr.bf16.mxu0 0
        %1565 = vmatpush1.bf16.msra.mxu0 0
        %1566 = vmatprep.subr.bf16.mxu0 0
        %1567 = vmatpush1.bf16.msra.mxu0 0
        %1568 = vmatprep.subr.bf16.mxu0 0
        %1569 = vmatpush1.bf16.msra.mxu0 0
        %1570 = vmatprep.subr.bf16.mxu0 0
        %1571 = vmatpush1.bf16.msra.mxu0 0
        %1572 = vmatprep.subr.bf16.mxu0 0
        %1573 = vmatpush1.bf16.msra.mxu0 0
        %1574 = vmatprep.subr.bf16.mxu0 0
        %1575 = vmatpush1.bf16.msra.mxu0 0
        %1576 = vmatprep.subr.bf16.mxu0 0
        %1577 = vmatpush1.bf16.msra.mxu0 0
        %1578 = vmatprep.subr.bf16.mxu0 0
        %1579 = vmatpush1.bf16.msra.mxu0 0
        %1580 = vmatprep.mubr.bf16.mxu0 0
        %1581 = vmatmul.mubr.bf16.gmra.mrb[0].mxu0 %v1542
        %v1582 = vpop.f32.mrb[0].mxu0
        %v1583 = vadd.f32 0.0, %v1582
        %v1584 = vpop.f32.mrb[0].mxu0
        %v1585 = vpop.f32.mrb[0].mxu0
        %v1586 = vpop.f32.mrb[0].mxu0
        %1587 = vdwg.mxu0
        %v1589 = vsel %vm1292, %v1538, 0
        %v1592 = vsel %vm1544, %v1289, 0
        %1594 = vmatprep.subr.bf16.mxu0 0
        %1595 = vmatpush1.bf16.msra.mxu0 %v1592
        %1596 = vmatprep.subr.bf16.mxu0 0
        %1597 = vmatpush1.bf16.msra.mxu0 0
        %1598 = vmatprep.subr.bf16.mxu0 0
        %1599 = vmatpush1.bf16.msra.mxu0 0
        %1600 = vmatprep.subr.bf16.mxu0 0
        %1601 = vmatpush1.bf16.msra.mxu0 0
        %1602 = vmatprep.subr.bf16.mxu0 0
        %1603 = vmatpush1.bf16.msra.mxu0 0
        %1604 = vmatprep.subr.bf16.mxu0 0
        %1605 = vmatpush1.bf16.msra.mxu0 0
        %1606 = vmatprep.subr.bf16.mxu0 0
        %1607 = vmatpush1.bf16.msra.mxu0 0
        %1608 = vmatprep.subr.bf16.mxu0 0
        %1609 = vmatpush1.bf16.msra.mxu0 0
        %1610 = vmatprep.subr.bf16.mxu0 0
        %1611 = vmatpush1.bf16.msra.mxu0 0
        %1612 = vmatprep.subr.bf16.mxu0 0
        %1613 = vmatpush1.bf16.msra.mxu0 0
        %1614 = vmatprep.subr.bf16.mxu0 0
        %1615 = vmatpush1.bf16.msra.mxu0 0
        %1616 = vmatprep.subr.bf16.mxu0 0
        %1617 = vmatpush1.bf16.msra.mxu0 0
        %1618 = vmatprep.subr.bf16.mxu0 0
        %1619 = vmatpush1.bf16.msra.mxu0 0
        %1620 = vmatprep.subr.bf16.mxu0 0
        %1621 = vmatpush1.bf16.msra.mxu0 0
        %1622 = vmatprep.subr.bf16.mxu0 0
        %1623 = vmatpush1.bf16.msra.mxu0 0
        %1624 = vmatprep.subr.bf16.mxu0 0
        %1625 = vmatpush1.bf16.msra.mxu0 0
        %1626 = vmatprep.mubr.bf16.mxu0 0
        %1627 = vmatmul.mubr.bf16.gmra.mrb[0].mxu0 %v1589
        %v1628 = vpop.f32.mrb[0].mxu0
        %v1629 = vadd.f32 0.0, %v1628
        %v1630 = vpop.f32.mrb[0].mxu0
        %v1631 = vpop.f32.mrb[0].mxu0
        %v1632 = vpop.f32.mrb[0].mxu0
        %1633 = vdwg.mxu0
        %v1635 = vsel %vm1292, %v1539, 0
        %v1638 = vsel %vm1544, %v1290, 0
        %1640 = vmatprep.subr.bf16.mxu0 0
        %1641 = vmatpush1.bf16.msra.mxu0 %v1638
        %1642 = vmatprep.subr.bf16.mxu0 0
        %1643 = vmatpush1.bf16.msra.mxu0 0
        %1644 = vmatprep.subr.bf16.mxu0 0
        %1645 = vmatpush1.bf16.msra.mxu0 0
        %1646 = vmatprep.subr.bf16.mxu0 0
        %1647 = vmatpush1.bf16.msra.mxu0 0
        %1648 = vmatprep.subr.bf16.mxu0 0
        %1649 = vmatpush1.bf16.msra.mxu0 0
        %1650 = vmatprep.subr.bf16.mxu0 0
        %1651 = vmatpush1.bf16.msra.mxu0 0
        %1652 = vmatprep.subr.bf16.mxu0 0
        %1653 = vmatpush1.bf16.msra.mxu0 0
        %1654 = vmatprep.subr.bf16.mxu0 0
        %1655 = vmatpush1.bf16.msra.mxu0 0
        %1656 = vmatprep.subr.bf16.mxu0 0
        %1657 = vmatpush1.bf16.msra.mxu0 0
        %1658 = vmatprep.subr.bf16.mxu0 0
        %1659 = vmatpush1.bf16.msra.mxu0 0
        %1660 = vmatprep.subr.bf16.mxu0 0
        %1661 = vmatpush1.bf16.msra.mxu0 0
        %1662 = vmatprep.subr.bf16.mxu0 0
        %1663 = vmatpush1.bf16.msra.mxu0 0
        %1664 = vmatprep.subr.bf16.mxu0 0
        %1665 = vmatpush1.bf16.msra.mxu0 0
        %1666 = vmatprep.subr.bf16.mxu0 0
        %1667 = vmatpush1.bf16.msra.mxu0 0
        %1668 = vmatprep.subr.bf16.mxu0 0
        %1669 = vmatpush1.bf16.msra.mxu0 0
        %1670 = vmatprep.subr.bf16.mxu0 0
        %1671 = vmatpush1.bf16.msra.mxu0 0
        %1672 = vmatprep.mubr.bf16.mxu0 0
        %1673 = vmatmul.mubr.bf16.gmra.mrb[0].mxu0 %v1635
        %v1674 = vpop.f32.mrb[0].mxu0
        %v1675 = vadd.f32 0.0, %v1674
        %v1676 = vpop.f32.mrb[0].mxu0
        %v1677 = vpop.f32.mrb[0].mxu0
        %v1678 = vpop.f32.mrb[0].mxu0
        %1679 = vdwg.mxu0
        %v1681 = vsel %vm1292, %v1540, 0
        %v1684 = vsel %vm1544, %v1291, 0
        %1686 = vmatprep.subr.bf16.mxu0 0
        %1687 = vmatpush1.bf16.msra.mxu0 %v1684
        %1688 = vmatprep.subr.bf16.mxu0 0
        %1689 = vmatpush1.bf16.msra.mxu0 0
        %1690 = vmatprep.subr.bf16.mxu0 0
        %1691 = vmatpush1.bf16.msra.mxu0 0
        %1692 = vmatprep.subr.bf16.mxu0 0
        %1693 = vmatpush1.bf16.msra.mxu0 0
        %1694 = vmatprep.subr.bf16.mxu0 0
        %1695 = vmatpush1.bf16.msra.mxu0 0
        %1696 = vmatprep.subr.bf16.mxu0 0
        %1697 = vmatpush1.bf16.msra.mxu0 0
        %1698 = vmatprep.subr.bf16.mxu0 0
        %1699 = vmatpush1.bf16.msra.mxu0 0
        %1700 = vmatprep.subr.bf16.mxu0 0
        %1701 = vmatpush1.bf16.msra.mxu0 0
        %1702 = vmatprep.subr.bf16.mxu0 0
        %1703 = vmatpush1.bf16.msra.mxu0 0
        %1704 = vmatprep.subr.bf16.mxu0 0
        %1705 = vmatpush1.bf16.msra.mxu0 0
        %1706 = vmatprep.subr.bf16.mxu0 0
        %1707 = vmatpush1.bf16.msra.mxu0 0
        %1708 = vmatprep.subr.bf16.mxu0 0
        %1709 = vmatpush1.bf16.msra.mxu0 0
        %1710 = vmatprep.subr.bf16.mxu0 0
        %1711 = vmatpush1.bf16.msra.mxu0 0
        %1712 = vmatprep.subr.bf16.mxu0 0
        %1713 = vmatpush1.bf16.msra.mxu0 0
        %1714 = vmatprep.subr.bf16.mxu0 0
        %1715 = vmatpush1.bf16.msra.mxu0 0
        %1716 = vmatprep.subr.bf16.mxu0 0
        %1717 = vmatpush1.bf16.msra.mxu0 0
        %1718 = vmatprep.mubr.bf16.mxu0 0
        %1719 = vmatmul.mubr.bf16.gmra.mrb[0].mxu0 %v1681
        %v1720 = vpop.f32.mrb[0].mxu0
        %v1721 = vadd.f32 0.0, %v1720
        %v1722 = vpop.f32.mrb[0].mxu0
        %v1723 = vpop.f32.mrb[0].mxu0
        %v1724 = vpop.f32.mrb[0].mxu0
        %1725 = vdwg.mxu0
        %v1726 = vadd.f32 %v1517, %v1583
        %v1727 = vadd.f32 %v1518, %v1629
        %v1728 = vadd.f32 %v1519, %v1675
        %v1729 = vadd.f32 %v1520, %v1721
        %v1730 = vrcp.pop %v1533
        %v1731 = vrcp.pop %v1534
        %v1732 = vrcp.pop %v1535
        %v1733 = vrcp.pop %v1536
        %v1734 = vmul.f32 %v1726, %v1730
        %v1735 = vmul.f32 %v1727, %v1731
        %v1736 = vmul.f32 %v1728, %v1732
        %v1737 = vmul.f32 %v1729, %v1733
        %v1738 = vpack.c.bf16 %v1734, %v1734
        %v1739 = vld [vmem:[%s6] sm:$0xf]
        %v1740 = vpack.c.bf16 %v1735, %v1735
        %s1741 = scalar_lea.vmem %s6, 4
        %v1742 = vld [vmem:[%s1741] sm:$0xf]
        %v1744 = vsel %vm1292, %v1740, 0
        %v1747 = vsel %vm1544, %v1742, 0
        %1749 = vmatprep.subr.bf16.mxu0 0
        %1750 = vmatpush1.bf16.msra.mxu0 %v1747
        %1751 = vmatprep.subr.bf16.mxu0 0
        %1752 = vmatpush1.bf16.msra.mxu0 0
        %1753 = vmatprep.subr.bf16.mxu0 0
        %1754 = vmatpush1.bf16.msra.mxu0 0
        %1755 = vmatprep.subr.bf16.mxu0 0
        %1756 = vmatpush1.bf16.msra.mxu0 0
        %1757 = vmatprep.subr.bf16.mxu0 0
        %1758 = vmatpush1.bf16.msra.mxu0 0
        %1759 = vmatprep.subr.bf16.mxu0 0
        %1760 = vmatpush1.bf16.msra.mxu0 0
        %1761 = vmatprep.subr.bf16.mxu0 0
        %1762 = vmatpush1.bf16.msra.mxu0 0
        %1763 = vmatprep.subr.bf16.mxu0 0
        %1764 = vmatpush1.bf16.msra.mxu0 0
        %1765 = vmatprep.subr.bf16.mxu0 0
        %1766 = vmatpush1.bf16.msra.mxu0 0
        %1767 = vmatprep.subr.bf16.mxu0 0
        %1768 = vmatpush1.bf16.msra.mxu0 0
        %1769 = vmatprep.subr.bf16.mxu0 0
        %1770 = vmatpush1.bf16.msra.mxu0 0
        %1771 = vmatprep.subr.bf16.mxu0 0
        %1772 = vmatpush1.bf16.msra.mxu0 0
        %1773 = vmatprep.subr.bf16.mxu0 0
        %1774 = vmatpush1.bf16.msra.mxu0 0
        %1775 = vmatprep.subr.bf16.mxu0 0
        %1776 = vmatpush1.bf16.msra.mxu0 0
        %1777 = vmatprep.subr.bf16.mxu0 0
        %1778 = vmatpush1.bf16.msra.mxu0 0
        %1779 = vmatprep.subr.bf16.mxu0 0
        %1780 = vmatpush1.bf16.msra.mxu0 0
        %1781 = vmatprep.mubr.bf16.mxu0 0
        %1782 = vmatmul.mubr.bf16.gmra.mrb[0].mxu0 %v1744
        %v1783 = vpop.f32.mrb[0].mxu0
        %v1784 = vadd.f32 0.0, %v1783
        %v1785 = vpop.f32.mrb[0].mxu0
        %v1786 = vpop.f32.mrb[0].mxu0
        %v1787 = vpop.f32.mrb[0].mxu0
        %1788 = vdwg.mxu0
        %v1790 = vsel %vm1292, %v1738, 0
        %v1793 = vsel %vm1544, %v1739, 0
        %1795 = vmatprep.subr.bf16.mxu0 0
        %1796 = vmatpush1.bf16.msra.mxu0 %v1793
        %1797 = vmatprep.subr.bf16.mxu0 0
        %1798 = vmatpush1.bf16.msra.mxu0 0
        %1799 = vmatprep.subr.bf16.mxu0 0
        %1800 = vmatpush1.bf16.msra.mxu0 0
        %1801 = vmatprep.subr.bf16.mxu0 0
        %1802 = vmatpush1.bf16.msra.mxu0 0
        %1803 = vmatprep.subr.bf16.mxu0 0
        %1804 = vmatpush1.bf16.msra.mxu0 0
        %1805 = vmatprep.subr.bf16.mxu0 0
        %1806 = vmatpush1.bf16.msra.mxu0 0
        %1807 = vmatprep.subr.bf16.mxu0 0
        %1808 = vmatpush1.bf16.msra.mxu0 0
        %1809 = vmatprep.subr.bf16.mxu0 0
        %1810 = vmatpush1.bf16.msra.mxu0 0
        %1811 = vmatprep.subr.bf16.mxu0 0
        %1812 = vmatpush1.bf16.msra.mxu0 0
        %1813 = vmatprep.subr.bf16.mxu0 0
        %1814 = vmatpush1.bf16.msra.mxu0 0
        %1815 = vmatprep.subr.bf16.mxu0 0
        %1816 = vmatpush1.bf16.msra.mxu0 0
        %1817 = vmatprep.subr.bf16.mxu0 0
        %1818 = vmatpush1.bf16.msra.mxu0 0
        %1819 = vmatprep.subr.bf16.mxu0 0
        %1820 = vmatpush1.bf16.msra.mxu0 0
        %1821 = vmatprep.subr.bf16.mxu0 0
        %1822 = vmatpush1.bf16.msra.mxu0 0
        %1823 = vmatprep.subr.bf16.mxu0 0
        %1824 = vmatpush1.bf16.msra.mxu0 0
        %1825 = vmatprep.subr.bf16.mxu0 0
        %1826 = vmatpush1.bf16.msra.mxu0 0
        %1827 = vmatprep.mubr.bf16.mxu0 0
        %1828 = vmatmul.mubr.bf16.gmra.mrb[0].mxu0 %v1790
        %v1829 = vpop.f32.mrb[0].mxu0
        %v1830 = vadd.f32 %v1784, %v1829
        %v1831 = vpop.f32.mrb[0].mxu0
        %v1832 = vpop.f32.mrb[0].mxu0
        %v1833 = vpop.f32.mrb[0].mxu0
        %1834 = vdwg.mxu0
        %v1835 = vpack.c.bf16 %v1736, %v1736
        %s1836 = scalar_lea.vmem %s6, 8
        %v1837 = vld [vmem:[%s1836] sm:$0xf]
        %v1839 = vsel %vm1292, %v1835, 0
        %v1842 = vsel %vm1544, %v1837, 0
        %1844 = vmatprep.subr.bf16.mxu0 0
        %1845 = vmatpush1.bf16.msra.mxu0 %v1842
        %1846 = vmatprep.subr.bf16.mxu0 0
        %1847 = vmatpush1.bf16.msra.mxu0 0
        %1848 = vmatprep.subr.bf16.mxu0 0
        %1849 = vmatpush1.bf16.msra.mxu0 0
        %1850 = vmatprep.subr.bf16.mxu0 0
        %1851 = vmatpush1.bf16.msra.mxu0 0
        %1852 = vmatprep.subr.bf16.mxu0 0
        %1853 = vmatpush1.bf16.msra.mxu0 0
        %1854 = vmatprep.subr.bf16.mxu0 0
        %1855 = vmatpush1.bf16.msra.mxu0 0
        %1856 = vmatprep.subr.bf16.mxu0 0
        %1857 = vmatpush1.bf16.msra.mxu0 0
        %1858 = vmatprep.subr.bf16.mxu0 0
        %1859 = vmatpush1.bf16.msra.mxu0 0
        %1860 = vmatprep.subr.bf16.mxu0 0
        %1861 = vmatpush1.bf16.msra.mxu0 0
        %1862 = vmatprep.subr.bf16.mxu0 0
        %1863 = vmatpush1.bf16.msra.mxu0 0
        %1864 = vmatprep.subr.bf16.mxu0 0
        %1865 = vmatpush1.bf16.msra.mxu0 0
        %1866 = vmatprep.subr.bf16.mxu0 0
        %1867 = vmatpush1.bf16.msra.mxu0 0
        %1868 = vmatprep.subr.bf16.mxu0 0
        %1869 = vmatpush1.bf16.msra.mxu0 0
        %1870 = vmatprep.subr.bf16.mxu0 0
        %1871 = vmatpush1.bf16.msra.mxu0 0
        %1872 = vmatprep.subr.bf16.mxu0 0
        %1873 = vmatpush1.bf16.msra.mxu0 0
        %1874 = vmatprep.subr.bf16.mxu0 0
        %1875 = vmatpush1.bf16.msra.mxu0 0
        %1876 = vmatprep.mubr.bf16.mxu0 0
        %1877 = vmatmul.mubr.bf16.gmra.mrb[0].mxu0 %v1839
        %v1878 = vpop.f32.mrb[0].mxu0
        %v1879 = vadd.f32 0.0, %v1878
        %v1880 = vpop.f32.mrb[0].mxu0
        %v1881 = vpop.f32.mrb[0].mxu0
        %v1882 = vpop.f32.mrb[0].mxu0
        %1883 = vdwg.mxu0
        %v1884 = vadd.f32 %v1830, %v1879
        %v1885 = vpack.c.bf16 %v1737, %v1737
        %s1886 = scalar_lea.vmem %s6, 12
        %v1887 = vld [vmem:[%s1886] sm:$0xf]
        %v1889 = vsel %vm1292, %v1885, 0
        %v1892 = vsel %vm1544, %v1887, 0
        %1894 = vmatprep.subr.bf16.mxu0 0
        %1895 = vmatpush1.bf16.msra.mxu0 %v1892
        %1896 = vmatprep.subr.bf16.mxu0 0
        %1897 = vmatpush1.bf16.msra.mxu0 0
        %1898 = vmatprep.subr.bf16.mxu0 0
        %1899 = vmatpush1.bf16.msra.mxu0 0
        %1900 = vmatprep.subr.bf16.mxu0 0
        %1901 = vmatpush1.bf16.msra.mxu0 0
        %1902 = vmatprep.subr.bf16.mxu0 0
        %1903 = vmatpush1.bf16.msra.mxu0 0
        %1904 = vmatprep.subr.bf16.mxu0 0
        %1905 = vmatpush1.bf16.msra.mxu0 0
        %1906 = vmatprep.subr.bf16.mxu0 0
        %1907 = vmatpush1.bf16.msra.mxu0 0
        %1908 = vmatprep.subr.bf16.mxu0 0
        %1909 = vmatpush1.bf16.msra.mxu0 0
        %1910 = vmatprep.subr.bf16.mxu0 0
        %1911 = vmatpush1.bf16.msra.mxu0 0
        %1912 = vmatprep.subr.bf16.mxu0 0
        %1913 = vmatpush1.bf16.msra.mxu0 0
        %1914 = vmatprep.subr.bf16.mxu0 0
        %1915 = vmatpush1.bf16.msra.mxu0 0
        %1916 = vmatprep.subr.bf16.mxu0 0
        %1917 = vmatpush1.bf16.msra.mxu0 0
        %1918 = vmatprep.subr.bf16.mxu0 0
        %1919 = vmatpush1.bf16.msra.mxu0 0
        %1920 = vmatprep.subr.bf16.mxu0 0
        %1921 = vmatpush1.bf16.msra.mxu0 0
        %1922 = vmatprep.subr.bf16.mxu0 0
        %1923 = vmatpush1.bf16.msra.mxu0 0
        %1924 = vmatprep.subr.bf16.mxu0 0
        %1925 = vmatpush1.bf16.msra.mxu0 0
        %1926 = vmatprep.mubr.bf16.mxu0 0
        %1927 = vmatmul.mubr.bf16.gmra.mrb[0].mxu0 %v1889
        %v1928 = vpop.f32.mrb[0].mxu0
        %v1929 = vadd.f32 0.0, %v1928
        %v1930 = vpop.f32.mrb[0].mxu0
        %v1931 = vpop.f32.mrb[0].mxu0
        %v1932 = vpop.f32.mrb[0].mxu0
        %1933 = vdwg.mxu0
        %v1934 = vadd.f32 %v1884, %v1929
        %v1935 = vld [vmem:[%s7] sm:$0x1]
        %v1937 = vlaneseq
        %v1938 = vshrl.u32 %v1937, 7
        %v1939 = vsub.s32 0, %v1938
        %v1940 = vrot.slane %v1935, %v1939
        %v1942 = vadd.f32 %v1934, %v1940
        %v1943 = vadd.f32 %v464, %v1942
        %v1944 = vld [vmem:[%s8] sm:$0x1]
        %v1945 = vld [vmem:[%s9] sm:$0x1]
        %v1946 = vsel %vm467, %v1943, 0.0
        %1947 = vadd.xlane.f32.xlu0 %v1946
        %v1948 = vpop.xlane.xlu0 %1947
        %v1949 = vmul.f32 %v1948, %v471
        %v1950 = vsub.f32 %v1943, %v1949
        %v1951 = vmul.f32 %v1950, %v1950
        %v1952 = vsel %vm467, %v1951, 0.0
        %1953 = vadd.xlane.f32.xlu0 %v1952
        %v1954 = vpop.xlane.xlu0 %1953
        %v1955 = vmul.f32 %v1954, %v471
        %v1956 = vadd.f32 %v1955, 1e-05
        %v1957 = vrsqrt.pop %v1956
        %v1958 = vmul.f32 %v1950, %v1957
        %v1960 = vlaneseq
        %v1961 = vshrl.u32 %v1960, 7
        %v1962 = vsub.s32 0, %v1961
        %v1963 = vrot.slane %v1944, %v1962
        %v1965 = vmul.f32 %v1958, %v1963
        %v1967 = vlaneseq
        %v1968 = vshrl.u32 %v1967, 7
        %v1969 = vsub.s32 0, %v1968
        %v1970 = vrot.slane %v1945, %v1969
        %v1972 = vadd.f32 %v1965, %v1970
        %v1973 = vpack.c.bf16 %v1972, %v1972
        %v1974 = vld [vmem:[%s10] sm:$0xf]
        %v1975 = vld [vmem:[%s10 + $0x4] sm:$0xf]
        %v1976 = vld [vmem:[%s10 + $0x8] sm:$0xf]
        %v1977 = vld [vmem:[%s10 + $0xc] sm:$0xf]
        %v1978 = vld [vmem:[%s11] sm:$0x1]
        %v1980 = vlaneseq
        %v1981 = vshrl.u32 %v1980, 7
        %v1982 = vsub.s32 0, %v1981
        %v1983 = vrot.slane %v1978, %v1982
        %v1989 = vunpack.c.l.b16 %v1974
        %v1990 = vunpack.c.l.b16 %v1975
        %v1991 = vunpack.c.l.b16 %v1976
        %v1992 = vunpack.c.l.b16 %v1977
        %v1993 = vpack.c.b16 %v1990, %v1989
        %v1994 = vpack.c.b16 %v1992, %v1991
        %v1998 = vsel %vm467, %v1973, 0
        %2000 = vmatprep.subr.bf16.mxu0 0
        %2001 = vmatpush1.bf16.msra.mxu0 %v1993
        %2002 = vmatprep.subr.bf16.mxu0 0
        %2003 = vmatpush1.bf16.msra.mxu0 %v1994
        %2004 = vmatprep.subr.bf16.mxu0 0
        %2005 = vmatpush1.bf16.msra.mxu0 0
        %2006 = vmatprep.subr.bf16.mxu0 0
        %2007 = vmatpush1.bf16.msra.mxu0 0
        %2008 = vmatprep.subr.bf16.mxu0 0
        %2009 = vmatpush1.bf16.msra.mxu0 0
        %2010 = vmatprep.subr.bf16.mxu0 0
        %2011 = vmatpush1.bf16.msra.mxu0 0
        %2012 = vmatprep.subr.bf16.mxu0 0
        %2013 = vmatpush1.bf16.msra.mxu0 0
        %2014 = vmatprep.subr.bf16.mxu0 0
        %2015 = vmatpush1.bf16.msra.mxu0 0
        %2016 = vmatprep.subr.bf16.mxu0 0
        %2017 = vmatpush1.bf16.msra.mxu0 0
        %2018 = vmatprep.subr.bf16.mxu0 0
        %2019 = vmatpush1.bf16.msra.mxu0 0
        %2020 = vmatprep.subr.bf16.mxu0 0
        %2021 = vmatpush1.bf16.msra.mxu0 0
        %2022 = vmatprep.subr.bf16.mxu0 0
        %2023 = vmatpush1.bf16.msra.mxu0 0
        %2024 = vmatprep.subr.bf16.mxu0 0
        %2025 = vmatpush1.bf16.msra.mxu0 0
        %2026 = vmatprep.subr.bf16.mxu0 0
        %2027 = vmatpush1.bf16.msra.mxu0 0
        %2028 = vmatprep.subr.bf16.mxu0 0
        %2029 = vmatpush1.bf16.msra.mxu0 0
        %2030 = vmatprep.subr.bf16.mxu0 0
        %2031 = vmatpush1.bf16.msra.mxu0 0
        %2032 = vmatprep.mubr.bf16.mxu0 0
        %2033 = vmatmul.mubr.bf16.gmra.mrb[0].mxu0 %v1998
        %v2034 = vpop.f32.mrb[0].mxu0
        %v2035 = vadd.f32 %v1983, %v2034
        %v2036 = vpop.f32.mrb[0].mxu0
        %v2037 = vpop.f32.mrb[0].mxu0
        %v2038 = vpop.f32.mrb[0].mxu0
        %2039 = vdwg.mxu0
        %v2040 = vmul.f32 %v2035, 0.5
        %v2041 = vmul.f32 %v2035, 0.044715
        %v2042 = vmul.f32 %v2041, %v2035
        %v2043 = vmul.f32 %v2042, %v2035
        %v2044 = vadd.f32 %v2035, %v2043
        %v2045 = vmul.f32 %v2044, 0.7978845
        %v2046 = vtanh.pop %v2045
        %v2047 = vadd.f32 %v2046, 1.0
        %v2048 = vmul.f32 %v2040, %v2047
        %v2049 = vpack.c.bf16 %v2048, %v2048
        %v2050 = vld [vmem:[%s12] sm:$0xf]
        %v2051 = vld [vmem:[%s12 + $0x4] sm:$0xf]
        %v2052 = vld [vmem:[%s12 + $0x8] sm:$0xf]
        %v2053 = vld [vmem:[%s12 + $0xc] sm:$0xf]
        %v2054 = vld [vmem:[%s12 + $0x10] sm:$0xf]
        %v2055 = vld [vmem:[%s12 + $0x14] sm:$0xf]
        %v2056 = vld [vmem:[%s12 + $0x18] sm:$0xf]
        %v2057 = vld [vmem:[%s12 + $0x1c] sm:$0xf]
        %v2058 = vld [vmem:[%s12 + $0x20] sm:$0xf]
        %v2059 = vld [vmem:[%s12 + $0x24] sm:$0xf]
        %v2060 = vld [vmem:[%s12 + $0x28] sm:$0xf]
        %v2061 = vld [vmem:[%s12 + $0x2c] sm:$0xf]
        %v2062 = vld [vmem:[%s12 + $0x30] sm:$0xf]
        %v2063 = vld [vmem:[%s12 + $0x34] sm:$0xf]
        %v2064 = vld [vmem:[%s12 + $0x38] sm:$0xf]
        %v2065 = vld [vmem:[%s12 + $0x3c] sm:$0xf]
        %v2066 = vld [vmem:[%s13] sm:$0x1]
        %v2068 = vlaneseq
        %v2069 = vshrl.u32 %v2068, 7
        %v2070 = vsub.s32 0, %v2069
        %v2071 = vrot.slane %v2066, %v2070
        %v2089 = vunpack.c.l.b16 %v2050
        %v2090 = vunpack.c.l.b16 %v2051
        %v2091 = vunpack.c.l.b16 %v2052
        %v2092 = vunpack.c.l.b16 %v2053
        %v2093 = vunpack.c.l.b16 %v2054
        %v2094 = vunpack.c.l.b16 %v2055
        %v2095 = vunpack.c.l.b16 %v2056
        %v2096 = vunpack.c.l.b16 %v2057
        %v2097 = vunpack.c.l.b16 %v2058
        %v2098 = vunpack.c.l.b16 %v2059
        %v2099 = vunpack.c.l.b16 %v2060
        %v2100 = vunpack.c.l.b16 %v2061
        %v2101 = vunpack.c.l.b16 %v2062
        %v2102 = vunpack.c.l.b16 %v2063
        %v2103 = vunpack.c.l.b16 %v2064
        %v2104 = vunpack.c.l.b16 %v2065
        %v2105 = vpack.c.b16 %v2090, %v2089
        %v2106 = vpack.c.b16 %v2092, %v2091
        %v2107 = vpack.c.b16 %v2094, %v2093
        %v2108 = vpack.c.b16 %v2096, %v2095
        %v2109 = vpack.c.b16 %v2098, %v2097
        %v2110 = vpack.c.b16 %v2100, %v2099
        %v2111 = vpack.c.b16 %v2102, %v2101
        %v2112 = vpack.c.b16 %v2104, %v2103
        %2121 = vmatprep.subr.bf16.mxu0 0
        %2122 = vmatpush1.bf16.msra.mxu0 %v2105
        %2123 = vmatprep.subr.bf16.mxu0 0
        %2124 = vmatpush1.bf16.msra.mxu0 %v2106
        %2125 = vmatprep.subr.bf16.mxu0 0
        %2126 = vmatpush1.bf16.msra.mxu0 %v2107
        %2127 = vmatprep.subr.bf16.mxu0 0
        %2128 = vmatpush1.bf16.msra.mxu0 %v2108
        %2129 = vmatprep.subr.bf16.mxu0 0
        %2130 = vmatpush1.bf16.msra.mxu0 %v2109
        %2131 = vmatprep.subr.bf16.mxu0 0
        %2132 = vmatpush1.bf16.msra.mxu0 %v2110
        %2133 = vmatprep.subr.bf16.mxu0 0
        %2134 = vmatpush1.bf16.msra.mxu0 %v2111
        %2135 = vmatprep.subr.bf16.mxu0 0
        %2136 = vmatpush1.bf16.msra.mxu0 %v2112
        %2137 = vmatprep.subr.bf16.mxu0 0
        %2138 = vmatpush1.bf16.msra.mxu0 0
        %2139 = vmatprep.subr.bf16.mxu0 0
        %2140 = vmatpush1.bf16.msra.mxu0 0
        %2141 = vmatprep.subr.bf16.mxu0 0
        %2142 = vmatpush1.bf16.msra.mxu0 0
        %2143 = vmatprep.subr.bf16.mxu0 0
        %2144 = vmatpush1.bf16.msra.mxu0 0
        %2145 = vmatprep.subr.bf16.mxu0 0
        %2146 = vmatpush1.bf16.msra.mxu0 0
        %2147 = vmatprep.subr.bf16.mxu0 0
        %2148 = vmatpush1.bf16.msra.mxu0 0
        %2149 = vmatprep.subr.bf16.mxu0 0
        %2150 = vmatpush1.bf16.msra.mxu0 0
        %2151 = vmatprep.subr.bf16.mxu0 0
        %2152 = vmatpush1.bf16.msra.mxu0 0
        %2153 = vmatprep.mubr.bf16.mxu0 0
        %2154 = vmatmul.mubr.bf16.gmra.mrb[0].mxu0 %v2049
        %v2155 = vpop.f32.mrb[0].mxu0
        %v2156 = vadd.f32 %v2071, %v2155
        %v2157 = vpop.f32.mrb[0].mxu0
        %v2158 = vpop.f32.mrb[0].mxu0
        %v2159 = vpop.f32.mrb[0].mxu0
        %2160 = vdwg.mxu0
        %v2161 = vadd.f32 %v1943, %v2156
        %2162 = vst.msk [vmem:[%s458] sm:$0xff] %vm467, %v2161
        %s2163 = sand.u32 %s335, 1
        %s2164 = scalar_lea.sflag [#allocation3], %s2163
        %s2165 = sand.u32 %s335, 1
        %s2166 = smul.addr %s2165, 8
        %s2167 = scalar_lea.vmem [#allocation2], %s2166
        // Predicated region
        $region77: #{run.1} parent=75 // pred_check
          %p2168 = pneg %p345
        $region78: #{run.1} parent=75 // pred_check_branch
          %2170 = sbr.rel (%p2168) target = $region80
        $region79: #{run.1} parent=75 // pred_region
          %s2172 = ssub.s32 128, 128
          %2173 = vsyncadd %s2164, %s2172
          %s2174 = smul.addr %s28, 128
          %s2175 = scalar_lea.hbm %s14, %s2174
          %s2177 = sshll.u32 %s2167, 4
          %s2178 = int_to_ptr.vmem [resolvable:$true] %s2177
          %2180 = dma.vmem_to_hbm [thread:$0]  %s2178, 128, %s2175, %s2164
        $region80: #{run.1} parent=75 // pred_fallthru
          _
      $region76: #{run.1} parent=5 // pred_fallthru
        _
      %p2181 = scmp.le.s32.totalorder 2, %s23
      // Predicated region
      $region81: #{run.1} parent=5 // pred_check
        %p2182 = pneg %p2181
      $region82: #{run.1} parent=5 // pred_check_branch
        %2184 = sbr.rel (%p2182) target = $region84
      $region83: #{run.1} parent=5 // pred_region
        %s2185 = ssub.s32 %s23, 2
        // Predicated region
        $region85: #{run.1} parent=83 // pred_check
          %p2186 = pneg %p351
        $region86: #{run.1} parent=83 // pred_check_branch
          %2188 = sbr.rel (%p2186) target = $region88
        $region87: #{run.1} parent=83 // pred_region
          %s2189 = sand.u32 %s336, 1
          %s2190 = scalar_lea.sflag [#allocation3], %s2189
          %s2191 = sand.u32 %s336, 1
          %s2192 = smul.addr %s2191, 8
          %s2193 = scalar_lea.vmem [#allocation2], %s2192
          %2194 = dma.done %s2190, 128
        $region88: #{run.1} parent=83 // pred_fallthru
          _
      $region84: #{run.1} parent=5 // pred_fallthru
        _
    $region6: #{run.1} parent=1 // loop_footer
      %s27 = sadd.s32 1, %s23
    $region7: #{run.1} parent=1 // loop_footer_branch
      %22 = sbr.rel target = $region3
    $region8: #{run.1} parent=1 // loop_exit
      _
    %2195 = vsyncpa [#allocation3], 1
    %s2196 = scalar_lea.sflag [#allocation3], 1
    %2197 = vsyncpa %s2196, 1

</llo_original>
